<compile_context>
chip_gen: v7x
topology: tpu7x:2x2x1
jax: 0.10.0
libtpu: 0.0.40
codegen_flags: <defaults>
</compile_context>

<pallas_src>
import math

import jax
import jax.numpy as jnp
from jax import lax
from jax.experimental import pallas as pl
from jax.experimental.pallas import tpu as pltpu


def _make_kernel(B, T, d_model, nhead, num_layers):
    head_dim = d_model // nhead
    scale = 1.0 / math.sqrt(head_dim)
    sqrt_dm = math.sqrt(d_model)
    eps = 1e-5
    cdt = jnp.bfloat16  # MXU operand dtype (accumulation is always f32)

    def layer_norm(v, gamma, beta):
        mu = jnp.mean(v, axis=-1, keepdims=True)
        var = jnp.mean(jnp.square(v - mu), axis=-1, keepdims=True)
        return (v - mu) * lax.rsqrt(var + eps) * gamma + beta

    def mm(a, b):
        return jnp.dot(a.astype(cdt), b.astype(cdt),
                       preferred_element_type=jnp.float32)

    def kernel(x_ref,                      # (B*T, Din)
               ln_in_g_ref, ln_in_b_ref,   # (1, Din)
               w_in_ref,                   # (Din, d_model)  pre-transposed, f32
               b_in_ref,                   # (1, d_model)
               pe_ref,                     # (T, d_model)    positional encoding
               head_mask_ref,              # (H*T, d_model)  0/1 block-diagonal head mask
               seg_sum_ref,                # (H*T, H*T)      0/1 per-head segment-sum matrix
               wqkv_ref,                   # (L, d_model, 3*d_model)  bf16
               bqkv_ref,                   # (L, 1, 3*d_model)
               wo_ref,                     # (L, d_model, d_model)    bf16
               bo_ref,                     # (L, 1, d_model)
               g1_ref, be1_ref,            # (L, 1, d_model)
               w1_ref,                     # (L, d_model, dff)        bf16
               bf1_ref,                    # (L, 1, dff)
               w2_ref,                     # (L, dff, d_model)        bf16
               bf2_ref,                    # (L, 1, d_model)
               g2_ref, be2_ref,            # (L, 1, d_model)
               w_out_ref,                  # (1, d_model)
               b_out_ref,                  # (1, 1)
               out_ref):                   # (B, 1)
        head_mask = head_mask_ref[...]               # f32 {0,1}
        seg_sum = seg_sum_ref[...].astype(cdt)       # exact in bf16

        # ---- input LayerNorm + input Linear * sqrt(d_model) + positional encoding ----
        x = x_ref[...]
        xn = layer_norm(x, ln_in_g_ref[...], ln_in_b_ref[...])
        h = (jnp.dot(xn, w_in_ref[...], preferred_element_type=jnp.float32)
             + b_in_ref[...]) * sqrt_dm
        h = (h.reshape(B, T, d_model) + pe_ref[...][None]).reshape(B * T, d_model)

        # ---- transformer encoder layers (post-norm, ReLU FFN, eval mode) ----
        for l in range(num_layers):
            last = (l == num_layers - 1)

            # fused QKV projection (one MXU pass; biases pre-combined host-side)
            qkv = mm(h, wqkv_ref[l]) + bqkv_ref[l]            # (B*T, 3*d_model)
            q = qkv[:, 0:d_model] * scale
            k = qkv[:, d_model:2 * d_model]
            v = qkv[:, 2 * d_model:3 * d_model]

            a_rows = []
            for b in range(B):
                r0 = b * T
                kb = k[r0:r0 + T, :]
                vb = v[r0:r0 + T, :]
                # Last layer: only the final timestep's query feeds the head.
                qb = q[r0 + T - 1:r0 + T, :] if last else q[r0:r0 + T, :]

                # Replicate K/V head-major along sublanes and mask block-diagonally:
                # row h*T+t keeps only head h's lanes -> per-head scores come out of
                # ONE matmul with heads laid out along 64 lanes.
                k_rep = jnp.broadcast_to(kb[None], (nhead, T, d_model)
                                         ).reshape(nhead * T, d_model) * head_mask
                v_rep = jnp.broadcast_to(vb[None], (nhead, T, d_model)
                                         ).reshape(nhead * T, d_model) * head_mask

                s = jnp.einsum("td,jd->tj", qb.astype(cdt), k_rep.astype(cdt),
                               preferred_element_type=jnp.float32)  # (Tq, H*T)
                # Shared per-row max is a valid stabilizer for every head's softmax.
                s = s - jnp.max(s, axis=-1, keepdims=True)
                p = jnp.exp(s)
                # Per-head denominators via a segment-sum matmul (MXU has slack here).
                denom = jnp.dot(p.astype(cdt), seg_sum,
                                preferred_element_type=jnp.float32)
                denom = jnp.maximum(denom, 1e-20)
                p = p * pl.reciprocal(denom, approx=True)
                # PV matmul; masked V replication puts each head in its own lane block,
                # so the result is already the concatenated multi-head output.
                a_rows.append(mm(p, v_rep))                    # (Tq, d_model)

            attn = jnp.concatenate(a_rows, axis=0) if B > 1 else a_rows[0]
            # Residual rows matching the attention rows (last timesteps on final layer).
            h_res = h.reshape(B, T, d_model)[:, T - 1, :] if last else h

            # output projection + residual + LayerNorm1
            attn = mm(attn, wo_ref[l]) + bo_ref[l]
            h = layer_norm(h_res + attn, g1_ref[l], be1_ref[l])

            # feed-forward (ReLU) + residual + LayerNorm2
            ff = jnp.maximum(mm(h, w1_ref[l]) + bf1_ref[l], 0.0)
            ff = mm(ff, w2_ref[l]) + bf2_ref[l]
            h = layer_norm(h + ff, g2_ref[l], be2_ref[l])

        # ---- output head on the last timestep: VPU mul + lane reduce (no N=1 MXU) ----
        out_ref[...] = (jnp.sum(h * w_out_ref[...], axis=-1, keepdims=True)
                        + b_out_ref[...])

    return kernel


def rainfall_transformer_forward(x, params):
    """x: (B, T, input_dim) float32 (batch_first). Returns (B,) like .squeeze()."""
    B, T, Din = x.shape
    d_model = params["w_in"].shape[0]
    nhead = params["nhead"]
    head_dim = d_model // nhead
    L = len(params["layers"])
    dff = params["layers"][0]["w_ff1"].shape[0]

    # Positional encoding (T, d_model), identical construction to the PyTorch module;
    # broadcast per batch inside the kernel (no B-fold tiling).
    pos = jnp.arange(T, dtype=jnp.float32)[:, None]
    div = jnp.exp(jnp.arange(0, d_model, 2, dtype=jnp.float32)
                  * (-math.log(10000.0) / d_model))
    pe = jnp.zeros((T, d_model), jnp.float32)
    pe = pe.at[:, 0::2].set(jnp.sin(pos * div))
    pe = pe.at[:, 1::2].set(jnp.cos(pos * div))

    # Block-diagonal head mask: row h*T+t keeps lanes of head h only.
    row_head = jnp.repeat(jnp.arange(nhead), T)                 # (H*T,)
    col_head = jnp.arange(d_model) // head_dim                  # (d_model,)
    head_mask = (row_head[:, None] == col_head[None, :]).astype(jnp.float32)
    # Segment-sum matrix: column j's denominator sums its own head's T entries.
    seg = jnp.arange(nhead * T) // T
    seg_sum = (seg[:, None] == seg[None, :]).astype(jnp.float32)

    x_flat = x.reshape(B * T, Din).astype(jnp.float32)

    def stack_w(name):  # stacked, pre-transposed, bf16 MXU weights
        return jnp.stack([lyr[name].T for lyr in params["layers"]]).astype(jnp.bfloat16)

    def stack_v(name, n):  # stacked f32 biases / LayerNorm params
        return jnp.stack([lyr[name] for lyr in params["layers"]]).reshape(L, 1, n)

    wqkv = stack_w("w_qkv")                      # (L, d, 3d)
    bqkv = stack_v("b_qkv", 3 * d_model)
    wo = stack_w("w_o")                          # (L, d, d)
    bo = stack_v("b_o", d_model)
    g1 = stack_v("ln1_g", d_model)
    be1 = stack_v("ln1_b", d_model)
    w1 = stack_w("w_ff1")                        # (L, d, dff)
    bf1 = stack_v("b_ff1", dff)
    w2 = stack_w("w_ff2")                        # (L, dff, d)
    bf2 = stack_v("b_ff2", d_model)
    g2 = stack_v("ln2_g", d_model)
    be2 = stack_v("ln2_b", d_model)

    kernel = _make_kernel(B, T, d_model, nhead, L)
    vmem = pl.BlockSpec(memory_space=pltpu.MemorySpace.VMEM)
    out = pl.pallas_call(
        kernel,
        out_shape=jax.ShapeDtypeStruct((B, 1), jnp.float32),
        in_specs=[vmem] * 22,
        out_specs=vmem,
    )(x_flat,
      params["ln_in_g"].reshape(1, Din), params["ln_in_b"].reshape(1, Din),
      params["w_in"].T, params["b_in"].reshape(1, d_model),
      pe, head_mask, seg_sum,
      wqkv, bqkv, wo, bo, g1, be1, w1, bf1, w2, bf2, g2, be2,
      params["w_out"].reshape(1, d_model), params["b_out"].reshape(1, 1))

    # torch `.squeeze()` on (B, 1) -> (B,)
    return out[:, 0]


def _reference_forward(x, params):
    """Pure-JAX f32 reference matching the PyTorch RainfallTransformer (eval mode)."""
    B, T, Din = x.shape
    d_model = params["w_in"].shape[0]
    nhead = params["nhead"]
    head_dim = d_model // nhead
    eps = 1e-5

    def ln(v, g, b):
        mu = v.mean(-1, keepdims=True)
        var = ((v - mu) ** 2).mean(-1, keepdims=True)
        return (v - mu) / jnp.sqrt(var + eps) * g + b

    h = ln(x, params["ln_in_g"], params["ln_in_b"])
    h = (h @ params["w_in"].T + params["b_in"]) * math.sqrt(d_model)

    pos = jnp.arange(T, dtype=jnp.float32)[:, None]
    div = jnp.exp(jnp.arange(0, d_model, 2, dtype=jnp.float32)
                  * (-math.log(10000.0) / d_model))
    pe = jnp.zeros((T, d_model), jnp.float32)
    pe = pe.at[:, 0::2].set(jnp.sin(pos * div))
    pe = pe.at[:, 1::2].set(jnp.cos(pos * div))
    h = h + pe[None]

    for lyr in params["layers"]:
        qkv = h @ lyr["w_qkv"].T + lyr["b_qkv"]
        q, k, v = jnp.split(qkv, 3, axis=-1)

        def heads(a):
            return a.reshape(B, T, nhead, head_dim).transpose(0, 2, 1, 3)

        qh, kh, vh = heads(q), heads(k), heads(v)
        s = jnp.einsum("bhqd,bhkd->bhqk", qh, kh) / math.sqrt(head_dim)
        p = jax.nn.softmax(s, axis=-1)
        a = jnp.einsum("bhqk,bhkd->bhqd", p, vh)
        a = a.transpose(0, 2, 1, 3).reshape(B, T, d_model)
        a = a @ lyr["w_o"].T + lyr["b_o"]
        h = ln(h + a, lyr["ln1_g"], lyr["ln1_b"])

        f = jnp.maximum(h @ lyr["w_ff1"].T + lyr["b_ff1"], 0.0)
        f = f @ lyr["w_ff2"].T + lyr["b_ff2"]
        h = ln(h + f, lyr["ln2_g"], lyr["ln2_b"])

    out = h[:, -1, :] @ params["w_out"].T + params["b_out"]
    return out[:, 0]


def _init_params(key, input_dim, d_model=128, nhead=8, num_layers=2, dim_ff=128):
    """Deterministic small-uniform init (LayerNorm gammas near 1)."""
    ks = iter(jax.random.split(key, 40))

    def u(shape, bound):
        return jax.random.uniform(next(ks), shape, jnp.float32, -bound, bound)

    kd = 1.0 / math.sqrt(d_model)
    kf = 1.0 / math.sqrt(dim_ff)
    ki = 1.0 / math.sqrt(input_dim)

    layers = []
    for _ in range(num_layers):
        layers.append({
            "w_qkv": u((3 * d_model, d_model), kd), "b_qkv": u((3 * d_model,), kd),
            "w_o": u((d_model, d_model), kd), "b_o": u((d_model,), kd),
            "ln1_g": 1.0 + u((d_model,), 0.1), "ln1_b": u((d_model,), 0.1),
            "w_ff1": u((dim_ff, d_model), kd), "b_ff1": u((dim_ff,), kd),
            "w_ff2": u((d_model, dim_ff), kf), "b_ff2": u((d_model,), kf),
            "ln2_g": 1.0 + u((d_model,), 0.1), "ln2_b": u((d_model,), 0.1),
        })

    return {
        "nhead": nhead,
        "ln_in_g": 1.0 + u((input_dim,), 0.1), "ln_in_b": u((input_dim,), 0.1),
        "w_in": u((d_model, input_dim), ki), "b_in": u((d_model,), ki),
        "w_out": u((1, d_model), kd), "b_out": u((1,), kd),
        "layers": layers,
    }


if __name__ == "__main__":
    B, T, INPUT_DIM = 2, 8, 4
    D_MODEL, NHEAD, NUM_LAYERS, DIM_FF = 128, 8, 2, 128

    key = jax.random.PRNGKey(0)
    kx, kp = jax.random.split(key)
    x = jax.random.normal(kx, (B, T, INPUT_DIM), dtype=jnp.float32)
    params = _init_params(kp, INPUT_DIM, D_MODEL, NHEAD, NUM_LAYERS, DIM_FF)

    out = rainfall_transformer_forward(x, params)
    out = jax.block_until_ready(out)

    ref = _reference_forward(x, params)
    assert out.shape == (B,), out.shape
    # bf16 MXU operands + approx reciprocal => slightly looser tolerance than pure f32.
    assert jnp.allclose(out, ref, atol=5e-2, rtol=5e-2), (out, ref)

    print("KERNEL_OK")
</pallas_src>

<mosaic_0001>
module attributes {stable_mosaic.version = 11 : i64} {
  func.func @kernel(%arg0: memref<16x4xf32, #tpu.memory_space<vmem>>, %arg1: memref<1x4xf32, #tpu.memory_space<vmem>>, %arg2: memref<1x4xf32, #tpu.memory_space<vmem>>, %arg3: memref<4x128xf32, #tpu.memory_space<vmem>>, %arg4: memref<1x128xf32, #tpu.memory_space<vmem>>, %arg5: memref<8x128xf32, #tpu.memory_space<vmem>>, %arg6: memref<64x128xf32, #tpu.memory_space<vmem>>, %arg7: memref<64x64xf32, #tpu.memory_space<vmem>>, %arg8: memref<2x128x384xbf16, #tpu.memory_space<vmem>>, %arg9: memref<2x1x384xf32, #tpu.memory_space<vmem>>, %arg10: memref<2x128x128xbf16, #tpu.memory_space<vmem>>, %arg11: memref<2x1x128xf32, #tpu.memory_space<vmem>>, %arg12: memref<2x1x128xf32, #tpu.memory_space<vmem>>, %arg13: memref<2x1x128xf32, #tpu.memory_space<vmem>>, %arg14: memref<2x128x128xbf16, #tpu.memory_space<vmem>>, %arg15: memref<2x1x128xf32, #tpu.memory_space<vmem>>, %arg16: memref<2x128x128xbf16, #tpu.memory_space<vmem>>, %arg17: memref<2x1x128xf32, #tpu.memory_space<vmem>>, %arg18: memref<2x1x128xf32, #tpu.memory_space<vmem>>, %arg19: memref<2x1x128xf32, #tpu.memory_space<vmem>>, %arg20: memref<1x128xf32, #tpu.memory_space<vmem>>, %arg21: memref<1x1xf32, #tpu.memory_space<vmem>>, %arg22: memref<2x1xf32, #tpu.memory_space<vmem>>) attributes {dimension_semantics = [], scalar_prefetch = 0 : i64, scratch_operands = 0 : i64, tpu.core_type = #tpu.core_type<tc>} {
    %c0 = arith.constant 0 : index
    %c0_0 = arith.constant 0 : index
    %0 = vector.load %arg6[%c0, %c0_0] : memref<64x128xf32, #tpu.memory_space<vmem>>, vector<64x128xf32>
    %c0_1 = arith.constant 0 : index
    %c0_2 = arith.constant 0 : index
    %1 = vector.load %arg7[%c0_1, %c0_2] : memref<64x64xf32, #tpu.memory_space<vmem>>, vector<64x64xf32>
    %2 = arith.truncf %1 : vector<64x64xf32> to vector<64x64xbf16>
    %c0_3 = arith.constant 0 : index
    %c0_4 = arith.constant 0 : index
    %3 = vector.load %arg0[%c0_3, %c0_4] : memref<16x4xf32, #tpu.memory_space<vmem>>, vector<16x4xf32>
    %c0_5 = arith.constant 0 : index
    %c0_6 = arith.constant 0 : index
    %4 = vector.load %arg1[%c0_5, %c0_6] : memref<1x4xf32, #tpu.memory_space<vmem>>, vector<1x4xf32>
    %c0_7 = arith.constant 0 : index
    %c0_8 = arith.constant 0 : index
    %5 = vector.load %arg2[%c0_7, %c0_8] : memref<1x4xf32, #tpu.memory_space<vmem>>, vector<1x4xf32>
    %cst = arith.constant dense<0.000000e+00> : vector<16xf32>
    %6 = vector.multi_reduction <add>, %3, %cst [1] : vector<16x4xf32> to vector<16xf32>
    %7 = vector.shape_cast %6 : vector<16xf32> to vector<16x1xf32>
    %cst_9 = arith.constant 4.000000e+00 : f32
    %8 = vector.broadcast %cst_9 : f32 to vector<16x1xf32>
    %9 = arith.divf %7, %8 : vector<16x1xf32>
    %10 = vector.broadcast %9 : vector<16x1xf32> to vector<16x4xf32>
    %11 = arith.subf %3, %10 : vector<16x4xf32>
    %12 = arith.mulf %11, %11 : vector<16x4xf32>
    %cst_10 = arith.constant dense<0.000000e+00> : vector<16xf32>
    %13 = vector.multi_reduction <add>, %12, %cst_10 [1] : vector<16x4xf32> to vector<16xf32>
    %14 = vector.shape_cast %13 : vector<16xf32> to vector<16x1xf32>
    %cst_11 = arith.constant 4.000000e+00 : f32
    %15 = vector.broadcast %cst_11 : f32 to vector<16x1xf32>
    %16 = arith.divf %14, %15 : vector<16x1xf32>
    %17 = vector.broadcast %9 : vector<16x1xf32> to vector<16x4xf32>
    %18 = arith.subf %3, %17 : vector<16x4xf32>
    %cst_12 = arith.constant 9.99999974E-6 : f32
    %19 = vector.broadcast %cst_12 : f32 to vector<16x1xf32>
    %20 = arith.addf %16, %19 : vector<16x1xf32>
    %21 = math.rsqrt %20 : vector<16x1xf32>
    %22 = vector.broadcast %21 : vector<16x1xf32> to vector<16x4xf32>
    %23 = arith.mulf %18, %22 : vector<16x4xf32>
    %24 = vector.broadcast %4 : vector<1x4xf32> to vector<16x4xf32>
    %25 = arith.mulf %23, %24 : vector<16x4xf32>
    %26 = vector.broadcast %5 : vector<1x4xf32> to vector<16x4xf32>
    %27 = arith.addf %25, %26 : vector<16x4xf32>
    %c0_13 = arith.constant 0 : index
    %c0_14 = arith.constant 0 : index
    %28 = vector.load %arg3[%c0_13, %c0_14] : memref<4x128xf32, #tpu.memory_space<vmem>>, vector<4x128xf32>
    %cst_15 = arith.constant dense<0.000000e+00> : vector<16x128xf32>
    %29 = tpu.matmul %27, %28, %cst_15 {dimension_numbers = #tpu.dot_dimension_numbers<[1], [0], [0], [1], [0, 0, 1, 1], [], []>} : vector<16x4xf32>, vector<4x128xf32>, vector<16x128xf32> -> vector<16x128xf32>
    %c0_16 = arith.constant 0 : index
    %c0_17 = arith.constant 0 : index
    %30 = vector.load %arg4[%c0_16, %c0_17] : memref<1x128xf32, #tpu.memory_space<vmem>>, vector<1x128xf32>
    %31 = vector.broadcast %30 : vector<1x128xf32> to vector<16x128xf32>
    %32 = arith.addf %29, %31 : vector<16x128xf32>
    %cst_18 = arith.constant 11.3137083 : f32
    %33 = vector.broadcast %cst_18 : f32 to vector<16x128xf32>
    %34 = arith.mulf %32, %33 : vector<16x128xf32>
    %35 = vector.shape_cast %34 : vector<16x128xf32> to vector<2x8x128xf32>
    %c0_19 = arith.constant 0 : index
    %c0_20 = arith.constant 0 : index
    %36 = vector.load %arg5[%c0_19, %c0_20] : memref<8x128xf32, #tpu.memory_space<vmem>>, vector<8x128xf32>
    %37 = vector.shape_cast %36 : vector<8x128xf32> to vector<1x8x128xf32>
    %38 = vector.broadcast %37 : vector<1x8x128xf32> to vector<2x8x128xf32>
    %39 = arith.addf %35, %38 : vector<2x8x128xf32>
    %40 = vector.shape_cast %39 : vector<2x8x128xf32> to vector<16x128xf32>
    %c0_21 = arith.constant 0 : index
    %c0_22 = arith.constant 0 : index
    %c0_23 = arith.constant 0 : index
    %41 = vector.load %arg8[%c0_21, %c0_22, %c0_23] : memref<2x128x384xbf16, #tpu.memory_space<vmem>>, vector<1x128x384xbf16>
    %42 = vector.shape_cast %41 : vector<1x128x384xbf16> to vector<128x384xbf16>
    %43 = arith.truncf %40 : vector<16x128xf32> to vector<16x128xbf16>
    %cst_24 = arith.constant dense<0.000000e+00> : vector<16x384xf32>
    %44 = tpu.matmul %43, %42, %cst_24 {dimension_numbers = #tpu.dot_dimension_numbers<[1], [0], [0], [1], [0, 0, 1, 1], [], []>} : vector<16x128xbf16>, vector<128x384xbf16>, vector<16x384xf32> -> vector<16x384xf32>
    %c0_25 = arith.constant 0 : index
    %c0_26 = arith.constant 0 : index
    %c0_27 = arith.constant 0 : index
    %45 = vector.load %arg9[%c0_25, %c0_26, %c0_27] : memref<2x1x384xf32, #tpu.memory_space<vmem>>, vector<1x1x384xf32>
    %46 = vector.shape_cast %45 : vector<1x1x384xf32> to vector<1x384xf32>
    %47 = vector.broadcast %46 : vector<1x384xf32> to vector<16x384xf32>
    %48 = arith.addf %44, %47 : vector<16x384xf32>
    %49 = vector.extract_strided_slice %48 {offsets = [0, 0], sizes = [16, 128], strides = [1, 1]} : vector<16x384xf32> to vector<16x128xf32>
    %cst_28 = arith.constant 2.500000e-01 : f32
    %50 = vector.broadcast %cst_28 : f32 to vector<16x128xf32>
    %51 = arith.mulf %49, %50 : vector<16x128xf32>
    %52 = vector.extract_strided_slice %48 {offsets = [0, 128], sizes = [16, 128], strides = [1, 1]} : vector<16x384xf32> to vector<16x128xf32>
    %53 = vector.extract_strided_slice %48 {offsets = [0, 256], sizes = [16, 128], strides = [1, 1]} : vector<16x384xf32> to vector<16x128xf32>
    %54 = vector.extract_strided_slice %52 {offsets = [0, 0], sizes = [8, 128], strides = [1, 1]} : vector<16x128xf32> to vector<8x128xf32>
    %55 = vector.extract_strided_slice %53 {offsets = [0, 0], sizes = [8, 128], strides = [1, 1]} : vector<16x128xf32> to vector<8x128xf32>
    %56 = vector.extract_strided_slice %51 {offsets = [0, 0], sizes = [8, 128], strides = [1, 1]} : vector<16x128xf32> to vector<8x128xf32>
    %57 = vector.shape_cast %54 : vector<8x128xf32> to vector<1x8x128xf32>
    %58 = vector.shape_cast %57 : vector<1x8x128xf32> to vector<1x8x128xf32>
    %59 = vector.broadcast %58 : vector<1x8x128xf32> to vector<8x8x128xf32>
    %60 = vector.shape_cast %59 : vector<8x8x128xf32> to vector<64x128xf32>
    %61 = arith.mulf %60, %0 : vector<64x128xf32>
    %62 = vector.shape_cast %55 : vector<8x128xf32> to vector<1x8x128xf32>
    %63 = vector.shape_cast %62 : vector<1x8x128xf32> to vector<1x8x128xf32>
    %64 = vector.broadcast %63 : vector<1x8x128xf32> to vector<8x8x128xf32>
    %65 = vector.shape_cast %64 : vector<8x8x128xf32> to vector<64x128xf32>
    %66 = arith.mulf %65, %0 : vector<64x128xf32>
    %67 = arith.truncf %56 : vector<8x128xf32> to vector<8x128xbf16>
    %68 = arith.truncf %61 : vector<64x128xf32> to vector<64x128xbf16>
    "tpu.trace_start"() <{level = 10 : i32, message = "td,jd->tj"}> : () -> ()
    %cst_29 = arith.constant dense<0.000000e+00> : vector<8x64xf32>
    %69 = tpu.matmul %67, %68, %cst_29 {dimension_numbers = #tpu.dot_dimension_numbers<[1], [1], [0], [0], [0, 0, 1, 0], [], []>} : vector<8x128xbf16>, vector<64x128xbf16>, vector<8x64xf32> -> vector<8x64xf32>
    "tpu.trace_stop"() : () -> ()
    %cst_30 = arith.constant dense<0xFF800000> : vector<8xf32>
    %70 = vector.multi_reduction <maximumf>, %69, %cst_30 [1] : vector<8x64xf32> to vector<8xf32>
    %71 = vector.shape_cast %70 : vector<8xf32> to vector<8x1xf32>
    %72 = vector.broadcast %71 : vector<8x1xf32> to vector<8x64xf32>
    %73 = arith.subf %69, %72 : vector<8x64xf32>
    %74 = math.exp %73 : vector<8x64xf32>
    %75 = arith.truncf %74 : vector<8x64xf32> to vector<8x64xbf16>
    %cst_31 = arith.constant dense<0.000000e+00> : vector<8x64xf32>
    %76 = tpu.matmul %75, %2, %cst_31 {dimension_numbers = #tpu.dot_dimension_numbers<[1], [0], [0], [1], [0, 0, 1, 1], [], []>} : vector<8x64xbf16>, vector<64x64xbf16>, vector<8x64xf32> -> vector<8x64xf32>
    %cst_32 = arith.constant 9.99999968E-21 : f32
    %77 = vector.broadcast %cst_32 : f32 to vector<8x64xf32>
    %78 = arith.maximumf %76, %77 : vector<8x64xf32>
    %79 = tpu.reciprocal %78 {approx = true} : vector<8x64xf32> -> vector<8x64xf32>
    %80 = arith.mulf %74, %79 : vector<8x64xf32>
    %81 = arith.truncf %80 : vector<8x64xf32> to vector<8x64xbf16>
    %82 = arith.truncf %66 : vector<64x128xf32> to vector<64x128xbf16>
    %cst_33 = arith.constant dense<0.000000e+00> : vector<8x128xf32>
    %83 = tpu.matmul %81, %82, %cst_33 {dimension_numbers = #tpu.dot_dimension_numbers<[1], [0], [0], [1], [0, 0, 1, 1], [], []>} : vector<8x64xbf16>, vector<64x128xbf16>, vector<8x128xf32> -> vector<8x128xf32>
    %84 = vector.extract_strided_slice %52 {offsets = [8, 0], sizes = [8, 128], strides = [1, 1]} : vector<16x128xf32> to vector<8x128xf32>
    %85 = vector.extract_strided_slice %53 {offsets = [8, 0], sizes = [8, 128], strides = [1, 1]} : vector<16x128xf32> to vector<8x128xf32>
    %86 = vector.extract_strided_slice %51 {offsets = [8, 0], sizes = [8, 128], strides = [1, 1]} : vector<16x128xf32> to vector<8x128xf32>
    %87 = vector.shape_cast %84 : vector<8x128xf32> to vector<1x8x128xf32>
    %88 = vector.shape_cast %87 : vector<1x8x128xf32> to vector<1x8x128xf32>
    %89 = vector.broadcast %88 : vector<1x8x128xf32> to vector<8x8x128xf32>
    %90 = vector.shape_cast %89 : vector<8x8x128xf32> to vector<64x128xf32>
    %91 = arith.mulf %90, %0 : vector<64x128xf32>
    %92 = vector.shape_cast %85 : vector<8x128xf32> to vector<1x8x128xf32>
    %93 = vector.shape_cast %92 : vector<1x8x128xf32> to vector<1x8x128xf32>
    %94 = vector.broadcast %93 : vector<1x8x128xf32> to vector<8x8x128xf32>
    %95 = vector.shape_cast %94 : vector<8x8x128xf32> to vector<64x128xf32>
    %96 = arith.mulf %95, %0 : vector<64x128xf32>
    %97 = arith.truncf %86 : vector<8x128xf32> to vector<8x128xbf16>
    %98 = arith.truncf %91 : vector<64x128xf32> to vector<64x128xbf16>
    "tpu.trace_start"() <{level = 10 : i32, message = "td,jd->tj"}> : () -> ()
    %cst_34 = arith.constant dense<0.000000e+00> : vector<8x64xf32>
    %99 = tpu.matmul %97, %98, %cst_34 {dimension_numbers = #tpu.dot_dimension_numbers<[1], [1], [0], [0], [0, 0, 1, 0], [], []>} : vector<8x128xbf16>, vector<64x128xbf16>, vector<8x64xf32> -> vector<8x64xf32>
    "tpu.trace_stop"() : () -> ()
    %cst_35 = arith.constant dense<0xFF800000> : vector<8xf32>
    %100 = vector.multi_reduction <maximumf>, %99, %cst_35 [1] : vector<8x64xf32> to vector<8xf32>
    %101 = vector.shape_cast %100 : vector<8xf32> to vector<8x1xf32>
    %102 = vector.broadcast %101 : vector<8x1xf32> to vector<8x64xf32>
    %103 = arith.subf %99, %102 : vector<8x64xf32>
    %104 = math.exp %103 : vector<8x64xf32>
    %105 = arith.truncf %104 : vector<8x64xf32> to vector<8x64xbf16>
    %cst_36 = arith.constant dense<0.000000e+00> : vector<8x64xf32>
    %106 = tpu.matmul %105, %2, %cst_36 {dimension_numbers = #tpu.dot_dimension_numbers<[1], [0], [0], [1], [0, 0, 1, 1], [], []>} : vector<8x64xbf16>, vector<64x64xbf16>, vector<8x64xf32> -> vector<8x64xf32>
    %cst_37 = arith.constant 9.99999968E-21 : f32
    %107 = vector.broadcast %cst_37 : f32 to vector<8x64xf32>
    %108 = arith.maximumf %106, %107 : vector<8x64xf32>
    %109 = tpu.reciprocal %108 {approx = true} : vector<8x64xf32> -> vector<8x64xf32>
    %110 = arith.mulf %104, %109 : vector<8x64xf32>
    %111 = arith.truncf %110 : vector<8x64xf32> to vector<8x64xbf16>
    %112 = arith.truncf %96 : vector<64x128xf32> to vector<64x128xbf16>
    %cst_38 = arith.constant dense<0.000000e+00> : vector<8x128xf32>
    %113 = tpu.matmul %111, %112, %cst_38 {dimension_numbers = #tpu.dot_dimension_numbers<[1], [0], [0], [1], [0, 0, 1, 1], [], []>} : vector<8x64xbf16>, vector<64x128xbf16>, vector<8x128xf32> -> vector<8x128xf32>
    %114 = tpu.concatenate %83, %113 in 0 : vector<8x128xf32>, vector<8x128xf32> -> vector<16x128xf32>
    %c0_39 = arith.constant 0 : index
    %c0_40 = arith.constant 0 : index
    %c0_41 = arith.constant 0 : index
    %115 = vector.load %arg10[%c0_39, %c0_40, %c0_41] : memref<2x128x128xbf16, #tpu.memory_space<vmem>>, vector<1x128x128xbf16>
    %116 = vector.shape_cast %115 : vector<1x128x128xbf16> to vector<128x128xbf16>
    %117 = arith.truncf %114 : vector<16x128xf32> to vector<16x128xbf16>
    %cst_42 = arith.constant dense<0.000000e+00> : vector<16x128xf32>
    %118 = tpu.matmul %117, %116, %cst_42 {dimension_numbers = #tpu.dot_dimension_numbers<[1], [0], [0], [1], [0, 0, 1, 1], [], []>} : vector<16x128xbf16>, vector<128x128xbf16>, vector<16x128xf32> -> vector<16x128xf32>
    %c0_43 = arith.constant 0 : index
    %c0_44 = arith.constant 0 : index
    %c0_45 = arith.constant 0 : index
    %119 = vector.load %arg11[%c0_43, %c0_44, %c0_45] : memref<2x1x128xf32, #tpu.memory_space<vmem>>, vector<1x1x128xf32>
    %120 = vector.shape_cast %119 : vector<1x1x128xf32> to vector<1x128xf32>
    %121 = vector.broadcast %120 : vector<1x128xf32> to vector<16x128xf32>
    %122 = arith.addf %118, %121 : vector<16x128xf32>
    %123 = arith.addf %40, %122 : vector<16x128xf32>
    %c0_46 = arith.constant 0 : index
    %c0_47 = arith.constant 0 : index
    %c0_48 = arith.constant 0 : index
    %124 = vector.load %arg12[%c0_46, %c0_47, %c0_48] : memref<2x1x128xf32, #tpu.memory_space<vmem>>, vector<1x1x128xf32>
    %125 = vector.shape_cast %124 : vector<1x1x128xf32> to vector<1x128xf32>
    %c0_49 = arith.constant 0 : index
    %c0_50 = arith.constant 0 : index
    %c0_51 = arith.constant 0 : index
    %126 = vector.load %arg13[%c0_49, %c0_50, %c0_51] : memref<2x1x128xf32, #tpu.memory_space<vmem>>, vector<1x1x128xf32>
    %127 = vector.shape_cast %126 : vector<1x1x128xf32> to vector<1x128xf32>
    %cst_52 = arith.constant dense<0.000000e+00> : vector<16xf32>
    %128 = vector.multi_reduction <add>, %123, %cst_52 [1] : vector<16x128xf32> to vector<16xf32>
    %129 = vector.shape_cast %128 : vector<16xf32> to vector<16x1xf32>
    %cst_53 = arith.constant 1.280000e+02 : f32
    %130 = vector.broadcast %cst_53 : f32 to vector<16x1xf32>
    %131 = arith.divf %129, %130 : vector<16x1xf32>
    %132 = vector.broadcast %131 : vector<16x1xf32> to vector<16x128xf32>
    %133 = arith.subf %123, %132 : vector<16x128xf32>
    %134 = arith.mulf %133, %133 : vector<16x128xf32>
    %cst_54 = arith.constant dense<0.000000e+00> : vector<16xf32>
    %135 = vector.multi_reduction <add>, %134, %cst_54 [1] : vector<16x128xf32> to vector<16xf32>
    %136 = vector.shape_cast %135 : vector<16xf32> to vector<16x1xf32>
    %cst_55 = arith.constant 1.280000e+02 : f32
    %137 = vector.broadcast %cst_55 : f32 to vector<16x1xf32>
    %138 = arith.divf %136, %137 : vector<16x1xf32>
    %139 = vector.broadcast %131 : vector<16x1xf32> to vector<16x128xf32>
    %140 = arith.subf %123, %139 : vector<16x128xf32>
    %cst_56 = arith.constant 9.99999974E-6 : f32
    %141 = vector.broadcast %cst_56 : f32 to vector<16x1xf32>
    %142 = arith.addf %138, %141 : vector<16x1xf32>
    %143 = math.rsqrt %142 : vector<16x1xf32>
    %144 = vector.broadcast %143 : vector<16x1xf32> to vector<16x128xf32>
    %145 = arith.mulf %140, %144 : vector<16x128xf32>
    %146 = vector.broadcast %125 : vector<1x128xf32> to vector<16x128xf32>
    %147 = arith.mulf %145, %146 : vector<16x128xf32>
    %148 = vector.broadcast %127 : vector<1x128xf32> to vector<16x128xf32>
    %149 = arith.addf %147, %148 : vector<16x128xf32>
    %c0_57 = arith.constant 0 : index
    %c0_58 = arith.constant 0 : index
    %c0_59 = arith.constant 0 : index
    %150 = vector.load %arg14[%c0_57, %c0_58, %c0_59] : memref<2x128x128xbf16, #tpu.memory_space<vmem>>, vector<1x128x128xbf16>
    %151 = vector.shape_cast %150 : vector<1x128x128xbf16> to vector<128x128xbf16>
    %152 = arith.truncf %149 : vector<16x128xf32> to vector<16x128xbf16>
    %cst_60 = arith.constant dense<0.000000e+00> : vector<16x128xf32>
    %153 = tpu.matmul %152, %151, %cst_60 {dimension_numbers = #tpu.dot_dimension_numbers<[1], [0], [0], [1], [0, 0, 1, 1], [], []>} : vector<16x128xbf16>, vector<128x128xbf16>, vector<16x128xf32> -> vector<16x128xf32>
    %c0_61 = arith.constant 0 : index
    %c0_62 = arith.constant 0 : index
    %c0_63 = arith.constant 0 : index
    %154 = vector.load %arg15[%c0_61, %c0_62, %c0_63] : memref<2x1x128xf32, #tpu.memory_space<vmem>>, vector<1x1x128xf32>
    %155 = vector.shape_cast %154 : vector<1x1x128xf32> to vector<1x128xf32>
    %156 = vector.broadcast %155 : vector<1x128xf32> to vector<16x128xf32>
    %157 = arith.addf %153, %156 : vector<16x128xf32>
    %cst_64 = arith.constant 0.000000e+00 : f32
    %158 = vector.broadcast %cst_64 : f32 to vector<16x128xf32>
    %159 = arith.maximumf %157, %158 : vector<16x128xf32>
    %c0_65 = arith.constant 0 : index
    %c0_66 = arith.constant 0 : index
    %c0_67 = arith.constant 0 : index
    %160 = vector.load %arg16[%c0_65, %c0_66, %c0_67] : memref<2x128x128xbf16, #tpu.memory_space<vmem>>, vector<1x128x128xbf16>
    %161 = vector.shape_cast %160 : vector<1x128x128xbf16> to vector<128x128xbf16>
    %162 = arith.truncf %159 : vector<16x128xf32> to vector<16x128xbf16>
    %cst_68 = arith.constant dense<0.000000e+00> : vector<16x128xf32>
    %163 = tpu.matmul %162, %161, %cst_68 {dimension_numbers = #tpu.dot_dimension_numbers<[1], [0], [0], [1], [0, 0, 1, 1], [], []>} : vector<16x128xbf16>, vector<128x128xbf16>, vector<16x128xf32> -> vector<16x128xf32>
    %c0_69 = arith.constant 0 : index
    %c0_70 = arith.constant 0 : index
    %c0_71 = arith.constant 0 : index
    %164 = vector.load %arg17[%c0_69, %c0_70, %c0_71] : memref<2x1x128xf32, #tpu.memory_space<vmem>>, vector<1x1x128xf32>
    %165 = vector.shape_cast %164 : vector<1x1x128xf32> to vector<1x128xf32>
    %166 = vector.broadcast %165 : vector<1x128xf32> to vector<16x128xf32>
    %167 = arith.addf %163, %166 : vector<16x128xf32>
    %168 = arith.addf %149, %167 : vector<16x128xf32>
    %c0_72 = arith.constant 0 : index
    %c0_73 = arith.constant 0 : index
    %c0_74 = arith.constant 0 : index
    %169 = vector.load %arg18[%c0_72, %c0_73, %c0_74] : memref<2x1x128xf32, #tpu.memory_space<vmem>>, vector<1x1x128xf32>
    %170 = vector.shape_cast %169 : vector<1x1x128xf32> to vector<1x128xf32>
    %c0_75 = arith.constant 0 : index
    %c0_76 = arith.constant 0 : index
    %c0_77 = arith.constant 0 : index
    %171 = vector.load %arg19[%c0_75, %c0_76, %c0_77] : memref<2x1x128xf32, #tpu.memory_space<vmem>>, vector<1x1x128xf32>
    %172 = vector.shape_cast %171 : vector<1x1x128xf32> to vector<1x128xf32>
    %cst_78 = arith.constant dense<0.000000e+00> : vector<16xf32>
    %173 = vector.multi_reduction <add>, %168, %cst_78 [1] : vector<16x128xf32> to vector<16xf32>
    %174 = vector.shape_cast %173 : vector<16xf32> to vector<16x1xf32>
    %cst_79 = arith.constant 1.280000e+02 : f32
    %175 = vector.broadcast %cst_79 : f32 to vector<16x1xf32>
    %176 = arith.divf %174, %175 : vector<16x1xf32>
    %177 = vector.broadcast %176 : vector<16x1xf32> to vector<16x128xf32>
    %178 = arith.subf %168, %177 : vector<16x128xf32>
    %179 = arith.mulf %178, %178 : vector<16x128xf32>
    %cst_80 = arith.constant dense<0.000000e+00> : vector<16xf32>
    %180 = vector.multi_reduction <add>, %179, %cst_80 [1] : vector<16x128xf32> to vector<16xf32>
    %181 = vector.shape_cast %180 : vector<16xf32> to vector<16x1xf32>
    %cst_81 = arith.constant 1.280000e+02 : f32
    %182 = vector.broadcast %cst_81 : f32 to vector<16x1xf32>
    %183 = arith.divf %181, %182 : vector<16x1xf32>
    %184 = vector.broadcast %176 : vector<16x1xf32> to vector<16x128xf32>
    %185 = arith.subf %168, %184 : vector<16x128xf32>
    %cst_82 = arith.constant 9.99999974E-6 : f32
    %186 = vector.broadcast %cst_82 : f32 to vector<16x1xf32>
    %187 = arith.addf %183, %186 : vector<16x1xf32>
    %188 = math.rsqrt %187 : vector<16x1xf32>
    %189 = vector.broadcast %188 : vector<16x1xf32> to vector<16x128xf32>
    %190 = arith.mulf %185, %189 : vector<16x128xf32>
    %191 = vector.broadcast %170 : vector<1x128xf32> to vector<16x128xf32>
    %192 = arith.mulf %190, %191 : vector<16x128xf32>
    %193 = vector.broadcast %172 : vector<1x128xf32> to vector<16x128xf32>
    %194 = arith.addf %192, %193 : vector<16x128xf32>
    %c1 = arith.constant 1 : index
    %c0_83 = arith.constant 0 : index
    %c0_84 = arith.constant 0 : index
    %195 = vector.load %arg8[%c1, %c0_83, %c0_84] : memref<2x128x384xbf16, #tpu.memory_space<vmem>>, vector<1x128x384xbf16>
    %196 = vector.shape_cast %195 : vector<1x128x384xbf16> to vector<128x384xbf16>
    %197 = arith.truncf %194 : vector<16x128xf32> to vector<16x128xbf16>
    %cst_85 = arith.constant dense<0.000000e+00> : vector<16x384xf32>
    %198 = tpu.matmul %197, %196, %cst_85 {dimension_numbers = #tpu.dot_dimension_numbers<[1], [0], [0], [1], [0, 0, 1, 1], [], []>} : vector<16x128xbf16>, vector<128x384xbf16>, vector<16x384xf32> -> vector<16x384xf32>
    %c1_86 = arith.constant 1 : index
    %c0_87 = arith.constant 0 : index
    %c0_88 = arith.constant 0 : index
    %199 = vector.load %arg9[%c1_86, %c0_87, %c0_88] : memref<2x1x384xf32, #tpu.memory_space<vmem>>, vector<1x1x384xf32>
    %200 = vector.shape_cast %199 : vector<1x1x384xf32> to vector<1x384xf32>
    %201 = vector.broadcast %200 : vector<1x384xf32> to vector<16x384xf32>
    %202 = arith.addf %198, %201 : vector<16x384xf32>
    %203 = vector.extract_strided_slice %202 {offsets = [0, 0], sizes = [16, 128], strides = [1, 1]} : vector<16x384xf32> to vector<16x128xf32>
    %cst_89 = arith.constant 2.500000e-01 : f32
    %204 = vector.broadcast %cst_89 : f32 to vector<16x128xf32>
    %205 = arith.mulf %203, %204 : vector<16x128xf32>
    %206 = vector.extract_strided_slice %202 {offsets = [0, 128], sizes = [16, 128], strides = [1, 1]} : vector<16x384xf32> to vector<16x128xf32>
    %207 = vector.extract_strided_slice %202 {offsets = [0, 256], sizes = [16, 128], strides = [1, 1]} : vector<16x384xf32> to vector<16x128xf32>
    %208 = vector.extract_strided_slice %206 {offsets = [0, 0], sizes = [8, 128], strides = [1, 1]} : vector<16x128xf32> to vector<8x128xf32>
    %209 = vector.extract_strided_slice %207 {offsets = [0, 0], sizes = [8, 128], strides = [1, 1]} : vector<16x128xf32> to vector<8x128xf32>
    %210 = vector.extract_strided_slice %205 {offsets = [7, 0], sizes = [1, 128], strides = [1, 1]} : vector<16x128xf32> to vector<1x128xf32>
    %211 = vector.shape_cast %208 : vector<8x128xf32> to vector<1x8x128xf32>
    %212 = vector.shape_cast %211 : vector<1x8x128xf32> to vector<1x8x128xf32>
    %213 = vector.broadcast %212 : vector<1x8x128xf32> to vector<8x8x128xf32>
    %214 = vector.shape_cast %213 : vector<8x8x128xf32> to vector<64x128xf32>
    %215 = arith.mulf %214, %0 : vector<64x128xf32>
    %216 = vector.shape_cast %209 : vector<8x128xf32> to vector<1x8x128xf32>
    %217 = vector.shape_cast %216 : vector<1x8x128xf32> to vector<1x8x128xf32>
    %218 = vector.broadcast %217 : vector<1x8x128xf32> to vector<8x8x128xf32>
    %219 = vector.shape_cast %218 : vector<8x8x128xf32> to vector<64x128xf32>
    %220 = arith.mulf %219, %0 : vector<64x128xf32>
    %221 = arith.truncf %210 : vector<1x128xf32> to vector<1x128xbf16>
    %222 = arith.truncf %215 : vector<64x128xf32> to vector<64x128xbf16>
    "tpu.trace_start"() <{level = 10 : i32, message = "td,jd->tj"}> : () -> ()
    %cst_90 = arith.constant dense<0.000000e+00> : vector<1x64xf32>
    %223 = tpu.matmul %221, %222, %cst_90 {dimension_numbers = #tpu.dot_dimension_numbers<[1], [1], [0], [0], [0, 0, 1, 0], [], []>} : vector<1x128xbf16>, vector<64x128xbf16>, vector<1x64xf32> -> vector<1x64xf32>
    "tpu.trace_stop"() : () -> ()
    %cst_91 = arith.constant dense<0xFF800000> : vector<1xf32>
    %224 = vector.multi_reduction <maximumf>, %223, %cst_91 [1] : vector<1x64xf32> to vector<1xf32>
    %225 = vector.shape_cast %224 : vector<1xf32> to vector<1x1xf32>
    %226 = vector.broadcast %225 : vector<1x1xf32> to vector<1x64xf32>
    %227 = arith.subf %223, %226 : vector<1x64xf32>
    %228 = math.exp %227 : vector<1x64xf32>
    %229 = arith.truncf %228 : vector<1x64xf32> to vector<1x64xbf16>
    %cst_92 = arith.constant dense<0.000000e+00> : vector<1x64xf32>
    %230 = tpu.matmul %229, %2, %cst_92 {dimension_numbers = #tpu.dot_dimension_numbers<[1], [0], [0], [1], [0, 0, 1, 1], [], []>} : vector<1x64xbf16>, vector<64x64xbf16>, vector<1x64xf32> -> vector<1x64xf32>
    %cst_93 = arith.constant 9.99999968E-21 : f32
    %231 = vector.broadcast %cst_93 : f32 to vector<1x64xf32>
    %232 = arith.maximumf %230, %231 : vector<1x64xf32>
    %233 = tpu.reciprocal %232 {approx = true} : vector<1x64xf32> -> vector<1x64xf32>
    %234 = arith.mulf %228, %233 : vector<1x64xf32>
    %235 = arith.truncf %234 : vector<1x64xf32> to vector<1x64xbf16>
    %236 = arith.truncf %220 : vector<64x128xf32> to vector<64x128xbf16>
    %cst_94 = arith.constant dense<0.000000e+00> : vector<1x128xf32>
    %237 = tpu.matmul %235, %236, %cst_94 {dimension_numbers = #tpu.dot_dimension_numbers<[1], [0], [0], [1], [0, 0, 1, 1], [], []>} : vector<1x64xbf16>, vector<64x128xbf16>, vector<1x128xf32> -> vector<1x128xf32>
    %238 = vector.extract_strided_slice %206 {offsets = [8, 0], sizes = [8, 128], strides = [1, 1]} : vector<16x128xf32> to vector<8x128xf32>
    %239 = vector.extract_strided_slice %207 {offsets = [8, 0], sizes = [8, 128], strides = [1, 1]} : vector<16x128xf32> to vector<8x128xf32>
    %240 = vector.extract_strided_slice %205 {offsets = [15, 0], sizes = [1, 128], strides = [1, 1]} : vector<16x128xf32> to vector<1x128xf32>
    %241 = vector.shape_cast %238 : vector<8x128xf32> to vector<1x8x128xf32>
    %242 = vector.shape_cast %241 : vector<1x8x128xf32> to vector<1x8x128xf32>
    %243 = vector.broadcast %242 : vector<1x8x128xf32> to vector<8x8x128xf32>
    %244 = vector.shape_cast %243 : vector<8x8x128xf32> to vector<64x128xf32>
    %245 = arith.mulf %244, %0 : vector<64x128xf32>
    %246 = vector.shape_cast %239 : vector<8x128xf32> to vector<1x8x128xf32>
    %247 = vector.shape_cast %246 : vector<1x8x128xf32> to vector<1x8x128xf32>
    %248 = vector.broadcast %247 : vector<1x8x128xf32> to vector<8x8x128xf32>
    %249 = vector.shape_cast %248 : vector<8x8x128xf32> to vector<64x128xf32>
    %250 = arith.mulf %249, %0 : vector<64x128xf32>
    %251 = arith.truncf %240 : vector<1x128xf32> to vector<1x128xbf16>
    %252 = arith.truncf %245 : vector<64x128xf32> to vector<64x128xbf16>
    "tpu.trace_start"() <{level = 10 : i32, message = "td,jd->tj"}> : () -> ()
    %cst_95 = arith.constant dense<0.000000e+00> : vector<1x64xf32>
    %253 = tpu.matmul %251, %252, %cst_95 {dimension_numbers = #tpu.dot_dimension_numbers<[1], [1], [0], [0], [0, 0, 1, 0], [], []>} : vector<1x128xbf16>, vector<64x128xbf16>, vector<1x64xf32> -> vector<1x64xf32>
    "tpu.trace_stop"() : () -> ()
    %cst_96 = arith.constant dense<0xFF800000> : vector<1xf32>
    %254 = vector.multi_reduction <maximumf>, %253, %cst_96 [1] : vector<1x64xf32> to vector<1xf32>
    %255 = vector.shape_cast %254 : vector<1xf32> to vector<1x1xf32>
    %256 = vector.broadcast %255 : vector<1x1xf32> to vector<1x64xf32>
    %257 = arith.subf %253, %256 : vector<1x64xf32>
    %258 = math.exp %257 : vector<1x64xf32>
    %259 = arith.truncf %258 : vector<1x64xf32> to vector<1x64xbf16>
    %cst_97 = arith.constant dense<0.000000e+00> : vector<1x64xf32>
    %260 = tpu.matmul %259, %2, %cst_97 {dimension_numbers = #tpu.dot_dimension_numbers<[1], [0], [0], [1], [0, 0, 1, 1], [], []>} : vector<1x64xbf16>, vector<64x64xbf16>, vector<1x64xf32> -> vector<1x64xf32>
    %cst_98 = arith.constant 9.99999968E-21 : f32
    %261 = vector.broadcast %cst_98 : f32 to vector<1x64xf32>
    %262 = arith.maximumf %260, %261 : vector<1x64xf32>
    %263 = tpu.reciprocal %262 {approx = true} : vector<1x64xf32> -> vector<1x64xf32>
    %264 = arith.mulf %258, %263 : vector<1x64xf32>
    %265 = arith.truncf %264 : vector<1x64xf32> to vector<1x64xbf16>
    %266 = arith.truncf %250 : vector<64x128xf32> to vector<64x128xbf16>
    %cst_99 = arith.constant dense<0.000000e+00> : vector<1x128xf32>
    %267 = tpu.matmul %265, %266, %cst_99 {dimension_numbers = #tpu.dot_dimension_numbers<[1], [0], [0], [1], [0, 0, 1, 1], [], []>} : vector<1x64xbf16>, vector<64x128xbf16>, vector<1x128xf32> -> vector<1x128xf32>
    %268 = tpu.concatenate %237, %267 in 0 : vector<1x128xf32>, vector<1x128xf32> -> vector<2x128xf32>
    %269 = vector.shape_cast %194 : vector<16x128xf32> to vector<2x8x128xf32>
    %270 = vector.extract_strided_slice %269 {offsets = [0, 7, 0], sizes = [2, 1, 128], strides = [1, 1, 1]} : vector<2x8x128xf32> to vector<2x1x128xf32>
    %271 = vector.shape_cast %270 : vector<2x1x128xf32> to vector<2x128xf32>
    %c1_100 = arith.constant 1 : index
    %c0_101 = arith.constant 0 : index
    %c0_102 = arith.constant 0 : index
    %272 = vector.load %arg10[%c1_100, %c0_101, %c0_102] : memref<2x128x128xbf16, #tpu.memory_space<vmem>>, vector<1x128x128xbf16>
    %273 = vector.shape_cast %272 : vector<1x128x128xbf16> to vector<128x128xbf16>
    %274 = arith.truncf %268 : vector<2x128xf32> to vector<2x128xbf16>
    %cst_103 = arith.constant dense<0.000000e+00> : vector<2x128xf32>
    %275 = tpu.matmul %274, %273, %cst_103 {dimension_numbers = #tpu.dot_dimension_numbers<[1], [0], [0], [1], [0, 0, 1, 1], [], []>} : vector<2x128xbf16>, vector<128x128xbf16>, vector<2x128xf32> -> vector<2x128xf32>
    %c1_104 = arith.constant 1 : index
    %c0_105 = arith.constant 0 : index
    %c0_106 = arith.constant 0 : index
    %276 = vector.load %arg11[%c1_104, %c0_105, %c0_106] : memref<2x1x128xf32, #tpu.memory_space<vmem>>, vector<1x1x128xf32>
    %277 = vector.shape_cast %276 : vector<1x1x128xf32> to vector<1x128xf32>
    %278 = vector.broadcast %277 : vector<1x128xf32> to vector<2x128xf32>
    %279 = arith.addf %275, %278 : vector<2x128xf32>
    %280 = arith.addf %271, %279 : vector<2x128xf32>
    %c1_107 = arith.constant 1 : index
    %c0_108 = arith.constant 0 : index
    %c0_109 = arith.constant 0 : index
    %281 = vector.load %arg12[%c1_107, %c0_108, %c0_109] : memref<2x1x128xf32, #tpu.memory_space<vmem>>, vector<1x1x128xf32>
    %282 = vector.shape_cast %281 : vector<1x1x128xf32> to vector<1x128xf32>
    %c1_110 = arith.constant 1 : index
    %c0_111 = arith.constant 0 : index
    %c0_112 = arith.constant 0 : index
    %283 = vector.load %arg13[%c1_110, %c0_111, %c0_112] : memref<2x1x128xf32, #tpu.memory_space<vmem>>, vector<1x1x128xf32>
    %284 = vector.shape_cast %283 : vector<1x1x128xf32> to vector<1x128xf32>
    %cst_113 = arith.constant dense<0.000000e+00> : vector<2xf32>
    %285 = vector.multi_reduction <add>, %280, %cst_113 [1] : vector<2x128xf32> to vector<2xf32>
    %286 = vector.shape_cast %285 : vector<2xf32> to vector<2x1xf32>
    %cst_114 = arith.constant 1.280000e+02 : f32
    %287 = vector.broadcast %cst_114 : f32 to vector<2x1xf32>
    %288 = arith.divf %286, %287 : vector<2x1xf32>
    %289 = vector.broadcast %288 : vector<2x1xf32> to vector<2x128xf32>
    %290 = arith.subf %280, %289 : vector<2x128xf32>
    %291 = arith.mulf %290, %290 : vector<2x128xf32>
    %cst_115 = arith.constant dense<0.000000e+00> : vector<2xf32>
    %292 = vector.multi_reduction <add>, %291, %cst_115 [1] : vector<2x128xf32> to vector<2xf32>
    %293 = vector.shape_cast %292 : vector<2xf32> to vector<2x1xf32>
    %cst_116 = arith.constant 1.280000e+02 : f32
    %294 = vector.broadcast %cst_116 : f32 to vector<2x1xf32>
    %295 = arith.divf %293, %294 : vector<2x1xf32>
    %296 = vector.broadcast %288 : vector<2x1xf32> to vector<2x128xf32>
    %297 = arith.subf %280, %296 : vector<2x128xf32>
    %cst_117 = arith.constant 9.99999974E-6 : f32
    %298 = vector.broadcast %cst_117 : f32 to vector<2x1xf32>
    %299 = arith.addf %295, %298 : vector<2x1xf32>
    %300 = math.rsqrt %299 : vector<2x1xf32>
    %301 = vector.broadcast %300 : vector<2x1xf32> to vector<2x128xf32>
    %302 = arith.mulf %297, %301 : vector<2x128xf32>
    %303 = vector.broadcast %282 : vector<1x128xf32> to vector<2x128xf32>
    %304 = arith.mulf %302, %303 : vector<2x128xf32>
    %305 = vector.broadcast %284 : vector<1x128xf32> to vector<2x128xf32>
    %306 = arith.addf %304, %305 : vector<2x128xf32>
    %c1_118 = arith.constant 1 : index
    %c0_119 = arith.constant 0 : index
    %c0_120 = arith.constant 0 : index
    %307 = vector.load %arg14[%c1_118, %c0_119, %c0_120] : memref<2x128x128xbf16, #tpu.memory_space<vmem>>, vector<1x128x128xbf16>
    %308 = vector.shape_cast %307 : vector<1x128x128xbf16> to vector<128x128xbf16>
    %309 = arith.truncf %306 : vector<2x128xf32> to vector<2x128xbf16>
    %cst_121 = arith.constant dense<0.000000e+00> : vector<2x128xf32>
    %310 = tpu.matmul %309, %308, %cst_121 {dimension_numbers = #tpu.dot_dimension_numbers<[1], [0], [0], [1], [0, 0, 1, 1], [], []>} : vector<2x128xbf16>, vector<128x128xbf16>, vector<2x128xf32> -> vector<2x128xf32>
    %c1_122 = arith.constant 1 : index
    %c0_123 = arith.constant 0 : index
    %c0_124 = arith.constant 0 : index
    %311 = vector.load %arg15[%c1_122, %c0_123, %c0_124] : memref<2x1x128xf32, #tpu.memory_space<vmem>>, vector<1x1x128xf32>
    %312 = vector.shape_cast %311 : vector<1x1x128xf32> to vector<1x128xf32>
    %313 = vector.broadcast %312 : vector<1x128xf32> to vector<2x128xf32>
    %314 = arith.addf %310, %313 : vector<2x128xf32>
    %cst_125 = arith.constant 0.000000e+00 : f32
    %315 = vector.broadcast %cst_125 : f32 to vector<2x128xf32>
    %316 = arith.maximumf %314, %315 : vector<2x128xf32>
    %c1_126 = arith.constant 1 : index
    %c0_127 = arith.constant 0 : index
    %c0_128 = arith.constant 0 : index
    %317 = vector.load %arg16[%c1_126, %c0_127, %c0_128] : memref<2x128x128xbf16, #tpu.memory_space<vmem>>, vector<1x128x128xbf16>
    %318 = vector.shape_cast %317 : vector<1x128x128xbf16> to vector<128x128xbf16>
    %319 = arith.truncf %316 : vector<2x128xf32> to vector<2x128xbf16>
    %cst_129 = arith.constant dense<0.000000e+00> : vector<2x128xf32>
    %320 = tpu.matmul %319, %318, %cst_129 {dimension_numbers = #tpu.dot_dimension_numbers<[1], [0], [0], [1], [0, 0, 1, 1], [], []>} : vector<2x128xbf16>, vector<128x128xbf16>, vector<2x128xf32> -> vector<2x128xf32>
    %c1_130 = arith.constant 1 : index
    %c0_131 = arith.constant 0 : index
    %c0_132 = arith.constant 0 : index
    %321 = vector.load %arg17[%c1_130, %c0_131, %c0_132] : memref<2x1x128xf32, #tpu.memory_space<vmem>>, vector<1x1x128xf32>
    %322 = vector.shape_cast %321 : vector<1x1x128xf32> to vector<1x128xf32>
    %323 = vector.broadcast %322 : vector<1x128xf32> to vector<2x128xf32>
    %324 = arith.addf %320, %323 : vector<2x128xf32>
    %325 = arith.addf %306, %324 : vector<2x128xf32>
    %c1_133 = arith.constant 1 : index
    %c0_134 = arith.constant 0 : index
    %c0_135 = arith.constant 0 : index
    %326 = vector.load %arg18[%c1_133, %c0_134, %c0_135] : memref<2x1x128xf32, #tpu.memory_space<vmem>>, vector<1x1x128xf32>
    %327 = vector.shape_cast %326 : vector<1x1x128xf32> to vector<1x128xf32>
    %c1_136 = arith.constant 1 : index
    %c0_137 = arith.constant 0 : index
    %c0_138 = arith.constant 0 : index
    %328 = vector.load %arg19[%c1_136, %c0_137, %c0_138] : memref<2x1x128xf32, #tpu.memory_space<vmem>>, vector<1x1x128xf32>
    %329 = vector.shape_cast %328 : vector<1x1x128xf32> to vector<1x128xf32>
    %cst_139 = arith.constant dense<0.000000e+00> : vector<2xf32>
    %330 = vector.multi_reduction <add>, %325, %cst_139 [1] : vector<2x128xf32> to vector<2xf32>
    %331 = vector.shape_cast %330 : vector<2xf32> to vector<2x1xf32>
    %cst_140 = arith.constant 1.280000e+02 : f32
    %332 = vector.broadcast %cst_140 : f32 to vector<2x1xf32>
    %333 = arith.divf %331, %332 : vector<2x1xf32>
    %334 = vector.broadcast %333 : vector<2x1xf32> to vector<2x128xf32>
    %335 = arith.subf %325, %334 : vector<2x128xf32>
    %336 = arith.mulf %335, %335 : vector<2x128xf32>
    %cst_141 = arith.constant dense<0.000000e+00> : vector<2xf32>
    %337 = vector.multi_reduction <add>, %336, %cst_141 [1] : vector<2x128xf32> to vector<2xf32>
    %338 = vector.shape_cast %337 : vector<2xf32> to vector<2x1xf32>
    %cst_142 = arith.constant 1.280000e+02 : f32
    %339 = vector.broadcast %cst_142 : f32 to vector<2x1xf32>
    %340 = arith.divf %338, %339 : vector<2x1xf32>
    %341 = vector.broadcast %333 : vector<2x1xf32> to vector<2x128xf32>
    %342 = arith.subf %325, %341 : vector<2x128xf32>
    %cst_143 = arith.constant 9.99999974E-6 : f32
    %343 = vector.broadcast %cst_143 : f32 to vector<2x1xf32>
    %344 = arith.addf %340, %343 : vector<2x1xf32>
    %345 = math.rsqrt %344 : vector<2x1xf32>
    %346 = vector.broadcast %345 : vector<2x1xf32> to vector<2x128xf32>
    %347 = arith.mulf %342, %346 : vector<2x128xf32>
    %348 = vector.broadcast %327 : vector<1x128xf32> to vector<2x128xf32>
    %349 = arith.mulf %347, %348 : vector<2x128xf32>
    %350 = vector.broadcast %329 : vector<1x128xf32> to vector<2x128xf32>
    %351 = arith.addf %349, %350 : vector<2x128xf32>
    %c0_144 = arith.constant 0 : index
    %c0_145 = arith.constant 0 : index
    %352 = vector.load %arg20[%c0_144, %c0_145] : memref<1x128xf32, #tpu.memory_space<vmem>>, vector<1x128xf32>
    %353 = vector.broadcast %352 : vector<1x128xf32> to vector<2x128xf32>
    %354 = arith.mulf %351, %353 : vector<2x128xf32>
    %cst_146 = arith.constant dense<0.000000e+00> : vector<2xf32>
    %355 = vector.multi_reduction <add>, %354, %cst_146 [1] : vector<2x128xf32> to vector<2xf32>
    %356 = vector.shape_cast %355 : vector<2xf32> to vector<2x1xf32>
    %c0_147 = arith.constant 0 : index
    %c0_148 = arith.constant 0 : index
    %357 = vector.load %arg21[%c0_147, %c0_148] : memref<1x1xf32, #tpu.memory_space<vmem>>, vector<1x1xf32>
    %358 = vector.broadcast %357 : vector<1x1xf32> to vector<2x1xf32>
    %359 = arith.addf %356, %358 : vector<2x1xf32>
    %c0_149 = arith.constant 0 : index
    %c0_150 = arith.constant 0 : index
    %360 = vector.load %arg22[%c0_149, %c0_150] : memref<2x1xf32, #tpu.memory_space<vmem>>, vector<2x1xf32>
    tpu.vector_store %arg22[%c0_149, %c0_150], %359 {strides = array<i32>} : memref<2x1xf32, #tpu.memory_space<vmem>>, vector<2x1xf32>,
    return
  }
}

</mosaic_0001>

<llo_original>
// kernel: tpu_custom_call.1
$region0: #{tpu_custom_call.1}
  #allocation0 [shape = 'u32[]', space=smem, size = 0x4, offset = 0x4, fixed_abs, tag = 'smem constant byte address 0x4 - core index']
  #allocation1 [shape = 'u32[144,128]{1,0:T(1,128)}', space=vmem, size = 0x12000, scoped, tag = 'internal scratch']
  #allocation2 [shape = 'f32[1,1]{1,0:T(1,128)S(1)}', space=vmem, size = 0x200, scoped, tag = 'scoped memory for tpu_custom_call.1']
  %s0 = inlined_call_operand.vmem [shape: f32[16,4], index: 0, kind: input, shape index: {}]
  %s1 = inlined_call_operand.vmem [shape: f32[1,4], index: 1, kind: input, shape index: {}]
  %s2 = inlined_call_operand.hbm [shape: f32[1,4], index: 2, kind: input, shape index: {}]
  %s3 = inlined_call_operand.vmem [shape: f32[4,128], index: 3, kind: input, shape index: {}]
  %s4 = inlined_call_operand.vmem [shape: f32[1,128], index: 4, kind: input, shape index: {}]
  %s5 = inlined_call_operand.vmem [shape: f32[8,128], index: 5, kind: input, shape index: {}]
  %s6 = inlined_call_operand.hbm [shape: f32[64,128], index: 6, kind: input, shape index: {}]
  %s7 = inlined_call_operand.hbm [shape: f32[64,64], index: 7, kind: input, shape index: {}]
  %s8 = inlined_call_operand.hbm [shape: bf16[2,128,384], index: 8, kind: input, shape index: {}]
  %s9 = inlined_call_operand.vmem [shape: f32[2,1,384], index: 9, kind: input, shape index: {}]
  %s10 = inlined_call_operand.hbm [shape: bf16[2,128,128], index: 10, kind: input, shape index: {}]
  %s11 = inlined_call_operand.vmem [shape: f32[2,1,128], index: 11, kind: input, shape index: {}]
  %s12 = inlined_call_operand.vmem [shape: f32[2,1,128], index: 12, kind: input, shape index: {}]
  %s13 = inlined_call_operand.vmem [shape: f32[2,1,128], index: 13, kind: input, shape index: {}]
  %s14 = inlined_call_operand.hbm [shape: bf16[2,128,128], index: 14, kind: input, shape index: {}]
  %s15 = inlined_call_operand.vmem [shape: f32[2,1,128], index: 15, kind: input, shape index: {}]
  %s16 = inlined_call_operand.hbm [shape: bf16[2,128,128], index: 16, kind: input, shape index: {}]
  %s17 = inlined_call_operand.vmem [shape: f32[2,1,128], index: 17, kind: input, shape index: {}]
  %s18 = inlined_call_operand.vmem [shape: f32[2,1,128], index: 18, kind: input, shape index: {}]
  %s19 = inlined_call_operand.vmem [shape: f32[2,1,128], index: 19, kind: input, shape index: {}]
  %s20 = inlined_call_operand.vmem [shape: f32[1,128], index: 20, kind: input, shape index: {}]
  %s21 = inlined_call_operand.<no memory space> [shape: f32[1,1], index: 21, kind: input, shape index: {}]
  %s22 = inlined_call_operand.vmem [shape: f32[2,1], index: 22, kind: output, shape index: {}]
  %s23 = sld [smem:[#allocation0]]
  $region126: #{tpu_custom_call.1} parent=0
    _
  %s25 = ssub.s32 1, %s23
  %s26 = scalar_select 0, %s25, %s23
  %v27 = vstv %s21
  %28 = vst [vmem:[#allocation2] sm:$0x1] %v27
  $region1: #{tpu_custom_call.1} parent=0
    #allocation3 [shape = 'u8[512]{0}', space=vmem, size = 0x400, scoped, tag = 'input window, operand 2, single buffered']
    #allocation4 [shape = 's32[1]{0}', space=sflag, size = 0x4, scoped, tag = 'scoped memory for tpu_custom_call.1']
    #allocation5 [shape = 'u8[32768]{0}', space=vmem, size = 0x8000, scoped, tag = 'input window, operand 6, single buffered']
    #allocation6 [shape = 's32[1]{0}', space=sflag, size = 0x4, scoped, tag = 'scoped memory for tpu_custom_call.1']
    #allocation7 [shape = 'u8[32768]{0}', space=vmem, size = 0x8000, scoped, tag = 'input window, operand 7, single buffered']
    #allocation8 [shape = 'u8[196608]{0}', space=vmem, size = 0x30000, scoped, tag = 'input window, operand 8, single buffered']
    #allocation9 [shape = 's32[1]{0}', space=sflag, size = 0x4, scoped, tag = 'scoped memory for tpu_custom_call.1']
    #allocation10 [shape = 'u8[65536]{0}', space=vmem, size = 0x10000, scoped, tag = 'input window, operand 10, single buffered']
    #allocation11 [shape = 'u8[65536]{0}', space=vmem, size = 0x10000, scoped, tag = 'input window, operand 14, single buffered']
    #allocation12 [shape = 's32[1]{0}', space=sflag, size = 0x4, scoped, tag = 'scoped memory for tpu_custom_call.1']
    #allocation13 [shape = 'u8[65536]{0}', space=vmem, size = 0x10000, scoped, tag = 'input window, operand 16, single buffered']
    %29 = vsyncpa [#allocation4], 0
    %30 = vsyncpa [#allocation6], 0
    %31 = vsyncpa [#allocation9], 0
    %32 = vsyncpa [#allocation12], 0
    // Predicated region
    $region2: #{tpu_custom_call.1} parent=1 // pred_check
      _
    $region3: #{tpu_custom_call.1} parent=1 // pred_check_branch
      %34 = sbr.rel (0) target = $region5
    $region4: #{tpu_custom_call.1} parent=1 // pred_region
      _
    $region5: #{tpu_custom_call.1} parent=1 // pred_fallthru
      _
    // Predicated region
    $region6: #{tpu_custom_call.1} parent=1 // pred_check
      _
    $region7: #{tpu_custom_call.1} parent=1 // pred_check_branch
      %36 = sbr.rel (0) target = $region9
    $region8: #{tpu_custom_call.1} parent=1 // pred_region
      _
    $region9: #{tpu_custom_call.1} parent=1 // pred_fallthru
      _
    // Predicated region
    $region10: #{tpu_custom_call.1} parent=1 // pred_check
      _
    $region11: #{tpu_custom_call.1} parent=1 // pred_check_branch
      %38 = sbr.rel (0) target = $region13
    $region12: #{tpu_custom_call.1} parent=1 // pred_region
      %s40 = ssub.s32 16, 16
      %41 = vsyncadd [#allocation4], %s40
      %s43 = sshll.u32 [#allocation3], 4
      %s44 = int_to_ptr.vmem [resolvable:$true] %s43
      %46 = dma.hbm_to_vmem [thread:$0]  %s2, 16, %s44, [#allocation4]
    $region13: #{tpu_custom_call.1} parent=1 // pred_fallthru
      _
    // Predicated region
    $region14: #{tpu_custom_call.1} parent=1 // pred_check
      _
    $region15: #{tpu_custom_call.1} parent=1 // pred_check_branch
      %48 = sbr.rel (0) target = $region17
    $region16: #{tpu_custom_call.1} parent=1 // pred_region
      _
    $region17: #{tpu_custom_call.1} parent=1 // pred_fallthru
      _
    // Predicated region
    $region18: #{tpu_custom_call.1} parent=1 // pred_check
      _
    $region19: #{tpu_custom_call.1} parent=1 // pred_check_branch
      %50 = sbr.rel (0) target = $region21
    $region20: #{tpu_custom_call.1} parent=1 // pred_region
      _
    $region21: #{tpu_custom_call.1} parent=1 // pred_fallthru
      _
    // Predicated region
    $region22: #{tpu_custom_call.1} parent=1 // pred_check
      _
    $region23: #{tpu_custom_call.1} parent=1 // pred_check_branch
      %52 = sbr.rel (0) target = $region25
    $region24: #{tpu_custom_call.1} parent=1 // pred_region
      _
    $region25: #{tpu_custom_call.1} parent=1 // pred_fallthru
      _
    // Predicated region
    $region26: #{tpu_custom_call.1} parent=1 // pred_check
      _
    $region27: #{tpu_custom_call.1} parent=1 // pred_check_branch
      %54 = sbr.rel (0) target = $region29
    $region28: #{tpu_custom_call.1} parent=1 // pred_region
      %s56 = ssub.s32 1024, 1024
      %57 = vsyncadd [#allocation6], %s56
      %s58 = sshll.u32 [#allocation5], 4
      %s59 = int_to_ptr.vmem [resolvable:$true] %s58
      %64 = dma.hbm_to_vmem [thread:$0]  %s6, 1024, %s59, [#allocation6], 128, 128, 8
    $region29: #{tpu_custom_call.1} parent=1 // pred_fallthru
      _
    // Predicated region
    $region30: #{tpu_custom_call.1} parent=1 // pred_check
      _
    $region31: #{tpu_custom_call.1} parent=1 // pred_check_branch
      %66 = sbr.rel (0) target = $region33
    $region32: #{tpu_custom_call.1} parent=1 // pred_region
      %s68 = ssub.s32 1024, 1024
      %69 = vsyncadd [#allocation6], %s68
      %s70 = sshll.u32 [#allocation7], 4
      %s71 = int_to_ptr.vmem [resolvable:$true] %s70
      %76 = dma.hbm_to_vmem [thread:$0]  %s7, 1024, %s71, [#allocation6], 128, 128, 8
    $region33: #{tpu_custom_call.1} parent=1 // pred_fallthru
      _
    // Predicated region
    $region34: #{tpu_custom_call.1} parent=1 // pred_check
      _
    $region35: #{tpu_custom_call.1} parent=1 // pred_check_branch
      %78 = sbr.rel (0) target = $region37
    $region36: #{tpu_custom_call.1} parent=1 // pred_region
      %s80 = ssub.s32 6144, 6144
      %81 = vsyncadd [#allocation9], %s80
      %s82 = sshll.u32 [#allocation8], 4
      %s83 = int_to_ptr.vmem [resolvable:$true] %s82
      %88 = dma.hbm_to_vmem [thread:$0]  %s8, 6144, %s83, [#allocation9], 192, 192, 12
    $region37: #{tpu_custom_call.1} parent=1 // pred_fallthru
      _
    // Predicated region
    $region38: #{tpu_custom_call.1} parent=1 // pred_check
      _
    $region39: #{tpu_custom_call.1} parent=1 // pred_check_branch
      %90 = sbr.rel (0) target = $region41
    $region40: #{tpu_custom_call.1} parent=1 // pred_region
      _
    $region41: #{tpu_custom_call.1} parent=1 // pred_fallthru
      _
    // Predicated region
    $region42: #{tpu_custom_call.1} parent=1 // pred_check
      _
    $region43: #{tpu_custom_call.1} parent=1 // pred_check_branch
      %92 = sbr.rel (0) target = $region45
    $region44: #{tpu_custom_call.1} parent=1 // pred_region
      %s94 = ssub.s32 2048, 2048
      %95 = vsyncadd [#allocation9], %s94
      %s96 = sshll.u32 [#allocation10], 4
      %s97 = int_to_ptr.vmem [resolvable:$true] %s96
      %102 = dma.hbm_to_vmem [thread:$0]  %s10, 2048, %s97, [#allocation9], 64, 64, 4
    $region45: #{tpu_custom_call.1} parent=1 // pred_fallthru
      _
    // Predicated region
    $region46: #{tpu_custom_call.1} parent=1 // pred_check
      _
    $region47: #{tpu_custom_call.1} parent=1 // pred_check_branch
      %104 = sbr.rel (0) target = $region49
    $region48: #{tpu_custom_call.1} parent=1 // pred_region
      _
    $region49: #{tpu_custom_call.1} parent=1 // pred_fallthru
      _
    // Predicated region
    $region50: #{tpu_custom_call.1} parent=1 // pred_check
      _
    $region51: #{tpu_custom_call.1} parent=1 // pred_check_branch
      %106 = sbr.rel (0) target = $region53
    $region52: #{tpu_custom_call.1} parent=1 // pred_region
      _
    $region53: #{tpu_custom_call.1} parent=1 // pred_fallthru
      _
    // Predicated region
    $region54: #{tpu_custom_call.1} parent=1 // pred_check
      _
    $region55: #{tpu_custom_call.1} parent=1 // pred_check_branch
      %108 = sbr.rel (0) target = $region57
    $region56: #{tpu_custom_call.1} parent=1 // pred_region
      _
    $region57: #{tpu_custom_call.1} parent=1 // pred_fallthru
      _
    // Predicated region
    $region58: #{tpu_custom_call.1} parent=1 // pred_check
      _
    $region59: #{tpu_custom_call.1} parent=1 // pred_check_branch
      %110 = sbr.rel (0) target = $region61
    $region60: #{tpu_custom_call.1} parent=1 // pred_region
      %s112 = ssub.s32 2048, 2048
      %113 = vsyncadd [#allocation12], %s112
      %s114 = sshll.u32 [#allocation11], 4
      %s115 = int_to_ptr.vmem [resolvable:$true] %s114
      %120 = dma.hbm_to_vmem [thread:$0]  %s14, 2048, %s115, [#allocation12], 64, 64, 4
    $region61: #{tpu_custom_call.1} parent=1 // pred_fallthru
      _
    // Predicated region
    $region62: #{tpu_custom_call.1} parent=1 // pred_check
      _
    $region63: #{tpu_custom_call.1} parent=1 // pred_check_branch
      %122 = sbr.rel (0) target = $region65
    $region64: #{tpu_custom_call.1} parent=1 // pred_region
      _
    $region65: #{tpu_custom_call.1} parent=1 // pred_fallthru
      _
    // Predicated region
    $region66: #{tpu_custom_call.1} parent=1 // pred_check
      _
    $region67: #{tpu_custom_call.1} parent=1 // pred_check_branch
      %124 = sbr.rel (0) target = $region69
    $region68: #{tpu_custom_call.1} parent=1 // pred_region
      %s126 = ssub.s32 2048, 2048
      %127 = vsyncadd [#allocation12], %s126
      %s128 = sshll.u32 [#allocation13], 4
      %s129 = int_to_ptr.vmem [resolvable:$true] %s128
      %134 = dma.hbm_to_vmem [thread:$0]  %s16, 2048, %s129, [#allocation12], 64, 64, 4
    $region69: #{tpu_custom_call.1} parent=1 // pred_fallthru
      _
    // Predicated region
    $region70: #{tpu_custom_call.1} parent=1 // pred_check
      _
    $region71: #{tpu_custom_call.1} parent=1 // pred_check_branch
      %136 = sbr.rel (0) target = $region73
    $region72: #{tpu_custom_call.1} parent=1 // pred_region
      _
    $region73: #{tpu_custom_call.1} parent=1 // pred_fallthru
      _
    // Predicated region
    $region74: #{tpu_custom_call.1} parent=1 // pred_check
      _
    $region75: #{tpu_custom_call.1} parent=1 // pred_check_branch
      %138 = sbr.rel (0) target = $region77
    $region76: #{tpu_custom_call.1} parent=1 // pred_region
      _
    $region77: #{tpu_custom_call.1} parent=1 // pred_fallthru
      _
    // Predicated region
    $region78: #{tpu_custom_call.1} parent=1 // pred_check
      _
    $region79: #{tpu_custom_call.1} parent=1 // pred_check_branch
      %140 = sbr.rel (0) target = $region81
    $region80: #{tpu_custom_call.1} parent=1 // pred_region
      _
    $region81: #{tpu_custom_call.1} parent=1 // pred_fallthru
      _
    // Predicated region
    $region82: #{tpu_custom_call.1} parent=1 // pred_check
      _
    $region83: #{tpu_custom_call.1} parent=1 // pred_check_branch
      %142 = sbr.rel (0) target = $region85
    $region84: #{tpu_custom_call.1} parent=1 // pred_region
      _
    $region85: #{tpu_custom_call.1} parent=1 // pred_fallthru
      _
    // Predicated region
    $region86: #{tpu_custom_call.1} parent=1 // pred_check
      _
    $region87: #{tpu_custom_call.1} parent=1 // pred_check_branch
      %144 = sbr.rel (0) target = $region89
    $region88: #{tpu_custom_call.1} parent=1 // pred_region
      _
    $region89: #{tpu_custom_call.1} parent=1 // pred_fallthru
      _
    // Predicated region
    $region90: #{tpu_custom_call.1} parent=1 // pred_check
      _
    $region91: #{tpu_custom_call.1} parent=1 // pred_check_branch
      %146 = sbr.rel (0) target = $region93
    $region92: #{tpu_custom_call.1} parent=1 // pred_region
      %147 = dma.done [#allocation4], 16
    $region93: #{tpu_custom_call.1} parent=1 // pred_fallthru
      _
    // Predicated region
    $region94: #{tpu_custom_call.1} parent=1 // pred_check
      _
    $region95: #{tpu_custom_call.1} parent=1 // pred_check_branch
      %149 = sbr.rel (0) target = $region97
    $region96: #{tpu_custom_call.1} parent=1 // pred_region
      %150 = dma.done [#allocation6], 1024
    $region97: #{tpu_custom_call.1} parent=1 // pred_fallthru
      _
    // Predicated region
    $region98: #{tpu_custom_call.1} parent=1 // pred_check
      _
    $region99: #{tpu_custom_call.1} parent=1 // pred_check_branch
      %152 = sbr.rel (0) target = $region101
    $region100: #{tpu_custom_call.1} parent=1 // pred_region
      %153 = dma.done [#allocation6], 1024
    $region101: #{tpu_custom_call.1} parent=1 // pred_fallthru
      _
    // Predicated region
    $region102: #{tpu_custom_call.1} parent=1 // pred_check
      _
    $region103: #{tpu_custom_call.1} parent=1 // pred_check_branch
      %155 = sbr.rel (0) target = $region105
    $region104: #{tpu_custom_call.1} parent=1 // pred_region
      %156 = dma.done [#allocation9], 6144
    $region105: #{tpu_custom_call.1} parent=1 // pred_fallthru
      _
    // Predicated region
    $region106: #{tpu_custom_call.1} parent=1 // pred_check
      _
    $region107: #{tpu_custom_call.1} parent=1 // pred_check_branch
      %158 = sbr.rel (0) target = $region109
    $region108: #{tpu_custom_call.1} parent=1 // pred_region
      %159 = dma.done [#allocation9], 2048
    $region109: #{tpu_custom_call.1} parent=1 // pred_fallthru
      _
    // Predicated region
    $region110: #{tpu_custom_call.1} parent=1 // pred_check
      _
    $region111: #{tpu_custom_call.1} parent=1 // pred_check_branch
      %161 = sbr.rel (0) target = $region113
    $region112: #{tpu_custom_call.1} parent=1 // pred_region
      %162 = dma.done [#allocation12], 2048
    $region113: #{tpu_custom_call.1} parent=1 // pred_fallthru
      _
    // Predicated region
    $region114: #{tpu_custom_call.1} parent=1 // pred_check
      _
    $region115: #{tpu_custom_call.1} parent=1 // pred_check_branch
      %164 = sbr.rel (0) target = $region117
    $region116: #{tpu_custom_call.1} parent=1 // pred_region
      %165 = dma.done [#allocation12], 2048
    $region117: #{tpu_custom_call.1} parent=1 // pred_fallthru
      _
    %v167 = vld [vmem:[#allocation5] sm:$0xff]
    %v168 = vld [vmem:[#allocation5 + $0x8] sm:$0xff]
    %v169 = vld [vmem:[#allocation5 + $0x10] sm:$0xff]
    %v170 = vld [vmem:[#allocation5 + $0x18] sm:$0xff]
    %v171 = vld [vmem:[#allocation5 + $0x20] sm:$0xff]
    %v172 = vld [vmem:[#allocation5 + $0x28] sm:$0xff]
    %v173 = vld [vmem:[#allocation5 + $0x30] sm:$0xff]
    %v174 = vld [vmem:[#allocation5 + $0x38] sm:$0xff]
    %v175 = vld [vmem:[#allocation7] sm:$0xff]
    %v176 = vld [vmem:[#allocation7 + $0x8] sm:$0xff]
    %v177 = vld [vmem:[#allocation7 + $0x10] sm:$0xff]
    %v178 = vld [vmem:[#allocation7 + $0x18] sm:$0xff]
    %v179 = vld [vmem:[#allocation7 + $0x20] sm:$0xff]
    %v180 = vld [vmem:[#allocation7 + $0x28] sm:$0xff]
    %v181 = vld [vmem:[#allocation7 + $0x30] sm:$0xff]
    %v182 = vld [vmem:[#allocation7 + $0x38] sm:$0xff]
    %v183 = vpack.c.bf16 %v176, %v175
    %v184 = vpack.c.bf16 %v178, %v177
    %v185 = vpack.c.bf16 %v180, %v179
    %v186 = vpack.c.bf16 %v182, %v181
    %v187 = vld [vmem:[%s0] sm:$0xff]
    %v188 = vld [vmem:[%s0 + $0x8] sm:$0xff]
    %v189 = vld [vmem:[%s1] sm:$0x1]
    %v190 = vld [vmem:[#allocation3] sm:$0x1]
    %vm191 = vcmask 31744
    %v192 = vsel %vm191, %v187, 0.0
    %193 = vadd.xlane.f32.xlu0 %v192
    %v194 = vpop.xlane.xlu0 %193
    %v195 = vsel %vm191, %v188, 0.0
    %196 = vadd.xlane.f32.xlu0 %v195
    %v197 = vpop.xlane.xlu0 %196
    %v198 = vrcp.pop 4.0
    %v199 = vmul.f32 %v194, %v198
    %v200 = vmul.f32 %v197, %v198
    %v201 = vsub.f32 %v187, %v199
    %v202 = vsub.f32 %v188, %v200
    %v203 = vmul.f32 %v201, %v201
    %v204 = vmul.f32 %v202, %v202
    %v205 = vsel %vm191, %v203, 0.0
    %206 = vadd.xlane.f32.xlu0 %v205
    %v207 = vpop.xlane.xlu0 %206
    %v208 = vsel %vm191, %v204, 0.0
    %209 = vadd.xlane.f32.xlu0 %v208
    %v210 = vpop.xlane.xlu0 %209
    %v211 = vmul.f32 %v207, %v198
    %v212 = vmul.f32 %v210, %v198
    %v213 = vadd.f32 %v211, 1e-05
    %v214 = vadd.f32 %v212, 1e-05
    %v215 = vrsqrt.pop %v213
    %v216 = vrsqrt.pop %v214
    %v217 = vmul.f32 %v201, %v215
    %v218 = vmul.f32 %v202, %v216
    %v220 = vlaneseq
    %v221 = vshrl.u32 %v220, 7
    %v222 = vsub.s32 0, %v221
    %v223 = vrot.slane %v189, %v222
    %v225 = vmul.f32 %v217, %v223
    %v226 = vmul.f32 %v218, %v223
    %v228 = vlaneseq
    %v229 = vshrl.u32 %v228, 7
    %v230 = vsub.s32 0, %v229
    %v231 = vrot.slane %v190, %v230
    %v233 = vadd.f32 %v225, %v231
    %v234 = vadd.f32 %v226, %v231
    %v235 = vld [vmem:[%s3] sm:$0xf]
    %v236 = vld [vmem:[%s4] sm:$0x1]
    %v238 = vlaneseq
    %v239 = vshrl.u32 %v238, 7
    %v240 = vsub.s32 0, %v239
    %v241 = vrot.slane %v236, %v240
    %v244 = vsel %vm191, %v233, 0
    %v247 = vsel %vm191, %v234, 0
    %vm249 = vcmask 1043456
    %v251 = vsel %vm249, %v235, 0
    %253 = vmatprep.subr.mxu0 0.0
    %254 = vmatpush1.msra.mxu0 %v251
    %255 = vmatprep.subr.mxu0 0.0
    %256 = vmatpush1.msra.mxu0 0.0
    %257 = vmatprep.subr.mxu0 0.0
    %258 = vmatpush1.msra.mxu0 0.0
    %259 = vmatprep.subr.mxu0 0.0
    %260 = vmatpush1.msra.mxu0 0.0
    %261 = vmatprep.subr.mxu0 0.0
    %262 = vmatpush1.msra.mxu0 0.0
    %263 = vmatprep.subr.mxu0 0.0
    %264 = vmatpush1.msra.mxu0 0.0
    %265 = vmatprep.subr.mxu0 0.0
    %266 = vmatpush1.msra.mxu0 0.0
    %267 = vmatprep.subr.mxu0 0.0
    %268 = vmatpush1.msra.mxu0 0.0
    %269 = vmatprep.subr.mxu0 0.0
    %270 = vmatpush1.msra.mxu0 0.0
    %271 = vmatprep.subr.mxu0 0.0
    %272 = vmatpush1.msra.mxu0 0.0
    %273 = vmatprep.subr.mxu0 0.0
    %274 = vmatpush1.msra.mxu0 0.0
    %275 = vmatprep.subr.mxu0 0.0
    %276 = vmatpush1.msra.mxu0 0.0
    %277 = vmatprep.subr.mxu0 0.0
    %278 = vmatpush1.msra.mxu0 0.0
    %279 = vmatprep.subr.mxu0 0.0
    %280 = vmatpush1.msra.mxu0 0.0
    %281 = vmatprep.subr.mxu0 0.0
    %282 = vmatpush1.msra.mxu0 0.0
    %283 = vmatprep.subr.mxu0 0.0
    %284 = vmatpush1.msra.mxu0 0.0
    %285 = vmatprep.subr.mxu0 0.0
    %286 = vmatpush1.msra.mxu0 0.0
    %287 = vmatprep.subr.mxu0 0.0
    %288 = vmatpush1.msra.mxu0 0.0
    %289 = vmatprep.subr.mxu0 0.0
    %290 = vmatpush1.msra.mxu0 0.0
    %291 = vmatprep.subr.mxu0 0.0
    %292 = vmatpush1.msra.mxu0 0.0
    %293 = vmatprep.subr.mxu0 0.0
    %294 = vmatpush1.msra.mxu0 0.0
    %295 = vmatprep.subr.mxu0 0.0
    %296 = vmatpush1.msra.mxu0 0.0
    %297 = vmatprep.subr.mxu0 0.0
    %298 = vmatpush1.msra.mxu0 0.0
    %299 = vmatprep.subr.mxu0 0.0
    %300 = vmatpush1.msra.mxu0 0.0
    %301 = vmatprep.subr.mxu0 0.0
    %302 = vmatpush1.msra.mxu0 0.0
    %303 = vmatprep.subr.mxu0 0.0
    %304 = vmatpush1.msra.mxu0 0.0
    %305 = vmatprep.subr.mxu0 0.0
    %306 = vmatpush1.msra.mxu0 0.0
    %307 = vmatprep.subr.mxu0 0.0
    %308 = vmatpush1.msra.mxu0 0.0
    %309 = vmatprep.subr.mxu0 0.0
    %310 = vmatpush1.msra.mxu0 0.0
    %311 = vmatprep.subr.mxu0 0.0
    %312 = vmatpush1.msra.mxu0 0.0
    %313 = vmatprep.subr.mxu0 0.0
    %314 = vmatpush1.msra.mxu0 0.0
    %315 = vmatprep.subr.mxu0 0.0
    %316 = vmatpush1.msra.mxu0 0.0
    %317 = vmatprep.mubr.f32.mxu0 0.0
    %318 = vmatmul.mubr.f32.gmra.mrb[0].mxu0 %v244
    %v319 = vpop.f32.mrb[0].mxu0
    %v320 = vadd.f32 %v241, %v319
    %v321 = vpop.f32.mrb[0].mxu0
    %322 = vmatprep.mubr.f32.mxu0 0.0
    %323 = vmatmul.mubr.f32.gmra.mrb[0].mxu0 %v247
    %v324 = vpop.f32.mrb[0].mxu0
    %v325 = vadd.f32 %v241, %v324
    %v326 = vpop.f32.mrb[0].mxu0
    %327 = vdwg.mxu0
    %v328 = vmul.f32 %v320, 11.313708
    %v329 = vmul.f32 %v325, 11.313708
    %v330 = vld [vmem:[%s5] sm:$0xff]
    %v331 = vadd.f32 %v328, %v330
    %v332 = vadd.f32 %v329, %v330
    %v333 = vld [vmem:[#allocation8] sm:$0xff]
    %v334 = vld [vmem:[#allocation8 + $0x8] sm:$0xf]
    %v335 = vld [vmem:[#allocation8 + $0xc] sm:$0xff]
    %v336 = vld [vmem:[#allocation8 + $0x14] sm:$0xf]
    %v337 = vld [vmem:[#allocation8 + $0x18] sm:$0xff]
    %v338 = vld [vmem:[#allocation8 + $0x20] sm:$0xf]
    %v339 = vld [vmem:[#allocation8 + $0x24] sm:$0xff]
    %v340 = vld [vmem:[#allocation8 + $0x2c] sm:$0xf]
    %v341 = vld [vmem:[#allocation8 + $0x30] sm:$0xff]
    %v342 = vld [vmem:[#allocation8 + $0x38] sm:$0xf]
    %v343 = vld [vmem:[#allocation8 + $0x3c] sm:$0xff]
    %v344 = vld [vmem:[#allocation8 + $0x44] sm:$0xf]
    %v345 = vld [vmem:[#allocation8 + $0x48] sm:$0xff]
    %v346 = vld [vmem:[#allocation8 + $0x50] sm:$0xf]
    %v347 = vld [vmem:[#allocation8 + $0x54] sm:$0xff]
    %v348 = vld [vmem:[#allocation8 + $0x5c] sm:$0xf]
    %v349 = vld [vmem:[#allocation8 + $0x60] sm:$0xff]
    %v350 = vld [vmem:[#allocation8 + $0x68] sm:$0xf]
    %v351 = vld [vmem:[#allocation8 + $0x6c] sm:$0xff]
    %v352 = vld [vmem:[#allocation8 + $0x74] sm:$0xf]
    %v353 = vld [vmem:[#allocation8 + $0x78] sm:$0xff]
    %v354 = vld [vmem:[#allocation8 + $0x80] sm:$0xf]
    %v355 = vld [vmem:[#allocation8 + $0x84] sm:$0xff]
    %v356 = vld [vmem:[#allocation8 + $0x8c] sm:$0xf]
    %v357 = vld [vmem:[#allocation8 + $0x90] sm:$0xff]
    %v358 = vld [vmem:[#allocation8 + $0x98] sm:$0xf]
    %v359 = vld [vmem:[#allocation8 + $0x9c] sm:$0xff]
    %v360 = vld [vmem:[#allocation8 + $0xa4] sm:$0xf]
    %v361 = vld [vmem:[#allocation8 + $0xa8] sm:$0xff]
    %v362 = vld [vmem:[#allocation8 + $0xb0] sm:$0xf]
    %v363 = vld [vmem:[#allocation8 + $0xb4] sm:$0xff]
    %v364 = vld [vmem:[#allocation8 + $0xbc] sm:$0xf]
    %v365 = vpack.c.bf16 %v332, %v331
    %v366 = vld [vmem:[%s9] sm:$0x7]
    %v368 = vlaneseq
    %v369 = vshrl.u32 %v368, 7
    %v370 = vsub.s32 0, %v369
    %v371 = vrot.slane %v366, %v370
    %v372 = vlaneseq
    %v373 = vshrl.u32 %v372, 7
    %v374 = vsub.s32 1, %v373
    %v375 = vrot.slane %v366, %v374
    %v376 = vlaneseq
    %v377 = vshrl.u32 %v376, 7
    %v378 = vsub.s32 2, %v377
    %v379 = vrot.slane %v366, %v378
    %v415 = vunpack.c.l.b16 %v333
    %v416 = vunpack.c.h.b16 %v333
    %v417 = vunpack.c.l.b16 %v334
    %v418 = vunpack.c.l.b16 %v335
    %v419 = vunpack.c.h.b16 %v335
    %v420 = vunpack.c.l.b16 %v336
    %v421 = vunpack.c.l.b16 %v337
    %v422 = vunpack.c.h.b16 %v337
    %v423 = vunpack.c.l.b16 %v338
    %v424 = vunpack.c.l.b16 %v339
    %v425 = vunpack.c.h.b16 %v339
    %v426 = vunpack.c.l.b16 %v340
    %v427 = vunpack.c.l.b16 %v341
    %v428 = vunpack.c.h.b16 %v341
    %v429 = vunpack.c.l.b16 %v342
    %v430 = vunpack.c.l.b16 %v343
    %v431 = vunpack.c.h.b16 %v343
    %v432 = vunpack.c.l.b16 %v344
    %v433 = vunpack.c.l.b16 %v345
    %v434 = vunpack.c.h.b16 %v345
    %v435 = vunpack.c.l.b16 %v346
    %v436 = vunpack.c.l.b16 %v347
    %v437 = vunpack.c.h.b16 %v347
    %v438 = vunpack.c.l.b16 %v348
    %v439 = vunpack.c.l.b16 %v349
    %v440 = vunpack.c.h.b16 %v349
    %v441 = vunpack.c.l.b16 %v350
    %v442 = vunpack.c.l.b16 %v351
    %v443 = vunpack.c.h.b16 %v351
    %v444 = vunpack.c.l.b16 %v352
    %v445 = vunpack.c.l.b16 %v353
    %v446 = vunpack.c.h.b16 %v353
    %v447 = vunpack.c.l.b16 %v354
    %v448 = vunpack.c.l.b16 %v355
    %v449 = vunpack.c.h.b16 %v355
    %v450 = vunpack.c.l.b16 %v356
    %v451 = vunpack.c.l.b16 %v357
    %v452 = vunpack.c.h.b16 %v357
    %v453 = vunpack.c.l.b16 %v358
    %v454 = vunpack.c.l.b16 %v359
    %v455 = vunpack.c.h.b16 %v359
    %v456 = vunpack.c.l.b16 %v360
    %v457 = vunpack.c.l.b16 %v361
    %v458 = vunpack.c.h.b16 %v361
    %v459 = vunpack.c.l.b16 %v362
    %v460 = vunpack.c.l.b16 %v363
    %v461 = vunpack.c.h.b16 %v363
    %v462 = vunpack.c.l.b16 %v364
    %v463 = vpack.c.b16 %v418, %v415
    %v464 = vpack.c.b16 %v419, %v416
    %v465 = vpack.c.b16 %v420, %v417
    %v466 = vpack.c.b16 %v424, %v421
    %v467 = vpack.c.b16 %v425, %v422
    %v468 = vpack.c.b16 %v426, %v423
    %v469 = vpack.c.b16 %v430, %v427
    %v470 = vpack.c.b16 %v431, %v428
    %v471 = vpack.c.b16 %v432, %v429
    %v472 = vpack.c.b16 %v436, %v433
    %v473 = vpack.c.b16 %v437, %v434
    %v474 = vpack.c.b16 %v438, %v435
    %v475 = vpack.c.b16 %v442, %v439
    %v476 = vpack.c.b16 %v443, %v440
    %v477 = vpack.c.b16 %v444, %v441
    %v478 = vpack.c.b16 %v448, %v445
    %v479 = vpack.c.b16 %v449, %v446
    %v480 = vpack.c.b16 %v450, %v447
    %v481 = vpack.c.b16 %v454, %v451
    %v482 = vpack.c.b16 %v455, %v452
    %v483 = vpack.c.b16 %v456, %v453
    %v484 = vpack.c.b16 %v460, %v457
    %v485 = vpack.c.b16 %v461, %v458
    %v486 = vpack.c.b16 %v462, %v459
    %511 = vmatprep.subr.bf16.mxu0 %v464
    %512 = vmatpush1.bf16.msra.mxu0 %v463
    %513 = vmatprep.subr.bf16.mxu0 %v467
    %514 = vmatpush1.bf16.msra.mxu0 %v466
    %515 = vmatprep.subr.bf16.mxu0 %v470
    %516 = vmatpush1.bf16.msra.mxu0 %v469
    %517 = vmatprep.subr.bf16.mxu0 %v473
    %518 = vmatpush1.bf16.msra.mxu0 %v472
    %519 = vmatprep.subr.bf16.mxu0 %v476
    %520 = vmatpush1.bf16.msra.mxu0 %v475
    %521 = vmatprep.subr.bf16.mxu0 %v479
    %522 = vmatpush1.bf16.msra.mxu0 %v478
    %523 = vmatprep.subr.bf16.mxu0 %v482
    %524 = vmatpush1.bf16.msra.mxu0 %v481
    %525 = vmatprep.subr.bf16.mxu0 %v485
    %526 = vmatpush1.bf16.msra.mxu0 %v484
    %527 = vmatprep.subr.bf16.mxu0 0
    %528 = vmatpush1.bf16.msra.mxu0 0
    %529 = vmatprep.subr.bf16.mxu0 0
    %530 = vmatpush1.bf16.msra.mxu0 0
    %531 = vmatprep.subr.bf16.mxu0 0
    %532 = vmatpush1.bf16.msra.mxu0 0
    %533 = vmatprep.subr.bf16.mxu0 0
    %534 = vmatpush1.bf16.msra.mxu0 0
    %535 = vmatprep.subr.bf16.mxu0 0
    %536 = vmatpush1.bf16.msra.mxu0 0
    %537 = vmatprep.subr.bf16.mxu0 0
    %538 = vmatpush1.bf16.msra.mxu0 0
    %539 = vmatprep.subr.bf16.mxu0 0
    %540 = vmatpush1.bf16.msra.mxu0 0
    %541 = vmatprep.subr.bf16.mxu0 0
    %542 = vmatpush1.bf16.msra.mxu0 0
    %543 = vmatprep.mubr.bf16.mxu0 0
    %544 = vmatmul.mubr.bf16.gmra.mrb[0].mxu0 %v365
    %v545 = vpop.f32.mrb[0].mxu0
    %v546 = vadd.f32 %v371, %v545
    %v547 = vpop.f32.mrb[0].mxu0
    %v548 = vadd.f32 %v375, %v547
    %v549 = vpop.f32.mrb[0].mxu0
    %v550 = vadd.f32 %v371, %v549
    %v551 = vpop.f32.mrb[0].mxu0
    %v552 = vadd.f32 %v375, %v551
    %553 = vdwg.mxu0
    %554 = vmatprep.subr.bf16.mxu0 0
    %555 = vmatpush1.bf16.msra.mxu0 %v465
    %556 = vmatprep.subr.bf16.mxu0 0
    %557 = vmatpush1.bf16.msra.mxu0 %v468
    %558 = vmatprep.subr.bf16.mxu0 0
    %559 = vmatpush1.bf16.msra.mxu0 %v471
    %560 = vmatprep.subr.bf16.mxu0 0
    %561 = vmatpush1.bf16.msra.mxu0 %v474
    %562 = vmatprep.subr.bf16.mxu0 0
    %563 = vmatpush1.bf16.msra.mxu0 %v477
    %564 = vmatprep.subr.bf16.mxu0 0
    %565 = vmatpush1.bf16.msra.mxu0 %v480
    %566 = vmatprep.subr.bf16.mxu0 0
    %567 = vmatpush1.bf16.msra.mxu0 %v483
    %568 = vmatprep.subr.bf16.mxu0 0
    %569 = vmatpush1.bf16.msra.mxu0 %v486
    %570 = vmatprep.subr.bf16.mxu0 0
    %571 = vmatpush1.bf16.msra.mxu0 0
    %572 = vmatprep.subr.bf16.mxu0 0
    %573 = vmatpush1.bf16.msra.mxu0 0
    %574 = vmatprep.subr.bf16.mxu0 0
    %575 = vmatpush1.bf16.msra.mxu0 0
    %576 = vmatprep.subr.bf16.mxu0 0
    %577 = vmatpush1.bf16.msra.mxu0 0
    %578 = vmatprep.subr.bf16.mxu0 0
    %579 = vmatpush1.bf16.msra.mxu0 0
    %580 = vmatprep.subr.bf16.mxu0 0
    %581 = vmatpush1.bf16.msra.mxu0 0
    %582 = vmatprep.subr.bf16.mxu0 0
    %583 = vmatpush1.bf16.msra.mxu0 0
    %584 = vmatprep.subr.bf16.mxu0 0
    %585 = vmatpush1.bf16.msra.mxu0 0
    %586 = vmatprep.mubr.bf16.mxu0 0
    %587 = vmatmul.mubr.bf16.gmra.mrb[0].mxu0 %v365
    %v588 = vpop.f32.mrb[0].mxu0
    %v589 = vadd.f32 %v379, %v588
    %v590 = vpop.f32.mrb[0].mxu0
    %v591 = vpop.f32.mrb[0].mxu0
    %v592 = vadd.f32 %v379, %v591
    %v593 = vpop.f32.mrb[0].mxu0
    %594 = vdwg.mxu0
    %v595 = vmul.f32 %v546, 0.25
    %v596 = vmul.f32 %v550, 0.25
    %v597 = vmul.f32 %v548, %v167
    %v598 = vmul.f32 %v548, %v168
    %v599 = vmul.f32 %v548, %v169
    %v600 = vmul.f32 %v548, %v170
    %v601 = vmul.f32 %v548, %v171
    %v602 = vmul.f32 %v548, %v172
    %v603 = vmul.f32 %v548, %v173
    %v604 = vmul.f32 %v548, %v174
    %v605 = vmul.f32 %v589, %v167
    %v606 = vmul.f32 %v589, %v168
    %v607 = vmul.f32 %v589, %v169
    %v608 = vmul.f32 %v589, %v170
    %v609 = vmul.f32 %v589, %v171
    %v610 = vmul.f32 %v589, %v172
    %v611 = vmul.f32 %v589, %v173
    %v612 = vmul.f32 %v589, %v174
    %v613 = vpack.c.bf16 %v595, %v595
    %v614 = vpack.c.bf16 %v598, %v597
    %v615 = vpack.c.bf16 %v600, %v599
    %v616 = vpack.c.bf16 %v602, %v601
    %v617 = vpack.c.bf16 %v604, %v603
    %618 = vmatprep.subr.bf16.mxu0 0
    %619 = vmatpush1.bf16.xpose.msra.mxu0 %v614
    %620 = vmatprep.subr.bf16.mxu0 0
    %621 = vmatpush1.bf16.xpose.msra.mxu0 %v615
    %622 = vmatprep.subr.bf16.mxu0 0
    %623 = vmatpush1.bf16.xpose.msra.mxu0 %v616
    %624 = vmatprep.subr.bf16.mxu0 0
    %625 = vmatpush1.bf16.xpose.msra.mxu0 %v617
    %626 = vmatprep.subr.bf16.mxu0 0
    %627 = vmatpush1.bf16.xpose.msra.mxu0 0
    %628 = vmatprep.subr.bf16.mxu0 0
    %629 = vmatpush1.bf16.xpose.msra.mxu0 0
    %630 = vmatprep.subr.bf16.mxu0 0
    %631 = vmatpush1.bf16.xpose.msra.mxu0 0
    %632 = vmatprep.subr.bf16.mxu0 0
    %633 = vmatpush1.bf16.xpose.msra.mxu0 0
    %634 = vmatprep.subr.bf16.mxu0 0
    %635 = vmatpush1.bf16.xpose.msra.mxu0 0
    %636 = vmatprep.subr.bf16.mxu0 0
    %637 = vmatpush1.bf16.xpose.msra.mxu0 0
    %638 = vmatprep.subr.bf16.mxu0 0
    %639 = vmatpush1.bf16.xpose.msra.mxu0 0
    %640 = vmatprep.subr.bf16.mxu0 0
    %641 = vmatpush1.bf16.xpose.msra.mxu0 0
    %642 = vmatprep.subr.bf16.mxu0 0
    %643 = vmatpush1.bf16.xpose.msra.mxu0 0
    %644 = vmatprep.subr.bf16.mxu0 0
    %645 = vmatpush1.bf16.xpose.msra.mxu0 0
    %646 = vmatprep.subr.bf16.mxu0 0
    %647 = vmatpush1.bf16.xpose.msra.mxu0 0
    %648 = vmatprep.subr.bf16.mxu0 0
    %649 = vmatpush1.bf16.xpose.msra.mxu0 0
    %650 = vmatprep.mubr.bf16.mxu0 0
    %651 = vmatmul.mubr.bf16.gmra.mrb[0].mxu0 %v613
    %v652 = vpop.f32.mrb[0].mxu0
    %v653 = vadd.f32 0.0, %v652
    %v654 = vpop.f32.mrb[0].mxu0
    %v655 = vpop.f32.mrb[0].mxu0
    %v656 = vpop.f32.mrb[0].mxu0
    %657 = vdwg.mxu0
    %vm658 = vcmask 523264
    %v659 = vsel %vm658, %v653, -inf
    %660 = vmax.xlane.f32.xlu0 %v659
    %v661 = vpop.xlane.xlu0 %660
    %v662 = vsub.f32 %v653, %v661
    %v663 = vmul.f32 %v662, 1.442695
    %v664 = vpow.pop %v663
    %v665 = vpack.c.bf16 %v664, %v664
    %v667 = vsel %vm658, %v665, 0
    %669 = vmatprep.subr.bf16.mxu0 0
    %670 = vmatpush1.bf16.msra.mxu0 %v183
    %671 = vmatprep.subr.bf16.mxu0 0
    %672 = vmatpush1.bf16.msra.mxu0 %v184
    %673 = vmatprep.subr.bf16.mxu0 0
    %674 = vmatpush1.bf16.msra.mxu0 %v185
    %675 = vmatprep.subr.bf16.mxu0 0
    %676 = vmatpush1.bf16.msra.mxu0 %v186
    %677 = vmatprep.subr.bf16.mxu0 0
    %678 = vmatpush1.bf16.msra.mxu0 0
    %679 = vmatprep.subr.bf16.mxu0 0
    %680 = vmatpush1.bf16.msra.mxu0 0
    %681 = vmatprep.subr.bf16.mxu0 0
    %682 = vmatpush1.bf16.msra.mxu0 0
    %683 = vmatprep.subr.bf16.mxu0 0
    %684 = vmatpush1.bf16.msra.mxu0 0
    %685 = vmatprep.subr.bf16.mxu0 0
    %686 = vmatpush1.bf16.msra.mxu0 0
    %687 = vmatprep.subr.bf16.mxu0 0
    %688 = vmatpush1.bf16.msra.mxu0 0
    %689 = vmatprep.subr.bf16.mxu0 0
    %690 = vmatpush1.bf16.msra.mxu0 0
    %691 = vmatprep.subr.bf16.mxu0 0
    %692 = vmatpush1.bf16.msra.mxu0 0
    %693 = vmatprep.subr.bf16.mxu0 0
    %694 = vmatpush1.bf16.msra.mxu0 0
    %695 = vmatprep.subr.bf16.mxu0 0
    %696 = vmatpush1.bf16.msra.mxu0 0
    %697 = vmatprep.subr.bf16.mxu0 0
    %698 = vmatpush1.bf16.msra.mxu0 0
    %699 = vmatprep.subr.bf16.mxu0 0
    %700 = vmatpush1.bf16.msra.mxu0 0
    %701 = vmatprep.mubr.bf16.mxu0 0
    %702 = vmatmul.mubr.bf16.gmra.mrb[0].mxu0 %v667
    %v703 = vpop.f32.mrb[0].mxu0
    %v704 = vadd.f32 0.0, %v703
    %v705 = vpop.f32.mrb[0].mxu0
    %v706 = vpop.f32.mrb[0].mxu0
    %v707 = vpop.f32.mrb[0].mxu0
    %708 = vdwg.mxu0
    %v709 = vmax.f32 %v704, 1e-20
    %v710 = vrcp.pop %v709
    %v711 = vmul.f32 %v664, %v710
    %v712 = vpack.c.bf16 %v711, %v711
    %v713 = vpack.c.bf16 %v606, %v605
    %v714 = vpack.c.bf16 %v608, %v607
    %v715 = vpack.c.bf16 %v610, %v609
    %v716 = vpack.c.bf16 %v612, %v611
    %v718 = vsel %vm658, %v712, 0
    %720 = vmatprep.subr.bf16.mxu0 0
    %721 = vmatpush1.bf16.msra.mxu0 %v713
    %722 = vmatprep.subr.bf16.mxu0 0
    %723 = vmatpush1.bf16.msra.mxu0 %v714
    %724 = vmatprep.subr.bf16.mxu0 0
    %725 = vmatpush1.bf16.msra.mxu0 %v715
    %726 = vmatprep.subr.bf16.mxu0 0
    %727 = vmatpush1.bf16.msra.mxu0 %v716
    %728 = vmatprep.subr.bf16.mxu0 0
    %729 = vmatpush1.bf16.msra.mxu0 0
    %730 = vmatprep.subr.bf16.mxu0 0
    %731 = vmatpush1.bf16.msra.mxu0 0
    %732 = vmatprep.subr.bf16.mxu0 0
    %733 = vmatpush1.bf16.msra.mxu0 0
    %734 = vmatprep.subr.bf16.mxu0 0
    %735 = vmatpush1.bf16.msra.mxu0 0
    %736 = vmatprep.subr.bf16.mxu0 0
    %737 = vmatpush1.bf16.msra.mxu0 0
    %738 = vmatprep.subr.bf16.mxu0 0
    %739 = vmatpush1.bf16.msra.mxu0 0
    %740 = vmatprep.subr.bf16.mxu0 0
    %741 = vmatpush1.bf16.msra.mxu0 0
    %742 = vmatprep.subr.bf16.mxu0 0
    %743 = vmatpush1.bf16.msra.mxu0 0
    %744 = vmatprep.subr.bf16.mxu0 0
    %745 = vmatpush1.bf16.msra.mxu0 0
    %746 = vmatprep.subr.bf16.mxu0 0
    %747 = vmatpush1.bf16.msra.mxu0 0
    %748 = vmatprep.subr.bf16.mxu0 0
    %749 = vmatpush1.bf16.msra.mxu0 0
    %750 = vmatprep.subr.bf16.mxu0 0
    %751 = vmatpush1.bf16.msra.mxu0 0
    %752 = vmatprep.mubr.bf16.mxu0 0
    %753 = vmatmul.mubr.bf16.gmra.mrb[0].mxu0 %v718
    %v754 = vpop.f32.mrb[0].mxu0
    %v755 = vadd.f32 0.0, %v754
    %v756 = vpop.f32.mrb[0].mxu0
    %v757 = vpop.f32.mrb[0].mxu0
    %v758 = vpop.f32.mrb[0].mxu0
    %759 = vdwg.mxu0
    %v760 = vmul.f32 %v552, %v167
    %v761 = vmul.f32 %v552, %v168
    %v762 = vmul.f32 %v552, %v169
    %v763 = vmul.f32 %v552, %v170
    %v764 = vmul.f32 %v552, %v171
    %v765 = vmul.f32 %v552, %v172
    %v766 = vmul.f32 %v552, %v173
    %v767 = vmul.f32 %v552, %v174
    %v768 = vmul.f32 %v592, %v167
    %v769 = vmul.f32 %v592, %v168
    %v770 = vmul.f32 %v592, %v169
    %v771 = vmul.f32 %v592, %v170
    %v772 = vmul.f32 %v592, %v171
    %v773 = vmul.f32 %v592, %v172
    %v774 = vmul.f32 %v592, %v173
    %v775 = vmul.f32 %v592, %v174
    %v776 = vpack.c.bf16 %v596, %v596
    %v777 = vpack.c.bf16 %v761, %v760
    %v778 = vpack.c.bf16 %v763, %v762
    %v779 = vpack.c.bf16 %v765, %v764
    %v780 = vpack.c.bf16 %v767, %v766
    %781 = vmatprep.subr.bf16.mxu0 0
    %782 = vmatpush1.bf16.xpose.msra.mxu0 %v777
    %783 = vmatprep.subr.bf16.mxu0 0
    %784 = vmatpush1.bf16.xpose.msra.mxu0 %v778
    %785 = vmatprep.subr.bf16.mxu0 0
    %786 = vmatpush1.bf16.xpose.msra.mxu0 %v779
    %787 = vmatprep.subr.bf16.mxu0 0
    %788 = vmatpush1.bf16.xpose.msra.mxu0 %v780
    %789 = vmatprep.subr.bf16.mxu0 0
    %790 = vmatpush1.bf16.xpose.msra.mxu0 0
    %791 = vmatprep.subr.bf16.mxu0 0
    %792 = vmatpush1.bf16.xpose.msra.mxu0 0
    %793 = vmatprep.subr.bf16.mxu0 0
    %794 = vmatpush1.bf16.xpose.msra.mxu0 0
    %795 = vmatprep.subr.bf16.mxu0 0
    %796 = vmatpush1.bf16.xpose.msra.mxu0 0
    %797 = vmatprep.subr.bf16.mxu0 0
    %798 = vmatpush1.bf16.xpose.msra.mxu0 0
    %799 = vmatprep.subr.bf16.mxu0 0
    %800 = vmatpush1.bf16.xpose.msra.mxu0 0
    %801 = vmatprep.subr.bf16.mxu0 0
    %802 = vmatpush1.bf16.xpose.msra.mxu0 0
    %803 = vmatprep.subr.bf16.mxu0 0
    %804 = vmatpush1.bf16.xpose.msra.mxu0 0
    %805 = vmatprep.subr.bf16.mxu0 0
    %806 = vmatpush1.bf16.xpose.msra.mxu0 0
    %807 = vmatprep.subr.bf16.mxu0 0
    %808 = vmatpush1.bf16.xpose.msra.mxu0 0
    %809 = vmatprep.subr.bf16.mxu0 0
    %810 = vmatpush1.bf16.xpose.msra.mxu0 0
    %811 = vmatprep.subr.bf16.mxu0 0
    %812 = vmatpush1.bf16.xpose.msra.mxu0 0
    %813 = vmatprep.mubr.bf16.mxu0 0
    %814 = vmatmul.mubr.bf16.gmra.mrb[0].mxu0 %v776
    %v815 = vpop.f32.mrb[0].mxu0
    %v816 = vadd.f32 0.0, %v815
    %v817 = vpop.f32.mrb[0].mxu0
    %v818 = vpop.f32.mrb[0].mxu0
    %v819 = vpop.f32.mrb[0].mxu0
    %820 = vdwg.mxu0
    %v821 = vsel %vm658, %v816, -inf
    %822 = vmax.xlane.f32.xlu0 %v821
    %v823 = vpop.xlane.xlu0 %822
    %v824 = vsub.f32 %v816, %v823
    %v825 = vmul.f32 %v824, 1.442695
    %v826 = vpow.pop %v825
    %v827 = vpack.c.bf16 %v826, %v826
    %v829 = vsel %vm658, %v827, 0
    %831 = vmatprep.subr.bf16.mxu0 0
    %832 = vmatpush1.bf16.msra.mxu0 %v183
    %833 = vmatprep.subr.bf16.mxu0 0
    %834 = vmatpush1.bf16.msra.mxu0 %v184
    %835 = vmatprep.subr.bf16.mxu0 0
    %836 = vmatpush1.bf16.msra.mxu0 %v185
    %837 = vmatprep.subr.bf16.mxu0 0
    %838 = vmatpush1.bf16.msra.mxu0 %v186
    %839 = vmatprep.subr.bf16.mxu0 0
    %840 = vmatpush1.bf16.msra.mxu0 0
    %841 = vmatprep.subr.bf16.mxu0 0
    %842 = vmatpush1.bf16.msra.mxu0 0
    %843 = vmatprep.subr.bf16.mxu0 0
    %844 = vmatpush1.bf16.msra.mxu0 0
    %845 = vmatprep.subr.bf16.mxu0 0
    %846 = vmatpush1.bf16.msra.mxu0 0
    %847 = vmatprep.subr.bf16.mxu0 0
    %848 = vmatpush1.bf16.msra.mxu0 0
    %849 = vmatprep.subr.bf16.mxu0 0
    %850 = vmatpush1.bf16.msra.mxu0 0
    %851 = vmatprep.subr.bf16.mxu0 0
    %852 = vmatpush1.bf16.msra.mxu0 0
    %853 = vmatprep.subr.bf16.mxu0 0
    %854 = vmatpush1.bf16.msra.mxu0 0
    %855 = vmatprep.subr.bf16.mxu0 0
    %856 = vmatpush1.bf16.msra.mxu0 0
    %857 = vmatprep.subr.bf16.mxu0 0
    %858 = vmatpush1.bf16.msra.mxu0 0
    %859 = vmatprep.subr.bf16.mxu0 0
    %860 = vmatpush1.bf16.msra.mxu0 0
    %861 = vmatprep.subr.bf16.mxu0 0
    %862 = vmatpush1.bf16.msra.mxu0 0
    %863 = vmatprep.mubr.bf16.mxu0 0
    %864 = vmatmul.mubr.bf16.gmra.mrb[0].mxu0 %v829
    %v865 = vpop.f32.mrb[0].mxu0
    %v866 = vadd.f32 0.0, %v865
    %v867 = vpop.f32.mrb[0].mxu0
    %v868 = vpop.f32.mrb[0].mxu0
    %v869 = vpop.f32.mrb[0].mxu0
    %870 = vdwg.mxu0
    %v871 = vmax.f32 %v866, 1e-20
    %v872 = vrcp.pop %v871
    %v873 = vmul.f32 %v826, %v872
    %v874 = vpack.c.bf16 %v873, %v873
    %v875 = vpack.c.bf16 %v769, %v768
    %v876 = vpack.c.bf16 %v771, %v770
    %v877 = vpack.c.bf16 %v773, %v772
    %v878 = vpack.c.bf16 %v775, %v774
    %v880 = vsel %vm658, %v874, 0
    %882 = vmatprep.subr.bf16.mxu0 0
    %883 = vmatpush1.bf16.msra.mxu0 %v875
    %884 = vmatprep.subr.bf16.mxu0 0
    %885 = vmatpush1.bf16.msra.mxu0 %v876
    %886 = vmatprep.subr.bf16.mxu0 0
    %887 = vmatpush1.bf16.msra.mxu0 %v877
    %888 = vmatprep.subr.bf16.mxu0 0
    %889 = vmatpush1.bf16.msra.mxu0 %v878
    %890 = vmatprep.subr.bf16.mxu0 0
    %891 = vmatpush1.bf16.msra.mxu0 0
    %892 = vmatprep.subr.bf16.mxu0 0
    %893 = vmatpush1.bf16.msra.mxu0 0
    %894 = vmatprep.subr.bf16.mxu0 0
    %895 = vmatpush1.bf16.msra.mxu0 0
    %896 = vmatprep.subr.bf16.mxu0 0
    %897 = vmatpush1.bf16.msra.mxu0 0
    %898 = vmatprep.subr.bf16.mxu0 0
    %899 = vmatpush1.bf16.msra.mxu0 0
    %900 = vmatprep.subr.bf16.mxu0 0
    %901 = vmatpush1.bf16.msra.mxu0 0
    %902 = vmatprep.subr.bf16.mxu0 0
    %903 = vmatpush1.bf16.msra.mxu0 0
    %904 = vmatprep.subr.bf16.mxu0 0
    %905 = vmatpush1.bf16.msra.mxu0 0
    %906 = vmatprep.subr.bf16.mxu0 0
    %907 = vmatpush1.bf16.msra.mxu0 0
    %908 = vmatprep.subr.bf16.mxu0 0
    %909 = vmatpush1.bf16.msra.mxu0 0
    %910 = vmatprep.subr.bf16.mxu0 0
    %911 = vmatpush1.bf16.msra.mxu0 0
    %912 = vmatprep.subr.bf16.mxu0 0
    %913 = vmatpush1.bf16.msra.mxu0 0
    %914 = vmatprep.mubr.bf16.mxu0 0
    %915 = vmatmul.mubr.bf16.gmra.mrb[0].mxu0 %v880
    %v916 = vpop.f32.mrb[0].mxu0
    %v917 = vadd.f32 0.0, %v916
    %v918 = vpop.f32.mrb[0].mxu0
    %v919 = vpop.f32.mrb[0].mxu0
    %v920 = vpop.f32.mrb[0].mxu0
    %921 = vdwg.mxu0
    %v922 = vld [vmem:[#allocation10] sm:$0xf]
    %v923 = vld [vmem:[#allocation10 + $0x4] sm:$0xf]
    %v924 = vld [vmem:[#allocation10 + $0x8] sm:$0xf]
    %v925 = vld [vmem:[#allocation10 + $0xc] sm:$0xf]
    %v926 = vld [vmem:[#allocation10 + $0x10] sm:$0xf]
    %v927 = vld [vmem:[#allocation10 + $0x14] sm:$0xf]
    %v928 = vld [vmem:[#allocation10 + $0x18] sm:$0xf]
    %v929 = vld [vmem:[#allocation10 + $0x1c] sm:$0xf]
    %v930 = vld [vmem:[#allocation10 + $0x20] sm:$0xf]
    %v931 = vld [vmem:[#allocation10 + $0x24] sm:$0xf]
    %v932 = vld [vmem:[#allocation10 + $0x28] sm:$0xf]
    %v933 = vld [vmem:[#allocation10 + $0x2c] sm:$0xf]
    %v934 = vld [vmem:[#allocation10 + $0x30] sm:$0xf]
    %v935 = vld [vmem:[#allocation10 + $0x34] sm:$0xf]
    %v936 = vld [vmem:[#allocation10 + $0x38] sm:$0xf]
    %v937 = vld [vmem:[#allocation10 + $0x3c] sm:$0xf]
    %v938 = vpack.c.bf16 %v917, %v755
    %v939 = vld [vmem:[%s11] sm:$0x1]
    %v941 = vlaneseq
    %v942 = vshrl.u32 %v941, 7
    %v943 = vsub.s32 0, %v942
    %v944 = vrot.slane %v939, %v943
    %v962 = vunpack.c.l.b16 %v922
    %v963 = vunpack.c.l.b16 %v923
    %v964 = vunpack.c.l.b16 %v924
    %v965 = vunpack.c.l.b16 %v925
    %v966 = vunpack.c.l.b16 %v926
    %v967 = vunpack.c.l.b16 %v927
    %v968 = vunpack.c.l.b16 %v928
    %v969 = vunpack.c.l.b16 %v929
    %v970 = vunpack.c.l.b16 %v930
    %v971 = vunpack.c.l.b16 %v931
    %v972 = vunpack.c.l.b16 %v932
    %v973 = vunpack.c.l.b16 %v933
    %v974 = vunpack.c.l.b16 %v934
    %v975 = vunpack.c.l.b16 %v935
    %v976 = vunpack.c.l.b16 %v936
    %v977 = vunpack.c.l.b16 %v937
    %v978 = vpack.c.b16 %v963, %v962
    %v979 = vpack.c.b16 %v965, %v964
    %v980 = vpack.c.b16 %v967, %v966
    %v981 = vpack.c.b16 %v969, %v968
    %v982 = vpack.c.b16 %v971, %v970
    %v983 = vpack.c.b16 %v973, %v972
    %v984 = vpack.c.b16 %v975, %v974
    %v985 = vpack.c.b16 %v977, %v976
    %994 = vmatprep.subr.bf16.mxu0 0
    %995 = vmatpush1.bf16.msra.mxu0 %v978
    %996 = vmatprep.subr.bf16.mxu0 0
    %997 = vmatpush1.bf16.msra.mxu0 %v979
    %998 = vmatprep.subr.bf16.mxu0 0
    %999 = vmatpush1.bf16.msra.mxu0 %v980
    %1000 = vmatprep.subr.bf16.mxu0 0
    %1001 = vmatpush1.bf16.msra.mxu0 %v981
    %1002 = vmatprep.subr.bf16.mxu0 0
    %1003 = vmatpush1.bf16.msra.mxu0 %v982
    %1004 = vmatprep.subr.bf16.mxu0 0
    %1005 = vmatpush1.bf16.msra.mxu0 %v983
    %1006 = vmatprep.subr.bf16.mxu0 0
    %1007 = vmatpush1.bf16.msra.mxu0 %v984
    %1008 = vmatprep.subr.bf16.mxu0 0
    %1009 = vmatpush1.bf16.msra.mxu0 %v985
    %1010 = vmatprep.subr.bf16.mxu0 0
    %1011 = vmatpush1.bf16.msra.mxu0 0
    %1012 = vmatprep.subr.bf16.mxu0 0
    %1013 = vmatpush1.bf16.msra.mxu0 0
    %1014 = vmatprep.subr.bf16.mxu0 0
    %1015 = vmatpush1.bf16.msra.mxu0 0
    %1016 = vmatprep.subr.bf16.mxu0 0
    %1017 = vmatpush1.bf16.msra.mxu0 0
    %1018 = vmatprep.subr.bf16.mxu0 0
    %1019 = vmatpush1.bf16.msra.mxu0 0
    %1020 = vmatprep.subr.bf16.mxu0 0
    %1021 = vmatpush1.bf16.msra.mxu0 0
    %1022 = vmatprep.subr.bf16.mxu0 0
    %1023 = vmatpush1.bf16.msra.mxu0 0
    %1024 = vmatprep.subr.bf16.mxu0 0
    %1025 = vmatpush1.bf16.msra.mxu0 0
    %1026 = vmatprep.mubr.bf16.mxu0 0
    %1027 = vmatmul.mubr.bf16.gmra.mrb[0].mxu0 %v938
    %v1028 = vpop.f32.mrb[0].mxu0
    %v1029 = vadd.f32 %v944, %v1028
    %v1030 = vpop.f32.mrb[0].mxu0
    %v1031 = vpop.f32.mrb[0].mxu0
    %v1032 = vadd.f32 %v944, %v1031
    %v1033 = vpop.f32.mrb[0].mxu0
    %1034 = vdwg.mxu0
    %v1035 = vadd.f32 %v331, %v1029
    %v1036 = vadd.f32 %v332, %v1032
    %v1037 = vld [vmem:[%s12] sm:$0x1]
    %v1038 = vld [vmem:[%s13] sm:$0x1]
    %1039 = vadd.xlane.f32.xlu0 %v1035
    %v1040 = vpop.xlane.xlu0 %1039
    %1041 = vadd.xlane.f32.xlu0 %v1036
    %v1042 = vpop.xlane.xlu0 %1041
    %v1043 = vrcp.pop 128.0
    %v1044 = vmul.f32 %v1040, %v1043
    %v1045 = vmul.f32 %v1042, %v1043
    %v1046 = vsub.f32 %v1035, %v1044
    %v1047 = vsub.f32 %v1036, %v1045
    %v1048 = vmul.f32 %v1046, %v1046
    %v1049 = vmul.f32 %v1047, %v1047
    %1050 = vadd.xlane.f32.xlu0 %v1048
    %v1051 = vpop.xlane.xlu0 %1050
    %1052 = vadd.xlane.f32.xlu0 %v1049
    %v1053 = vpop.xlane.xlu0 %1052
    %v1054 = vmul.f32 %v1051, %v1043
    %v1055 = vmul.f32 %v1053, %v1043
    %v1056 = vadd.f32 %v1054, 1e-05
    %v1057 = vadd.f32 %v1055, 1e-05
    %v1058 = vrsqrt.pop %v1056
    %v1059 = vrsqrt.pop %v1057
    %v1060 = vmul.f32 %v1046, %v1058
    %v1061 = vmul.f32 %v1047, %v1059
    %v1063 = vlaneseq
    %v1064 = vshrl.u32 %v1063, 7
    %v1065 = vsub.s32 0, %v1064
    %v1066 = vrot.slane %v1037, %v1065
    %v1068 = vmul.f32 %v1060, %v1066
    %v1069 = vmul.f32 %v1061, %v1066
    %v1071 = vlaneseq
    %v1072 = vshrl.u32 %v1071, 7
    %v1073 = vsub.s32 0, %v1072
    %v1074 = vrot.slane %v1038, %v1073
    %v1076 = vadd.f32 %v1068, %v1074
    %v1077 = vadd.f32 %v1069, %v1074
    %v1078 = vld [vmem:[#allocation11] sm:$0xf]
    %v1079 = vld [vmem:[#allocation11 + $0x4] sm:$0xf]
    %v1080 = vld [vmem:[#allocation11 + $0x8] sm:$0xf]
    %v1081 = vld [vmem:[#allocation11 + $0xc] sm:$0xf]
    %v1082 = vld [vmem:[#allocation11 + $0x10] sm:$0xf]
    %v1083 = vld [vmem:[#allocation11 + $0x14] sm:$0xf]
    %v1084 = vld [vmem:[#allocation11 + $0x18] sm:$0xf]
    %v1085 = vld [vmem:[#allocation11 + $0x1c] sm:$0xf]
    %v1086 = vld [vmem:[#allocation11 + $0x20] sm:$0xf]
    %v1087 = vld [vmem:[#allocation11 + $0x24] sm:$0xf]
    %v1088 = vld [vmem:[#allocation11 + $0x28] sm:$0xf]
    %v1089 = vld [vmem:[#allocation11 + $0x2c] sm:$0xf]
    %v1090 = vld [vmem:[#allocation11 + $0x30] sm:$0xf]
    %v1091 = vld [vmem:[#allocation11 + $0x34] sm:$0xf]
    %v1092 = vld [vmem:[#allocation11 + $0x38] sm:$0xf]
    %v1093 = vld [vmem:[#allocation11 + $0x3c] sm:$0xf]
    %v1094 = vpack.c.bf16 %v1077, %v1076
    %v1095 = vld [vmem:[%s15] sm:$0x1]
    %v1097 = vlaneseq
    %v1098 = vshrl.u32 %v1097, 7
    %v1099 = vsub.s32 0, %v1098
    %v1100 = vrot.slane %v1095, %v1099
    %v1118 = vunpack.c.l.b16 %v1078
    %v1119 = vunpack.c.l.b16 %v1079
    %v1120 = vunpack.c.l.b16 %v1080
    %v1121 = vunpack.c.l.b16 %v1081
    %v1122 = vunpack.c.l.b16 %v1082
    %v1123 = vunpack.c.l.b16 %v1083
    %v1124 = vunpack.c.l.b16 %v1084
    %v1125 = vunpack.c.l.b16 %v1085
    %v1126 = vunpack.c.l.b16 %v1086
    %v1127 = vunpack.c.l.b16 %v1087
    %v1128 = vunpack.c.l.b16 %v1088
    %v1129 = vunpack.c.l.b16 %v1089
    %v1130 = vunpack.c.l.b16 %v1090
    %v1131 = vunpack.c.l.b16 %v1091
    %v1132 = vunpack.c.l.b16 %v1092
    %v1133 = vunpack.c.l.b16 %v1093
    %v1134 = vpack.c.b16 %v1119, %v1118
    %v1135 = vpack.c.b16 %v1121, %v1120
    %v1136 = vpack.c.b16 %v1123, %v1122
    %v1137 = vpack.c.b16 %v1125, %v1124
    %v1138 = vpack.c.b16 %v1127, %v1126
    %v1139 = vpack.c.b16 %v1129, %v1128
    %v1140 = vpack.c.b16 %v1131, %v1130
    %v1141 = vpack.c.b16 %v1133, %v1132
    %1150 = vmatprep.subr.bf16.mxu0 0
    %1151 = vmatpush1.bf16.msra.mxu0 %v1134
    %1152 = vmatprep.subr.bf16.mxu0 0
    %1153 = vmatpush1.bf16.msra.mxu0 %v1135
    %1154 = vmatprep.subr.bf16.mxu0 0
    %1155 = vmatpush1.bf16.msra.mxu0 %v1136
    %1156 = vmatprep.subr.bf16.mxu0 0
    %1157 = vmatpush1.bf16.msra.mxu0 %v1137
    %1158 = vmatprep.subr.bf16.mxu0 0
    %1159 = vmatpush1.bf16.msra.mxu0 %v1138
    %1160 = vmatprep.subr.bf16.mxu0 0
    %1161 = vmatpush1.bf16.msra.mxu0 %v1139
    %1162 = vmatprep.subr.bf16.mxu0 0
    %1163 = vmatpush1.bf16.msra.mxu0 %v1140
    %1164 = vmatprep.subr.bf16.mxu0 0
    %1165 = vmatpush1.bf16.msra.mxu0 %v1141
    %1166 = vmatprep.subr.bf16.mxu0 0
    %1167 = vmatpush1.bf16.msra.mxu0 0
    %1168 = vmatprep.subr.bf16.mxu0 0
    %1169 = vmatpush1.bf16.msra.mxu0 0
    %1170 = vmatprep.subr.bf16.mxu0 0
    %1171 = vmatpush1.bf16.msra.mxu0 0
    %1172 = vmatprep.subr.bf16.mxu0 0
    %1173 = vmatpush1.bf16.msra.mxu0 0
    %1174 = vmatprep.subr.bf16.mxu0 0
    %1175 = vmatpush1.bf16.msra.mxu0 0
    %1176 = vmatprep.subr.bf16.mxu0 0
    %1177 = vmatpush1.bf16.msra.mxu0 0
    %1178 = vmatprep.subr.bf16.mxu0 0
    %1179 = vmatpush1.bf16.msra.mxu0 0
    %1180 = vmatprep.subr.bf16.mxu0 0
    %1181 = vmatpush1.bf16.msra.mxu0 0
    %1182 = vmatprep.mubr.bf16.mxu0 0
    %1183 = vmatmul.mubr.bf16.gmra.mrb[0].mxu0 %v1094
    %v1184 = vpop.f32.mrb[0].mxu0
    %v1185 = vadd.f32 %v1100, %v1184
    %v1186 = vpop.f32.mrb[0].mxu0
    %v1187 = vpop.f32.mrb[0].mxu0
    %v1188 = vadd.f32 %v1100, %v1187
    %v1189 = vpop.f32.mrb[0].mxu0
    %1190 = vdwg.mxu0
    %v1191 = vmax.f32 %v1185, 0.0
    %v1192 = vmax.f32 %v1188, 0.0
    %v1193 = vld [vmem:[#allocation13] sm:$0xf]
    %v1194 = vld [vmem:[#allocation13 + $0x4] sm:$0xf]
    %v1195 = vld [vmem:[#allocation13 + $0x8] sm:$0xf]
    %v1196 = vld [vmem:[#allocation13 + $0xc] sm:$0xf]
    %v1197 = vld [vmem:[#allocation13 + $0x10] sm:$0xf]
    %v1198 = vld [vmem:[#allocation13 + $0x14] sm:$0xf]
    %v1199 = vld [vmem:[#allocation13 + $0x18] sm:$0xf]
    %v1200 = vld [vmem:[#allocation13 + $0x1c] sm:$0xf]
    %v1201 = vld [vmem:[#allocation13 + $0x20] sm:$0xf]
    %v1202 = vld [vmem:[#allocation13 + $0x24] sm:$0xf]
    %v1203 = vld [vmem:[#allocation13 + $0x28] sm:$0xf]
    %v1204 = vld [vmem:[#allocation13 + $0x2c] sm:$0xf]
    %v1205 = vld [vmem:[#allocation13 + $0x30] sm:$0xf]
    %v1206 = vld [vmem:[#allocation13 + $0x34] sm:$0xf]
    %v1207 = vld [vmem:[#allocation13 + $0x38] sm:$0xf]
    %v1208 = vld [vmem:[#allocation13 + $0x3c] sm:$0xf]
    %v1209 = vpack.c.bf16 %v1192, %v1191
    %v1210 = vld [vmem:[%s17] sm:$0x1]
    %v1212 = vlaneseq
    %v1213 = vshrl.u32 %v1212, 7
    %v1214 = vsub.s32 0, %v1213
    %v1215 = vrot.slane %v1210, %v1214
    %v1233 = vunpack.c.l.b16 %v1193
    %v1234 = vunpack.c.l.b16 %v1194
    %v1235 = vunpack.c.l.b16 %v1195
    %v1236 = vunpack.c.l.b16 %v1196
    %v1237 = vunpack.c.l.b16 %v1197
    %v1238 = vunpack.c.l.b16 %v1198
    %v1239 = vunpack.c.l.b16 %v1199
    %v1240 = vunpack.c.l.b16 %v1200
    %v1241 = vunpack.c.l.b16 %v1201
    %v1242 = vunpack.c.l.b16 %v1202
    %v1243 = vunpack.c.l.b16 %v1203
    %v1244 = vunpack.c.l.b16 %v1204
    %v1245 = vunpack.c.l.b16 %v1205
    %v1246 = vunpack.c.l.b16 %v1206
    %v1247 = vunpack.c.l.b16 %v1207
    %v1248 = vunpack.c.l.b16 %v1208
    %v1249 = vpack.c.b16 %v1234, %v1233
    %v1250 = vpack.c.b16 %v1236, %v1235
    %v1251 = vpack.c.b16 %v1238, %v1237
    %v1252 = vpack.c.b16 %v1240, %v1239
    %v1253 = vpack.c.b16 %v1242, %v1241
    %v1254 = vpack.c.b16 %v1244, %v1243
    %v1255 = vpack.c.b16 %v1246, %v1245
    %v1256 = vpack.c.b16 %v1248, %v1247
    %1265 = vmatprep.subr.bf16.mxu0 0
    %1266 = vmatpush1.bf16.msra.mxu0 %v1249
    %1267 = vmatprep.subr.bf16.mxu0 0
    %1268 = vmatpush1.bf16.msra.mxu0 %v1250
    %1269 = vmatprep.subr.bf16.mxu0 0
    %1270 = vmatpush1.bf16.msra.mxu0 %v1251
    %1271 = vmatprep.subr.bf16.mxu0 0
    %1272 = vmatpush1.bf16.msra.mxu0 %v1252
    %1273 = vmatprep.subr.bf16.mxu0 0
    %1274 = vmatpush1.bf16.msra.mxu0 %v1253
    %1275 = vmatprep.subr.bf16.mxu0 0
    %1276 = vmatpush1.bf16.msra.mxu0 %v1254
    %1277 = vmatprep.subr.bf16.mxu0 0
    %1278 = vmatpush1.bf16.msra.mxu0 %v1255
    %1279 = vmatprep.subr.bf16.mxu0 0
    %1280 = vmatpush1.bf16.msra.mxu0 %v1256
    %1281 = vmatprep.subr.bf16.mxu0 0
    %1282 = vmatpush1.bf16.msra.mxu0 0
    %1283 = vmatprep.subr.bf16.mxu0 0
    %1284 = vmatpush1.bf16.msra.mxu0 0
    %1285 = vmatprep.subr.bf16.mxu0 0
    %1286 = vmatpush1.bf16.msra.mxu0 0
    %1287 = vmatprep.subr.bf16.mxu0 0
    %1288 = vmatpush1.bf16.msra.mxu0 0
    %1289 = vmatprep.subr.bf16.mxu0 0
    %1290 = vmatpush1.bf16.msra.mxu0 0
    %1291 = vmatprep.subr.bf16.mxu0 0
    %1292 = vmatpush1.bf16.msra.mxu0 0
    %1293 = vmatprep.subr.bf16.mxu0 0
    %1294 = vmatpush1.bf16.msra.mxu0 0
    %1295 = vmatprep.subr.bf16.mxu0 0
    %1296 = vmatpush1.bf16.msra.mxu0 0
    %1297 = vmatprep.mubr.bf16.mxu0 0
    %1298 = vmatmul.mubr.bf16.gmra.mrb[0].mxu0 %v1209
    %v1299 = vpop.f32.mrb[0].mxu0
    %v1300 = vadd.f32 %v1215, %v1299
    %v1301 = vpop.f32.mrb[0].mxu0
    %v1302 = vpop.f32.mrb[0].mxu0
    %v1303 = vadd.f32 %v1215, %v1302
    %v1304 = vpop.f32.mrb[0].mxu0
    %1305 = vdwg.mxu0
    %v1306 = vadd.f32 %v1076, %v1300
    %v1307 = vadd.f32 %v1077, %v1303
    %v1308 = vld [vmem:[%s18] sm:$0x1]
    %v1309 = vld [vmem:[%s19] sm:$0x1]
    %1310 = vadd.xlane.f32.xlu0 %v1306
    %v1311 = vpop.xlane.xlu0 %1310
    %1312 = vadd.xlane.f32.xlu0 %v1307
    %v1313 = vpop.xlane.xlu0 %1312
    %v1314 = vmul.f32 %v1311, %v1043
    %v1315 = vmul.f32 %v1313, %v1043
    %v1316 = vsub.f32 %v1306, %v1314
    %v1317 = vsub.f32 %v1307, %v1315
    %v1318 = vmul.f32 %v1316, %v1316
    %v1319 = vmul.f32 %v1317, %v1317
    %1320 = vadd.xlane.f32.xlu0 %v1318
    %v1321 = vpop.xlane.xlu0 %1320
    %1322 = vadd.xlane.f32.xlu0 %v1319
    %v1323 = vpop.xlane.xlu0 %1322
    %v1324 = vmul.f32 %v1321, %v1043
    %v1325 = vmul.f32 %v1323, %v1043
    %v1326 = vadd.f32 %v1324, 1e-05
    %v1327 = vadd.f32 %v1325, 1e-05
    %v1328 = vrsqrt.pop %v1326
    %v1329 = vrsqrt.pop %v1327
    %v1330 = vmul.f32 %v1316, %v1328
    %v1331 = vmul.f32 %v1317, %v1329
    %v1333 = vlaneseq
    %v1334 = vshrl.u32 %v1333, 7
    %v1335 = vsub.s32 0, %v1334
    %v1336 = vrot.slane %v1308, %v1335
    %v1338 = vmul.f32 %v1330, %v1336
    %v1339 = vmul.f32 %v1331, %v1336
    %v1341 = vlaneseq
    %v1342 = vshrl.u32 %v1341, 7
    %v1343 = vsub.s32 0, %v1342
    %v1344 = vrot.slane %v1309, %v1343
    %v1346 = vadd.f32 %v1338, %v1344
    %v1347 = vadd.f32 %v1339, %v1344
    %s1348 = scalar_lea.vmem [#allocation8], 192
    %v1349 = vld [vmem:[%s1348] sm:$0xff]
    %v1350 = vld [vmem:[%s1348 + $0x8] sm:$0xf]
    %v1351 = vld [vmem:[%s1348 + $0xc] sm:$0xff]
    %v1352 = vld [vmem:[%s1348 + $0x14] sm:$0xf]
    %v1353 = vld [vmem:[%s1348 + $0x18] sm:$0xff]
    %v1354 = vld [vmem:[%s1348 + $0x20] sm:$0xf]
    %v1355 = vld [vmem:[%s1348 + $0x24] sm:$0xff]
    %v1356 = vld [vmem:[%s1348 + $0x2c] sm:$0xf]
    %v1357 = vld [vmem:[%s1348 + $0x30] sm:$0xff]
    %v1358 = vld [vmem:[%s1348 + $0x38] sm:$0xf]
    %v1359 = vld [vmem:[%s1348 + $0x3c] sm:$0xff]
    %v1360 = vld [vmem:[%s1348 + $0x44] sm:$0xf]
    %v1361 = vld [vmem:[%s1348 + $0x48] sm:$0xff]
    %v1362 = vld [vmem:[%s1348 + $0x50] sm:$0xf]
    %v1363 = vld [vmem:[%s1348 + $0x54] sm:$0xff]
    %v1364 = vld [vmem:[%s1348 + $0x5c] sm:$0xf]
    %v1365 = vld [vmem:[%s1348 + $0x60] sm:$0xff]
    %v1366 = vld [vmem:[%s1348 + $0x68] sm:$0xf]
    %v1367 = vld [vmem:[%s1348 + $0x6c] sm:$0xff]
    %v1368 = vld [vmem:[%s1348 + $0x74] sm:$0xf]
    %v1369 = vld [vmem:[%s1348 + $0x78] sm:$0xff]
    %v1370 = vld [vmem:[%s1348 + $0x80] sm:$0xf]
    %v1371 = vld [vmem:[%s1348 + $0x84] sm:$0xff]
    %v1372 = vld [vmem:[%s1348 + $0x8c] sm:$0xf]
    %v1373 = vld [vmem:[%s1348 + $0x90] sm:$0xff]
    %v1374 = vld [vmem:[%s1348 + $0x98] sm:$0xf]
    %v1375 = vld [vmem:[%s1348 + $0x9c] sm:$0xff]
    %v1376 = vld [vmem:[%s1348 + $0xa4] sm:$0xf]
    %v1377 = vld [vmem:[%s1348 + $0xa8] sm:$0xff]
    %v1378 = vld [vmem:[%s1348 + $0xb0] sm:$0xf]
    %v1379 = vld [vmem:[%s1348 + $0xb4] sm:$0xff]
    %v1380 = vld [vmem:[%s1348 + $0xbc] sm:$0xf]
    %v1381 = vpack.c.bf16 %v1347, %v1346
    %s1382 = scalar_lea.vmem %s9, 3
    %v1383 = vld [vmem:[%s1382] sm:$0x7]
    %v1385 = vlaneseq
    %v1386 = vshrl.u32 %v1385, 7
    %v1387 = vsub.s32 0, %v1386
    %v1388 = vrot.slane %v1383, %v1387
    %v1389 = vlaneseq
    %v1390 = vshrl.u32 %v1389, 7
    %v1391 = vsub.s32 1, %v1390
    %v1392 = vrot.slane %v1383, %v1391
    %v1393 = vlaneseq
    %v1394 = vshrl.u32 %v1393, 7
    %v1395 = vsub.s32 2, %v1394
    %v1396 = vrot.slane %v1383, %v1395
    %v1432 = vunpack.c.l.b16 %v1349
    %v1433 = vunpack.c.h.b16 %v1349
    %v1434 = vunpack.c.l.b16 %v1350
    %v1435 = vunpack.c.l.b16 %v1351
    %v1436 = vunpack.c.h.b16 %v1351
    %v1437 = vunpack.c.l.b16 %v1352
    %v1438 = vunpack.c.l.b16 %v1353
    %v1439 = vunpack.c.h.b16 %v1353
    %v1440 = vunpack.c.l.b16 %v1354
    %v1441 = vunpack.c.l.b16 %v1355
    %v1442 = vunpack.c.h.b16 %v1355
    %v1443 = vunpack.c.l.b16 %v1356
    %v1444 = vunpack.c.l.b16 %v1357
    %v1445 = vunpack.c.h.b16 %v1357
    %v1446 = vunpack.c.l.b16 %v1358
    %v1447 = vunpack.c.l.b16 %v1359
    %v1448 = vunpack.c.h.b16 %v1359
    %v1449 = vunpack.c.l.b16 %v1360
    %v1450 = vunpack.c.l.b16 %v1361
    %v1451 = vunpack.c.h.b16 %v1361
    %v1452 = vunpack.c.l.b16 %v1362
    %v1453 = vunpack.c.l.b16 %v1363
    %v1454 = vunpack.c.h.b16 %v1363
    %v1455 = vunpack.c.l.b16 %v1364
    %v1456 = vunpack.c.l.b16 %v1365
    %v1457 = vunpack.c.h.b16 %v1365
    %v1458 = vunpack.c.l.b16 %v1366
    %v1459 = vunpack.c.l.b16 %v1367
    %v1460 = vunpack.c.h.b16 %v1367
    %v1461 = vunpack.c.l.b16 %v1368
    %v1462 = vunpack.c.l.b16 %v1369
    %v1463 = vunpack.c.h.b16 %v1369
    %v1464 = vunpack.c.l.b16 %v1370
    %v1465 = vunpack.c.l.b16 %v1371
    %v1466 = vunpack.c.h.b16 %v1371
    %v1467 = vunpack.c.l.b16 %v1372
    %v1468 = vunpack.c.l.b16 %v1373
    %v1469 = vunpack.c.h.b16 %v1373
    %v1470 = vunpack.c.l.b16 %v1374
    %v1471 = vunpack.c.l.b16 %v1375
    %v1472 = vunpack.c.h.b16 %v1375
    %v1473 = vunpack.c.l.b16 %v1376
    %v1474 = vunpack.c.l.b16 %v1377
    %v1475 = vunpack.c.h.b16 %v1377
    %v1476 = vunpack.c.l.b16 %v1378
    %v1477 = vunpack.c.l.b16 %v1379
    %v1478 = vunpack.c.h.b16 %v1379
    %v1479 = vunpack.c.l.b16 %v1380
    %v1480 = vpack.c.b16 %v1435, %v1432
    %v1481 = vpack.c.b16 %v1436, %v1433
    %v1482 = vpack.c.b16 %v1437, %v1434
    %v1483 = vpack.c.b16 %v1441, %v1438
    %v1484 = vpack.c.b16 %v1442, %v1439
    %v1485 = vpack.c.b16 %v1443, %v1440
    %v1486 = vpack.c.b16 %v1447, %v1444
    %v1487 = vpack.c.b16 %v1448, %v1445
    %v1488 = vpack.c.b16 %v1449, %v1446
    %v1489 = vpack.c.b16 %v1453, %v1450
    %v1490 = vpack.c.b16 %v1454, %v1451
    %v1491 = vpack.c.b16 %v1455, %v1452
    %v1492 = vpack.c.b16 %v1459, %v1456
    %v1493 = vpack.c.b16 %v1460, %v1457
    %v1494 = vpack.c.b16 %v1461, %v1458
    %v1495 = vpack.c.b16 %v1465, %v1462
    %v1496 = vpack.c.b16 %v1466, %v1463
    %v1497 = vpack.c.b16 %v1467, %v1464
    %v1498 = vpack.c.b16 %v1471, %v1468
    %v1499 = vpack.c.b16 %v1472, %v1469
    %v1500 = vpack.c.b16 %v1473, %v1470
    %v1501 = vpack.c.b16 %v1477, %v1474
    %v1502 = vpack.c.b16 %v1478, %v1475
    %v1503 = vpack.c.b16 %v1479, %v1476
    %1528 = vmatprep.subr.bf16.mxu0 %v1481
    %1529 = vmatpush1.bf16.msra.mxu0 %v1480
    %1530 = vmatprep.subr.bf16.mxu0 %v1484
    %1531 = vmatpush1.bf16.msra.mxu0 %v1483
    %1532 = vmatprep.subr.bf16.mxu0 %v1487
    %1533 = vmatpush1.bf16.msra.mxu0 %v1486
    %1534 = vmatprep.subr.bf16.mxu0 %v1490
    %1535 = vmatpush1.bf16.msra.mxu0 %v1489
    %1536 = vmatprep.subr.bf16.mxu0 %v1493
    %1537 = vmatpush1.bf16.msra.mxu0 %v1492
    %1538 = vmatprep.subr.bf16.mxu0 %v1496
    %1539 = vmatpush1.bf16.msra.mxu0 %v1495
    %1540 = vmatprep.subr.bf16.mxu0 %v1499
    %1541 = vmatpush1.bf16.msra.mxu0 %v1498
    %1542 = vmatprep.subr.bf16.mxu0 %v1502
    %1543 = vmatpush1.bf16.msra.mxu0 %v1501
    %1544 = vmatprep.subr.bf16.mxu0 0
    %1545 = vmatpush1.bf16.msra.mxu0 0
    %1546 = vmatprep.subr.bf16.mxu0 0
    %1547 = vmatpush1.bf16.msra.mxu0 0
    %1548 = vmatprep.subr.bf16.mxu0 0
    %1549 = vmatpush1.bf16.msra.mxu0 0
    %1550 = vmatprep.subr.bf16.mxu0 0
    %1551 = vmatpush1.bf16.msra.mxu0 0
    %1552 = vmatprep.subr.bf16.mxu0 0
    %1553 = vmatpush1.bf16.msra.mxu0 0
    %1554 = vmatprep.subr.bf16.mxu0 0
    %1555 = vmatpush1.bf16.msra.mxu0 0
    %1556 = vmatprep.subr.bf16.mxu0 0
    %1557 = vmatpush1.bf16.msra.mxu0 0
    %1558 = vmatprep.subr.bf16.mxu0 0
    %1559 = vmatpush1.bf16.msra.mxu0 0
    %1560 = vmatprep.mubr.bf16.mxu0 0
    %1561 = vmatmul.mubr.bf16.gmra.mrb[0].mxu0 %v1381
    %v1562 = vpop.f32.mrb[0].mxu0
    %v1563 = vadd.f32 %v1388, %v1562
    %v1564 = vpop.f32.mrb[0].mxu0
    %v1565 = vadd.f32 %v1392, %v1564
    %v1566 = vpop.f32.mrb[0].mxu0
    %v1567 = vadd.f32 %v1388, %v1566
    %v1568 = vpop.f32.mrb[0].mxu0
    %v1569 = vadd.f32 %v1392, %v1568
    %1570 = vdwg.mxu0
    %1571 = vmatprep.subr.bf16.mxu0 0
    %1572 = vmatpush1.bf16.msra.mxu0 %v1482
    %1573 = vmatprep.subr.bf16.mxu0 0
    %1574 = vmatpush1.bf16.msra.mxu0 %v1485
    %1575 = vmatprep.subr.bf16.mxu0 0
    %1576 = vmatpush1.bf16.msra.mxu0 %v1488
    %1577 = vmatprep.subr.bf16.mxu0 0
    %1578 = vmatpush1.bf16.msra.mxu0 %v1491
    %1579 = vmatprep.subr.bf16.mxu0 0
    %1580 = vmatpush1.bf16.msra.mxu0 %v1494
    %1581 = vmatprep.subr.bf16.mxu0 0
    %1582 = vmatpush1.bf16.msra.mxu0 %v1497
    %1583 = vmatprep.subr.bf16.mxu0 0
    %1584 = vmatpush1.bf16.msra.mxu0 %v1500
    %1585 = vmatprep.subr.bf16.mxu0 0
    %1586 = vmatpush1.bf16.msra.mxu0 %v1503
    %1587 = vmatprep.subr.bf16.mxu0 0
    %1588 = vmatpush1.bf16.msra.mxu0 0
    %1589 = vmatprep.subr.bf16.mxu0 0
    %1590 = vmatpush1.bf16.msra.mxu0 0
    %1591 = vmatprep.subr.bf16.mxu0 0
    %1592 = vmatpush1.bf16.msra.mxu0 0
    %1593 = vmatprep.subr.bf16.mxu0 0
    %1594 = vmatpush1.bf16.msra.mxu0 0
    %1595 = vmatprep.subr.bf16.mxu0 0
    %1596 = vmatpush1.bf16.msra.mxu0 0
    %1597 = vmatprep.subr.bf16.mxu0 0
    %1598 = vmatpush1.bf16.msra.mxu0 0
    %1599 = vmatprep.subr.bf16.mxu0 0
    %1600 = vmatpush1.bf16.msra.mxu0 0
    %1601 = vmatprep.subr.bf16.mxu0 0
    %1602 = vmatpush1.bf16.msra.mxu0 0
    %1603 = vmatprep.mubr.bf16.mxu0 0
    %1604 = vmatmul.mubr.bf16.gmra.mrb[0].mxu0 %v1381
    %v1605 = vpop.f32.mrb[0].mxu0
    %v1606 = vadd.f32 %v1396, %v1605
    %v1607 = vpop.f32.mrb[0].mxu0
    %v1608 = vpop.f32.mrb[0].mxu0
    %v1609 = vadd.f32 %v1396, %v1608
    %v1610 = vpop.f32.mrb[0].mxu0
    %1611 = vdwg.mxu0
    %v1612 = vmul.f32 %v1563, 0.25
    %v1613 = vmul.f32 %v1567, 0.25
    %v1614 = vmul.f32 %v1565, %v167
    %v1615 = vmul.f32 %v1565, %v168
    %v1616 = vmul.f32 %v1565, %v169
    %v1617 = vmul.f32 %v1565, %v170
    %v1618 = vmul.f32 %v1565, %v171
    %v1619 = vmul.f32 %v1565, %v172
    %v1620 = vmul.f32 %v1565, %v173
    %v1621 = vmul.f32 %v1565, %v174
    %v1622 = vmul.f32 %v1606, %v167
    %v1623 = vmul.f32 %v1606, %v168
    %v1624 = vmul.f32 %v1606, %v169
    %v1625 = vmul.f32 %v1606, %v170
    %v1626 = vmul.f32 %v1606, %v171
    %v1627 = vmul.f32 %v1606, %v172
    %v1628 = vmul.f32 %v1606, %v173
    %v1629 = vmul.f32 %v1606, %v174
    %v1630 = vpack.c.bf16 %v1612, %v1612
    %v1631 = vpack.c.bf16 %v1615, %v1614
    %v1632 = vpack.c.bf16 %v1617, %v1616
    %v1633 = vpack.c.bf16 %v1619, %v1618
    %v1634 = vpack.c.bf16 %v1621, %v1620
    %v1636 = vshrl.u32 %v1630, 16
    %v1638 = vrot.slane %v1636, 3
    %1640 = vmatprep.subr.bf16.mxu0 0
    %1641 = vmatpush1.bf16.xpose.msra.mxu0 %v1631
    %1642 = vmatprep.subr.bf16.mxu0 0
    %1643 = vmatpush1.bf16.xpose.msra.mxu0 %v1632
    %1644 = vmatprep.subr.bf16.mxu0 0
    %1645 = vmatpush1.bf16.xpose.msra.mxu0 %v1633
    %1646 = vmatprep.subr.bf16.mxu0 0
    %1647 = vmatpush1.bf16.xpose.msra.mxu0 %v1634
    %1648 = vmatprep.subr.bf16.mxu0 0
    %1649 = vmatpush1.bf16.xpose.msra.mxu0 0
    %1650 = vmatprep.subr.bf16.mxu0 0
    %1651 = vmatpush1.bf16.xpose.msra.mxu0 0
    %1652 = vmatprep.subr.bf16.mxu0 0
    %1653 = vmatpush1.bf16.xpose.msra.mxu0 0
    %1654 = vmatprep.subr.bf16.mxu0 0
    %1655 = vmatpush1.bf16.xpose.msra.mxu0 0
    %1656 = vmatprep.subr.bf16.mxu0 0
    %1657 = vmatpush1.bf16.xpose.msra.mxu0 0
    %1658 = vmatprep.subr.bf16.mxu0 0
    %1659 = vmatpush1.bf16.xpose.msra.mxu0 0
    %1660 = vmatprep.subr.bf16.mxu0 0
    %1661 = vmatpush1.bf16.xpose.msra.mxu0 0
    %1662 = vmatprep.subr.bf16.mxu0 0
    %1663 = vmatpush1.bf16.xpose.msra.mxu0 0
    %1664 = vmatprep.subr.bf16.mxu0 0
    %1665 = vmatpush1.bf16.xpose.msra.mxu0 0
    %1666 = vmatprep.subr.bf16.mxu0 0
    %1667 = vmatpush1.bf16.xpose.msra.mxu0 0
    %1668 = vmatprep.subr.bf16.mxu0 0
    %1669 = vmatpush1.bf16.xpose.msra.mxu0 0
    %1670 = vmatprep.subr.bf16.mxu0 0
    %1671 = vmatpush1.bf16.xpose.msra.mxu0 0
    %1672 = vmatprep.mubr.bf16.mxu0 0
    %1673 = vmatmul.mubr.bf16.gmra.mrb[0].mxu0 %v1638
    %v1674 = vpop.f32.mrb[0].mxu0
    %v1675 = vadd.f32 0.0, %v1674
    %v1676 = vpop.f32.mrb[0].mxu0
    %v1677 = vpop.f32.mrb[0].mxu0
    %v1678 = vpop.f32.mrb[0].mxu0
    %1679 = vdwg.mxu0
    %vm1680 = vcmask 516096
    %v1681 = vsel %vm1680, %v1675, -inf
    %1682 = vmax.xlane.f32.xlu0 %v1681
    %v1683 = vpop.xlane.xlu0 %1682
    %v1684 = vsub.f32 %v1675, %v1683
    %v1685 = vmul.f32 %v1684, 1.442695
    %v1686 = vpow.pop %v1685
    %v1687 = vpack.c.bf16 %v1686, %v1686
    %v1689 = vsel %vm658, %v1687, 0
    %1691 = vmatprep.subr.bf16.mxu0 0
    %1692 = vmatpush1.bf16.msra.mxu0 %v183
    %1693 = vmatprep.subr.bf16.mxu0 0
    %1694 = vmatpush1.bf16.msra.mxu0 %v184
    %1695 = vmatprep.subr.bf16.mxu0 0
    %1696 = vmatpush1.bf16.msra.mxu0 %v185
    %1697 = vmatprep.subr.bf16.mxu0 0
    %1698 = vmatpush1.bf16.msra.mxu0 %v186
    %1699 = vmatprep.subr.bf16.mxu0 0
    %1700 = vmatpush1.bf16.msra.mxu0 0
    %1701 = vmatprep.subr.bf16.mxu0 0
    %1702 = vmatpush1.bf16.msra.mxu0 0
    %1703 = vmatprep.subr.bf16.mxu0 0
    %1704 = vmatpush1.bf16.msra.mxu0 0
    %1705 = vmatprep.subr.bf16.mxu0 0
    %1706 = vmatpush1.bf16.msra.mxu0 0
    %1707 = vmatprep.subr.bf16.mxu0 0
    %1708 = vmatpush1.bf16.msra.mxu0 0
    %1709 = vmatprep.subr.bf16.mxu0 0
    %1710 = vmatpush1.bf16.msra.mxu0 0
    %1711 = vmatprep.subr.bf16.mxu0 0
    %1712 = vmatpush1.bf16.msra.mxu0 0
    %1713 = vmatprep.subr.bf16.mxu0 0
    %1714 = vmatpush1.bf16.msra.mxu0 0
    %1715 = vmatprep.subr.bf16.mxu0 0
    %1716 = vmatpush1.bf16.msra.mxu0 0
    %1717 = vmatprep.subr.bf16.mxu0 0
    %1718 = vmatpush1.bf16.msra.mxu0 0
    %1719 = vmatprep.subr.bf16.mxu0 0
    %1720 = vmatpush1.bf16.msra.mxu0 0
    %1721 = vmatprep.subr.bf16.mxu0 0
    %1722 = vmatpush1.bf16.msra.mxu0 0
    %1723 = vmatprep.mubr.bf16.mxu0 0
    %1724 = vmatmul.mubr.bf16.gmra.mrb[0].mxu0 %v1689
    %v1725 = vpop.f32.mrb[0].mxu0
    %v1726 = vadd.f32 0.0, %v1725
    %v1727 = vpop.f32.mrb[0].mxu0
    %v1728 = vpop.f32.mrb[0].mxu0
    %v1729 = vpop.f32.mrb[0].mxu0
    %1730 = vdwg.mxu0
    %v1731 = vmax.f32 %v1726, 1e-20
    %v1732 = vrcp.pop %v1731
    %v1733 = vmul.f32 %v1686, %v1732
    %v1734 = vpack.c.bf16 %v1733, %v1733
    %v1735 = vpack.c.bf16 %v1623, %v1622
    %v1736 = vpack.c.bf16 %v1625, %v1624
    %v1737 = vpack.c.bf16 %v1627, %v1626
    %v1738 = vpack.c.bf16 %v1629, %v1628
    %v1740 = vsel %vm658, %v1734, 0
    %1742 = vmatprep.subr.bf16.mxu0 0
    %1743 = vmatpush1.bf16.msra.mxu0 %v1735
    %1744 = vmatprep.subr.bf16.mxu0 0
    %1745 = vmatpush1.bf16.msra.mxu0 %v1736
    %1746 = vmatprep.subr.bf16.mxu0 0
    %1747 = vmatpush1.bf16.msra.mxu0 %v1737
    %1748 = vmatprep.subr.bf16.mxu0 0
    %1749 = vmatpush1.bf16.msra.mxu0 %v1738
    %1750 = vmatprep.subr.bf16.mxu0 0
    %1751 = vmatpush1.bf16.msra.mxu0 0
    %1752 = vmatprep.subr.bf16.mxu0 0
    %1753 = vmatpush1.bf16.msra.mxu0 0
    %1754 = vmatprep.subr.bf16.mxu0 0
    %1755 = vmatpush1.bf16.msra.mxu0 0
    %1756 = vmatprep.subr.bf16.mxu0 0
    %1757 = vmatpush1.bf16.msra.mxu0 0
    %1758 = vmatprep.subr.bf16.mxu0 0
    %1759 = vmatpush1.bf16.msra.mxu0 0
    %1760 = vmatprep.subr.bf16.mxu0 0
    %1761 = vmatpush1.bf16.msra.mxu0 0
    %1762 = vmatprep.subr.bf16.mxu0 0
    %1763 = vmatpush1.bf16.msra.mxu0 0
    %1764 = vmatprep.subr.bf16.mxu0 0
    %1765 = vmatpush1.bf16.msra.mxu0 0
    %1766 = vmatprep.subr.bf16.mxu0 0
    %1767 = vmatpush1.bf16.msra.mxu0 0
    %1768 = vmatprep.subr.bf16.mxu0 0
    %1769 = vmatpush1.bf16.msra.mxu0 0
    %1770 = vmatprep.subr.bf16.mxu0 0
    %1771 = vmatpush1.bf16.msra.mxu0 0
    %1772 = vmatprep.subr.bf16.mxu0 0
    %1773 = vmatpush1.bf16.msra.mxu0 0
    %1774 = vmatprep.mubr.bf16.mxu0 0
    %1775 = vmatmul.mubr.bf16.gmra.mrb[0].mxu0 %v1740
    %v1776 = vpop.f32.mrb[0].mxu0
    %v1777 = vadd.f32 0.0, %v1776
    %v1778 = vpop.f32.mrb[0].mxu0
    %v1779 = vpop.f32.mrb[0].mxu0
    %v1780 = vpop.f32.mrb[0].mxu0
    %1781 = vdwg.mxu0
    %v1782 = vmul.f32 %v1569, %v167
    %v1783 = vmul.f32 %v1569, %v168
    %v1784 = vmul.f32 %v1569, %v169
    %v1785 = vmul.f32 %v1569, %v170
    %v1786 = vmul.f32 %v1569, %v171
    %v1787 = vmul.f32 %v1569, %v172
    %v1788 = vmul.f32 %v1569, %v173
    %v1789 = vmul.f32 %v1569, %v174
    %v1790 = vmul.f32 %v1609, %v167
    %v1791 = vmul.f32 %v1609, %v168
    %v1792 = vmul.f32 %v1609, %v169
    %v1793 = vmul.f32 %v1609, %v170
    %v1794 = vmul.f32 %v1609, %v171
    %v1795 = vmul.f32 %v1609, %v172
    %v1796 = vmul.f32 %v1609, %v173
    %v1797 = vmul.f32 %v1609, %v174
    %v1798 = vpack.c.bf16 %v1613, %v1613
    %v1799 = vpack.c.bf16 %v1783, %v1782
    %v1800 = vpack.c.bf16 %v1785, %v1784
    %v1801 = vpack.c.bf16 %v1787, %v1786
    %v1802 = vpack.c.bf16 %v1789, %v1788
    %v1804 = vshrl.u32 %v1798, 16
    %v1806 = vrot.slane %v1804, 3
    %1808 = vmatprep.subr.bf16.mxu0 0
    %1809 = vmatpush1.bf16.xpose.msra.mxu0 %v1799
    %1810 = vmatprep.subr.bf16.mxu0 0
    %1811 = vmatpush1.bf16.xpose.msra.mxu0 %v1800
    %1812 = vmatprep.subr.bf16.mxu0 0
    %1813 = vmatpush1.bf16.xpose.msra.mxu0 %v1801
    %1814 = vmatprep.subr.bf16.mxu0 0
    %1815 = vmatpush1.bf16.xpose.msra.mxu0 %v1802
    %1816 = vmatprep.subr.bf16.mxu0 0
    %1817 = vmatpush1.bf16.xpose.msra.mxu0 0
    %1818 = vmatprep.subr.bf16.mxu0 0
    %1819 = vmatpush1.bf16.xpose.msra.mxu0 0
    %1820 = vmatprep.subr.bf16.mxu0 0
    %1821 = vmatpush1.bf16.xpose.msra.mxu0 0
    %1822 = vmatprep.subr.bf16.mxu0 0
    %1823 = vmatpush1.bf16.xpose.msra.mxu0 0
    %1824 = vmatprep.subr.bf16.mxu0 0
    %1825 = vmatpush1.bf16.xpose.msra.mxu0 0
    %1826 = vmatprep.subr.bf16.mxu0 0
    %1827 = vmatpush1.bf16.xpose.msra.mxu0 0
    %1828 = vmatprep.subr.bf16.mxu0 0
    %1829 = vmatpush1.bf16.xpose.msra.mxu0 0
    %1830 = vmatprep.subr.bf16.mxu0 0
    %1831 = vmatpush1.bf16.xpose.msra.mxu0 0
    %1832 = vmatprep.subr.bf16.mxu0 0
    %1833 = vmatpush1.bf16.xpose.msra.mxu0 0
    %1834 = vmatprep.subr.bf16.mxu0 0
    %1835 = vmatpush1.bf16.xpose.msra.mxu0 0
    %1836 = vmatprep.subr.bf16.mxu0 0
    %1837 = vmatpush1.bf16.xpose.msra.mxu0 0
    %1838 = vmatprep.subr.bf16.mxu0 0
    %1839 = vmatpush1.bf16.xpose.msra.mxu0 0
    %1840 = vmatprep.mubr.bf16.mxu0 0
    %1841 = vmatmul.mubr.bf16.gmra.mrb[0].mxu0 %v1806
    %v1842 = vpop.f32.mrb[0].mxu0
    %v1843 = vadd.f32 0.0, %v1842
    %v1844 = vpop.f32.mrb[0].mxu0
    %v1845 = vpop.f32.mrb[0].mxu0
    %v1846 = vpop.f32.mrb[0].mxu0
    %1847 = vdwg.mxu0
    %v1848 = vsel %vm1680, %v1843, -inf
    %1849 = vmax.xlane.f32.xlu0 %v1848
    %v1850 = vpop.xlane.xlu0 %1849
    %v1851 = vsub.f32 %v1843, %v1850
    %v1852 = vmul.f32 %v1851, 1.442695
    %v1853 = vpow.pop %v1852
    %v1854 = vpack.c.bf16 %v1853, %v1853
    %v1856 = vsel %vm658, %v1854, 0
    %1858 = vmatprep.subr.bf16.mxu0 0
    %1859 = vmatpush1.bf16.msra.mxu0 %v183
    %1860 = vmatprep.subr.bf16.mxu0 0
    %1861 = vmatpush1.bf16.msra.mxu0 %v184
    %1862 = vmatprep.subr.bf16.mxu0 0
    %1863 = vmatpush1.bf16.msra.mxu0 %v185
    %1864 = vmatprep.subr.bf16.mxu0 0
    %1865 = vmatpush1.bf16.msra.mxu0 %v186
    %1866 = vmatprep.subr.bf16.mxu0 0
    %1867 = vmatpush1.bf16.msra.mxu0 0
    %1868 = vmatprep.subr.bf16.mxu0 0
    %1869 = vmatpush1.bf16.msra.mxu0 0
    %1870 = vmatprep.subr.bf16.mxu0 0
    %1871 = vmatpush1.bf16.msra.mxu0 0
    %1872 = vmatprep.subr.bf16.mxu0 0
    %1873 = vmatpush1.bf16.msra.mxu0 0
    %1874 = vmatprep.subr.bf16.mxu0 0
    %1875 = vmatpush1.bf16.msra.mxu0 0
    %1876 = vmatprep.subr.bf16.mxu0 0
    %1877 = vmatpush1.bf16.msra.mxu0 0
    %1878 = vmatprep.subr.bf16.mxu0 0
    %1879 = vmatpush1.bf16.msra.mxu0 0
    %1880 = vmatprep.subr.bf16.mxu0 0
    %1881 = vmatpush1.bf16.msra.mxu0 0
    %1882 = vmatprep.subr.bf16.mxu0 0
    %1883 = vmatpush1.bf16.msra.mxu0 0
    %1884 = vmatprep.subr.bf16.mxu0 0
    %1885 = vmatpush1.bf16.msra.mxu0 0
    %1886 = vmatprep.subr.bf16.mxu0 0
    %1887 = vmatpush1.bf16.msra.mxu0 0
    %1888 = vmatprep.subr.bf16.mxu0 0
    %1889 = vmatpush1.bf16.msra.mxu0 0
    %1890 = vmatprep.mubr.bf16.mxu0 0
    %1891 = vmatmul.mubr.bf16.gmra.mrb[0].mxu0 %v1856
    %v1892 = vpop.f32.mrb[0].mxu0
    %v1893 = vadd.f32 0.0, %v1892
    %v1894 = vpop.f32.mrb[0].mxu0
    %v1895 = vpop.f32.mrb[0].mxu0
    %v1896 = vpop.f32.mrb[0].mxu0
    %1897 = vdwg.mxu0
    %v1898 = vmax.f32 %v1893, 1e-20
    %v1899 = vrcp.pop %v1898
    %v1900 = vmul.f32 %v1853, %v1899
    %v1901 = vpack.c.bf16 %v1900, %v1900
    %v1902 = vpack.c.bf16 %v1791, %v1790
    %v1903 = vpack.c.bf16 %v1793, %v1792
    %v1904 = vpack.c.bf16 %v1795, %v1794
    %v1905 = vpack.c.bf16 %v1797, %v1796
    %v1907 = vsel %vm658, %v1901, 0
    %1909 = vmatprep.subr.bf16.mxu0 0
    %1910 = vmatpush1.bf16.msra.mxu0 %v1902
    %1911 = vmatprep.subr.bf16.mxu0 0
    %1912 = vmatpush1.bf16.msra.mxu0 %v1903
    %1913 = vmatprep.subr.bf16.mxu0 0
    %1914 = vmatpush1.bf16.msra.mxu0 %v1904
    %1915 = vmatprep.subr.bf16.mxu0 0
    %1916 = vmatpush1.bf16.msra.mxu0 %v1905
    %1917 = vmatprep.subr.bf16.mxu0 0
    %1918 = vmatpush1.bf16.msra.mxu0 0
    %1919 = vmatprep.subr.bf16.mxu0 0
    %1920 = vmatpush1.bf16.msra.mxu0 0
    %1921 = vmatprep.subr.bf16.mxu0 0
    %1922 = vmatpush1.bf16.msra.mxu0 0
    %1923 = vmatprep.subr.bf16.mxu0 0
    %1924 = vmatpush1.bf16.msra.mxu0 0
    %1925 = vmatprep.subr.bf16.mxu0 0
    %1926 = vmatpush1.bf16.msra.mxu0 0
    %1927 = vmatprep.subr.bf16.mxu0 0
    %1928 = vmatpush1.bf16.msra.mxu0 0
    %1929 = vmatprep.subr.bf16.mxu0 0
    %1930 = vmatpush1.bf16.msra.mxu0 0
    %1931 = vmatprep.subr.bf16.mxu0 0
    %1932 = vmatpush1.bf16.msra.mxu0 0
    %1933 = vmatprep.subr.bf16.mxu0 0
    %1934 = vmatpush1.bf16.msra.mxu0 0
    %1935 = vmatprep.subr.bf16.mxu0 0
    %1936 = vmatpush1.bf16.msra.mxu0 0
    %1937 = vmatprep.subr.bf16.mxu0 0
    %1938 = vmatpush1.bf16.msra.mxu0 0
    %1939 = vmatprep.subr.bf16.mxu0 0
    %1940 = vmatpush1.bf16.msra.mxu0 0
    %1941 = vmatprep.mubr.bf16.mxu0 0
    %1942 = vmatmul.mubr.bf16.gmra.mrb[0].mxu0 %v1907
    %v1943 = vpop.f32.mrb[0].mxu0
    %v1944 = vadd.f32 0.0, %v1943
    %v1945 = vpop.f32.mrb[0].mxu0
    %v1946 = vpop.f32.mrb[0].mxu0
    %v1947 = vpop.f32.mrb[0].mxu0
    %1948 = vdwg.mxu0
    %v1950 = vrot.slane %v1944, 7
    %vm1952 = vcmask 1040384
    %v1953 = vsel %vm1952, %v1777, %v1950
    %s1954 = scalar_lea.vmem [#allocation10], 64
    %v1955 = vld [vmem:[%s1954] sm:$0xf]
    %v1956 = vld [vmem:[%s1954 + $0x4] sm:$0xf]
    %v1957 = vld [vmem:[%s1954 + $0x8] sm:$0xf]
    %v1958 = vld [vmem:[%s1954 + $0xc] sm:$0xf]
    %v1959 = vld [vmem:[%s1954 + $0x10] sm:$0xf]
    %v1960 = vld [vmem:[%s1954 + $0x14] sm:$0xf]
    %v1961 = vld [vmem:[%s1954 + $0x18] sm:$0xf]
    %v1962 = vld [vmem:[%s1954 + $0x1c] sm:$0xf]
    %v1963 = vld [vmem:[%s1954 + $0x20] sm:$0xf]
    %v1964 = vld [vmem:[%s1954 + $0x24] sm:$0xf]
    %v1965 = vld [vmem:[%s1954 + $0x28] sm:$0xf]
    %v1966 = vld [vmem:[%s1954 + $0x2c] sm:$0xf]
    %v1967 = vld [vmem:[%s1954 + $0x30] sm:$0xf]
    %v1968 = vld [vmem:[%s1954 + $0x34] sm:$0xf]
    %v1969 = vld [vmem:[%s1954 + $0x38] sm:$0xf]
    %v1970 = vld [vmem:[%s1954 + $0x3c] sm:$0xf]
    %v1971 = vpack.c.bf16 %v1953, %v1953
    %s1972 = scalar_lea.vmem %s11, 1
    %v1973 = vld [vmem:[%s1972] sm:$0x1]
    %v1975 = vlaneseq
    %v1976 = vshrl.u32 %v1975, 7
    %v1977 = vsub.s32 0, %v1976
    %v1978 = vrot.slane %v1973, %v1977
    %v1996 = vunpack.c.l.b16 %v1955
    %v1997 = vunpack.c.l.b16 %v1956
    %v1998 = vunpack.c.l.b16 %v1957
    %v1999 = vunpack.c.l.b16 %v1958
    %v2000 = vunpack.c.l.b16 %v1959
    %v2001 = vunpack.c.l.b16 %v1960
    %v2002 = vunpack.c.l.b16 %v1961
    %v2003 = vunpack.c.l.b16 %v1962
    %v2004 = vunpack.c.l.b16 %v1963
    %v2005 = vunpack.c.l.b16 %v1964
    %v2006 = vunpack.c.l.b16 %v1965
    %v2007 = vunpack.c.l.b16 %v1966
    %v2008 = vunpack.c.l.b16 %v1967
    %v2009 = vunpack.c.l.b16 %v1968
    %v2010 = vunpack.c.l.b16 %v1969
    %v2011 = vunpack.c.l.b16 %v1970
    %v2012 = vpack.c.b16 %v1997, %v1996
    %v2013 = vpack.c.b16 %v1999, %v1998
    %v2014 = vpack.c.b16 %v2001, %v2000
    %v2015 = vpack.c.b16 %v2003, %v2002
    %v2016 = vpack.c.b16 %v2005, %v2004
    %v2017 = vpack.c.b16 %v2007, %v2006
    %v2018 = vpack.c.b16 %v2009, %v2008
    %v2019 = vpack.c.b16 %v2011, %v2010
    %2028 = vmatprep.subr.bf16.mxu0 0
    %2029 = vmatpush1.bf16.msra.mxu0 %v2012
    %2030 = vmatprep.subr.bf16.mxu0 0
    %2031 = vmatpush1.bf16.msra.mxu0 %v2013
    %2032 = vmatprep.subr.bf16.mxu0 0
    %2033 = vmatpush1.bf16.msra.mxu0 %v2014
    %2034 = vmatprep.subr.bf16.mxu0 0
    %2035 = vmatpush1.bf16.msra.mxu0 %v2015
    %2036 = vmatprep.subr.bf16.mxu0 0
    %2037 = vmatpush1.bf16.msra.mxu0 %v2016
    %2038 = vmatprep.subr.bf16.mxu0 0
    %2039 = vmatpush1.bf16.msra.mxu0 %v2017
    %2040 = vmatprep.subr.bf16.mxu0 0
    %2041 = vmatpush1.bf16.msra.mxu0 %v2018
    %2042 = vmatprep.subr.bf16.mxu0 0
    %2043 = vmatpush1.bf16.msra.mxu0 %v2019
    %2044 = vmatprep.subr.bf16.mxu0 0
    %2045 = vmatpush1.bf16.msra.mxu0 0
    %2046 = vmatprep.subr.bf16.mxu0 0
    %2047 = vmatpush1.bf16.msra.mxu0 0
    %2048 = vmatprep.subr.bf16.mxu0 0
    %2049 = vmatpush1.bf16.msra.mxu0 0
    %2050 = vmatprep.subr.bf16.mxu0 0
    %2051 = vmatpush1.bf16.msra.mxu0 0
    %2052 = vmatprep.subr.bf16.mxu0 0
    %2053 = vmatpush1.bf16.msra.mxu0 0
    %2054 = vmatprep.subr.bf16.mxu0 0
    %2055 = vmatpush1.bf16.msra.mxu0 0
    %2056 = vmatprep.subr.bf16.mxu0 0
    %2057 = vmatpush1.bf16.msra.mxu0 0
    %2058 = vmatprep.subr.bf16.mxu0 0
    %2059 = vmatpush1.bf16.msra.mxu0 0
    %2060 = vmatprep.mubr.bf16.mxu0 0
    %2061 = vmatmul.mubr.bf16.gmra.mrb[0].mxu0 %v1971
    %v2062 = vpop.f32.mrb[0].mxu0
    %v2063 = vadd.f32 %v1978, %v2062
    %v2064 = vpop.f32.mrb[0].mxu0
    %v2065 = vpop.f32.mrb[0].mxu0
    %v2066 = vpop.f32.mrb[0].mxu0
    %2067 = vdwg.mxu0
    %v2069 = vrot.slane %v2063, 1
    %v2070 = vrot.slane %v2063, 2
    %v2073 = vadd.f32 %v1346, %v2069
    %v2074 = vadd.f32 %v1347, %v2070
    %s2075 = scalar_lea.vmem %s12, 1
    %v2076 = vld [vmem:[%s2075] sm:$0x1]
    %s2077 = scalar_lea.vmem %s13, 1
    %v2078 = vld [vmem:[%s2077] sm:$0x1]
    %v2081 = vrot.slane %v2074, 7
    %vm2084 = vcmask 1047559
    %v2085 = vsel %vm2084, %v2073, 0.0
    %2086 = vadd.xlane.f32.xlu0 %v2085
    %v2087 = vpop.xlane.xlu0 %2086
    %v2088 = vsel %vm1952, %v2081, 0.0
    %2089 = vadd.xlane.f32.xlu0 %v2088
    %v2090 = vpop.xlane.xlu0 %2089
    %v2091 = vmul.f32 %v2087, %v1043
    %v2092 = vmul.f32 %v2090, %v1043
    %v2095 = vrot.slane %v2092, 1
    %v2098 = vsub.f32 %v2073, %v2091
    %v2099 = vsub.f32 %v2074, %v2095
    %v2100 = vmul.f32 %v2098, %v2098
    %v2101 = vmul.f32 %v2099, %v2099
    %v2104 = vrot.slane %v2101, 7
    %v2107 = vsel %vm2084, %v2100, 0.0
    %2108 = vadd.xlane.f32.xlu0 %v2107
    %v2109 = vpop.xlane.xlu0 %2108
    %v2110 = vsel %vm1952, %v2104, 0.0
    %2111 = vadd.xlane.f32.xlu0 %v2110
    %v2112 = vpop.xlane.xlu0 %2111
    %v2113 = vmul.f32 %v2109, %v1043
    %v2114 = vmul.f32 %v2112, %v1043
    %v2115 = vadd.f32 %v2113, 1e-05
    %v2116 = vadd.f32 %v2114, 1e-05
    %v2117 = vrsqrt.pop %v2115
    %v2118 = vrsqrt.pop %v2116
    %v2121 = vrot.slane %v2118, 1
    %v2124 = vmul.f32 %v2098, %v2117
    %v2125 = vmul.f32 %v2099, %v2121
    %v2127 = vlaneseq
    %v2128 = vshrl.u32 %v2127, 7
    %v2129 = vsub.s32 0, %v2128
    %v2130 = vrot.slane %v2076, %v2129
    %v2132 = vmul.f32 %v2124, %v2130
    %v2133 = vmul.f32 %v2125, %v2130
    %v2135 = vlaneseq
    %v2136 = vshrl.u32 %v2135, 7
    %v2137 = vsub.s32 0, %v2136
    %v2138 = vrot.slane %v2078, %v2137
    %v2140 = vadd.f32 %v2132, %v2138
    %v2141 = vadd.f32 %v2133, %v2138
    %s2142 = scalar_lea.vmem [#allocation11], 64
    %v2143 = vld [vmem:[%s2142] sm:$0xf]
    %v2144 = vld [vmem:[%s2142 + $0x4] sm:$0xf]
    %v2145 = vld [vmem:[%s2142 + $0x8] sm:$0xf]
    %v2146 = vld [vmem:[%s2142 + $0xc] sm:$0xf]
    %v2147 = vld [vmem:[%s2142 + $0x10] sm:$0xf]
    %v2148 = vld [vmem:[%s2142 + $0x14] sm:$0xf]
    %v2149 = vld [vmem:[%s2142 + $0x18] sm:$0xf]
    %v2150 = vld [vmem:[%s2142 + $0x1c] sm:$0xf]
    %v2151 = vld [vmem:[%s2142 + $0x20] sm:$0xf]
    %v2152 = vld [vmem:[%s2142 + $0x24] sm:$0xf]
    %v2153 = vld [vmem:[%s2142 + $0x28] sm:$0xf]
    %v2154 = vld [vmem:[%s2142 + $0x2c] sm:$0xf]
    %v2155 = vld [vmem:[%s2142 + $0x30] sm:$0xf]
    %v2156 = vld [vmem:[%s2142 + $0x34] sm:$0xf]
    %v2157 = vld [vmem:[%s2142 + $0x38] sm:$0xf]
    %v2158 = vld [vmem:[%s2142 + $0x3c] sm:$0xf]
    %v2159 = vpack.c.bf16 %v2140, %v2140
    %v2160 = vpack.c.bf16 %v2141, %v2141
    %s2161 = scalar_lea.vmem %s15, 1
    %v2162 = vld [vmem:[%s2161] sm:$0x1]
    %v2164 = vlaneseq
    %v2165 = vshrl.u32 %v2164, 7
    %v2166 = vsub.s32 0, %v2165
    %v2167 = vrot.slane %v2162, %v2166
    %v2171 = vunpack.c.l.b16 %v2159
    %v2172 = vunpack.c.l.b16 %v2160
    %v2173 = vrot.slane %v2171, 7
    %v2174 = vrot.slane %v2172, 6
    %vm2175 = vcmask 1041409
    %v2176 = vsel %vm2175, %v2174, %v2173
    %v2177 = vpack.c.b16 %v2176, %v2176
    %v2195 = vunpack.c.l.b16 %v2143
    %v2196 = vunpack.c.l.b16 %v2144
    %v2197 = vunpack.c.l.b16 %v2145
    %v2198 = vunpack.c.l.b16 %v2146
    %v2199 = vunpack.c.l.b16 %v2147
    %v2200 = vunpack.c.l.b16 %v2148
    %v2201 = vunpack.c.l.b16 %v2149
    %v2202 = vunpack.c.l.b16 %v2150
    %v2203 = vunpack.c.l.b16 %v2151
    %v2204 = vunpack.c.l.b16 %v2152
    %v2205 = vunpack.c.l.b16 %v2153
    %v2206 = vunpack.c.l.b16 %v2154
    %v2207 = vunpack.c.l.b16 %v2155
    %v2208 = vunpack.c.l.b16 %v2156
    %v2209 = vunpack.c.l.b16 %v2157
    %v2210 = vunpack.c.l.b16 %v2158
    %v2211 = vpack.c.b16 %v2196, %v2195
    %v2212 = vpack.c.b16 %v2198, %v2197
    %v2213 = vpack.c.b16 %v2200, %v2199
    %v2214 = vpack.c.b16 %v2202, %v2201
    %v2215 = vpack.c.b16 %v2204, %v2203
    %v2216 = vpack.c.b16 %v2206, %v2205
    %v2217 = vpack.c.b16 %v2208, %v2207
    %v2218 = vpack.c.b16 %v2210, %v2209
    %2227 = vmatprep.subr.bf16.mxu0 0
    %2228 = vmatpush1.bf16.msra.mxu0 %v2211
    %2229 = vmatprep.subr.bf16.mxu0 0
    %2230 = vmatpush1.bf16.msra.mxu0 %v2212
    %2231 = vmatprep.subr.bf16.mxu0 0
    %2232 = vmatpush1.bf16.msra.mxu0 %v2213
    %2233 = vmatprep.subr.bf16.mxu0 0
    %2234 = vmatpush1.bf16.msra.mxu0 %v2214
    %2235 = vmatprep.subr.bf16.mxu0 0
    %2236 = vmatpush1.bf16.msra.mxu0 %v2215
    %2237 = vmatprep.subr.bf16.mxu0 0
    %2238 = vmatpush1.bf16.msra.mxu0 %v2216
    %2239 = vmatprep.subr.bf16.mxu0 0
    %2240 = vmatpush1.bf16.msra.mxu0 %v2217
    %2241 = vmatprep.subr.bf16.mxu0 0
    %2242 = vmatpush1.bf16.msra.mxu0 %v2218
    %2243 = vmatprep.subr.bf16.mxu0 0
    %2244 = vmatpush1.bf16.msra.mxu0 0
    %2245 = vmatprep.subr.bf16.mxu0 0
    %2246 = vmatpush1.bf16.msra.mxu0 0
    %2247 = vmatprep.subr.bf16.mxu0 0
    %2248 = vmatpush1.bf16.msra.mxu0 0
    %2249 = vmatprep.subr.bf16.mxu0 0
    %2250 = vmatpush1.bf16.msra.mxu0 0
    %2251 = vmatprep.subr.bf16.mxu0 0
    %2252 = vmatpush1.bf16.msra.mxu0 0
    %2253 = vmatprep.subr.bf16.mxu0 0
    %2254 = vmatpush1.bf16.msra.mxu0 0
    %2255 = vmatprep.subr.bf16.mxu0 0
    %2256 = vmatpush1.bf16.msra.mxu0 0
    %2257 = vmatprep.subr.bf16.mxu0 0
    %2258 = vmatpush1.bf16.msra.mxu0 0
    %2259 = vmatprep.mubr.bf16.mxu0 0
    %2260 = vmatmul.mubr.bf16.gmra.mrb[0].mxu0 %v2177
    %v2261 = vpop.f32.mrb[0].mxu0
    %v2262 = vadd.f32 %v2167, %v2261
    %v2263 = vpop.f32.mrb[0].mxu0
    %v2264 = vpop.f32.mrb[0].mxu0
    %v2265 = vpop.f32.mrb[0].mxu0
    %2266 = vdwg.mxu0
    %v2267 = vmax.f32 %v2262, 0.0
    %s2268 = scalar_lea.vmem [#allocation13], 64
    %v2269 = vld [vmem:[%s2268] sm:$0xf]
    %v2270 = vld [vmem:[%s2268 + $0x4] sm:$0xf]
    %v2271 = vld [vmem:[%s2268 + $0x8] sm:$0xf]
    %v2272 = vld [vmem:[%s2268 + $0xc] sm:$0xf]
    %v2273 = vld [vmem:[%s2268 + $0x10] sm:$0xf]
    %v2274 = vld [vmem:[%s2268 + $0x14] sm:$0xf]
    %v2275 = vld [vmem:[%s2268 + $0x18] sm:$0xf]
    %v2276 = vld [vmem:[%s2268 + $0x1c] sm:$0xf]
    %v2277 = vld [vmem:[%s2268 + $0x20] sm:$0xf]
    %v2278 = vld [vmem:[%s2268 + $0x24] sm:$0xf]
    %v2279 = vld [vmem:[%s2268 + $0x28] sm:$0xf]
    %v2280 = vld [vmem:[%s2268 + $0x2c] sm:$0xf]
    %v2281 = vld [vmem:[%s2268 + $0x30] sm:$0xf]
    %v2282 = vld [vmem:[%s2268 + $0x34] sm:$0xf]
    %v2283 = vld [vmem:[%s2268 + $0x38] sm:$0xf]
    %v2284 = vld [vmem:[%s2268 + $0x3c] sm:$0xf]
    %v2285 = vpack.c.bf16 %v2267, %v2267
    %s2286 = scalar_lea.vmem %s17, 1
    %v2287 = vld [vmem:[%s2286] sm:$0x1]
    %v2289 = vlaneseq
    %v2290 = vshrl.u32 %v2289, 7
    %v2291 = vsub.s32 0, %v2290
    %v2292 = vrot.slane %v2287, %v2291
    %v2310 = vunpack.c.l.b16 %v2269
    %v2311 = vunpack.c.l.b16 %v2270
    %v2312 = vunpack.c.l.b16 %v2271
    %v2313 = vunpack.c.l.b16 %v2272
    %v2314 = vunpack.c.l.b16 %v2273
    %v2315 = vunpack.c.l.b16 %v2274
    %v2316 = vunpack.c.l.b16 %v2275
    %v2317 = vunpack.c.l.b16 %v2276
    %v2318 = vunpack.c.l.b16 %v2277
    %v2319 = vunpack.c.l.b16 %v2278
    %v2320 = vunpack.c.l.b16 %v2279
    %v2321 = vunpack.c.l.b16 %v2280
    %v2322 = vunpack.c.l.b16 %v2281
    %v2323 = vunpack.c.l.b16 %v2282
    %v2324 = vunpack.c.l.b16 %v2283
    %v2325 = vunpack.c.l.b16 %v2284
    %v2326 = vpack.c.b16 %v2311, %v2310
    %v2327 = vpack.c.b16 %v2313, %v2312
    %v2328 = vpack.c.b16 %v2315, %v2314
    %v2329 = vpack.c.b16 %v2317, %v2316
    %v2330 = vpack.c.b16 %v2319, %v2318
    %v2331 = vpack.c.b16 %v2321, %v2320
    %v2332 = vpack.c.b16 %v2323, %v2322
    %v2333 = vpack.c.b16 %v2325, %v2324
    %2342 = vmatprep.subr.bf16.mxu0 0
    %2343 = vmatpush1.bf16.msra.mxu0 %v2326
    %2344 = vmatprep.subr.bf16.mxu0 0
    %2345 = vmatpush1.bf16.msra.mxu0 %v2327
    %2346 = vmatprep.subr.bf16.mxu0 0
    %2347 = vmatpush1.bf16.msra.mxu0 %v2328
    %2348 = vmatprep.subr.bf16.mxu0 0
    %2349 = vmatpush1.bf16.msra.mxu0 %v2329
    %2350 = vmatprep.subr.bf16.mxu0 0
    %2351 = vmatpush1.bf16.msra.mxu0 %v2330
    %2352 = vmatprep.subr.bf16.mxu0 0
    %2353 = vmatpush1.bf16.msra.mxu0 %v2331
    %2354 = vmatprep.subr.bf16.mxu0 0
    %2355 = vmatpush1.bf16.msra.mxu0 %v2332
    %2356 = vmatprep.subr.bf16.mxu0 0
    %2357 = vmatpush1.bf16.msra.mxu0 %v2333
    %2358 = vmatprep.subr.bf16.mxu0 0
    %2359 = vmatpush1.bf16.msra.mxu0 0
    %2360 = vmatprep.subr.bf16.mxu0 0
    %2361 = vmatpush1.bf16.msra.mxu0 0
    %2362 = vmatprep.subr.bf16.mxu0 0
    %2363 = vmatpush1.bf16.msra.mxu0 0
    %2364 = vmatprep.subr.bf16.mxu0 0
    %2365 = vmatpush1.bf16.msra.mxu0 0
    %2366 = vmatprep.subr.bf16.mxu0 0
    %2367 = vmatpush1.bf16.msra.mxu0 0
    %2368 = vmatprep.subr.bf16.mxu0 0
    %2369 = vmatpush1.bf16.msra.mxu0 0
    %2370 = vmatprep.subr.bf16.mxu0 0
    %2371 = vmatpush1.bf16.msra.mxu0 0
    %2372 = vmatprep.subr.bf16.mxu0 0
    %2373 = vmatpush1.bf16.msra.mxu0 0
    %2374 = vmatprep.mubr.bf16.mxu0 0
    %2375 = vmatmul.mubr.bf16.gmra.mrb[0].mxu0 %v2285
    %v2376 = vpop.f32.mrb[0].mxu0
    %v2377 = vadd.f32 %v2292, %v2376
    %v2378 = vpop.f32.mrb[0].mxu0
    %v2379 = vpop.f32.mrb[0].mxu0
    %v2380 = vpop.f32.mrb[0].mxu0
    %2381 = vdwg.mxu0
    %v2383 = vrot.slane %v2377, 1
    %v2384 = vrot.slane %v2377, 2
    %v2387 = vadd.f32 %v2140, %v2383
    %v2388 = vadd.f32 %v2141, %v2384
    %s2389 = scalar_lea.vmem %s18, 1
    %v2390 = vld [vmem:[%s2389] sm:$0x1]
    %s2391 = scalar_lea.vmem %s19, 1
    %v2392 = vld [vmem:[%s2391] sm:$0x1]
    %v2395 = vrot.slane %v2388, 7
    %v2398 = vsel %vm2084, %v2387, 0.0
    %2399 = vadd.xlane.f32.xlu0 %v2398
    %v2400 = vpop.xlane.xlu0 %2399
    %v2401 = vsel %vm1952, %v2395, 0.0
    %2402 = vadd.xlane.f32.xlu0 %v2401
    %v2403 = vpop.xlane.xlu0 %2402
    %v2404 = vmul.f32 %v2400, %v1043
    %v2405 = vmul.f32 %v2403, %v1043
    %v2408 = vrot.slane %v2405, 1
    %v2411 = vsub.f32 %v2387, %v2404
    %v2412 = vsub.f32 %v2388, %v2408
    %v2413 = vmul.f32 %v2411, %v2411
    %v2414 = vmul.f32 %v2412, %v2412
    %v2417 = vrot.slane %v2414, 7
    %v2420 = vsel %vm2084, %v2413, 0.0
    %2421 = vadd.xlane.f32.xlu0 %v2420
    %v2422 = vpop.xlane.xlu0 %2421
    %v2423 = vsel %vm1952, %v2417, 0.0
    %2424 = vadd.xlane.f32.xlu0 %v2423
    %v2425 = vpop.xlane.xlu0 %2424
    %v2426 = vmul.f32 %v2422, %v1043
    %v2427 = vmul.f32 %v2425, %v1043
    %v2428 = vadd.f32 %v2426, 1e-05
    %v2429 = vadd.f32 %v2427, 1e-05
    %v2430 = vrsqrt.pop %v2428
    %v2431 = vrsqrt.pop %v2429
    %v2434 = vrot.slane %v2431, 1
    %v2437 = vmul.f32 %v2411, %v2430
    %v2438 = vmul.f32 %v2412, %v2434
    %v2440 = vlaneseq
    %v2441 = vshrl.u32 %v2440, 7
    %v2442 = vsub.s32 0, %v2441
    %v2443 = vrot.slane %v2390, %v2442
    %v2445 = vmul.f32 %v2437, %v2443
    %v2446 = vmul.f32 %v2438, %v2443
    %v2448 = vlaneseq
    %v2449 = vshrl.u32 %v2448, 7
    %v2450 = vsub.s32 0, %v2449
    %v2451 = vrot.slane %v2392, %v2450
    %v2453 = vadd.f32 %v2445, %v2451
    %v2454 = vadd.f32 %v2446, %v2451
    %v2455 = vld [vmem:[%s20] sm:$0x1]
    %v2457 = vlaneseq
    %v2458 = vshrl.u32 %v2457, 7
    %v2459 = vsub.s32 0, %v2458
    %v2460 = vrot.slane %v2455, %v2459
    %v2462 = vmul.f32 %v2453, %v2460
    %v2463 = vmul.f32 %v2454, %v2460
    %v2466 = vrot.slane %v2463, 7
    %v2469 = vsel %vm2084, %v2462, 0.0
    %2470 = vadd.xlane.f32.xlu0 %v2469
    %v2471 = vpop.xlane.xlu0 %2470
    %v2472 = vsel %vm1952, %v2466, 0.0
    %2473 = vadd.xlane.f32.xlu0 %v2472
    %v2474 = vpop.xlane.xlu0 %2473
    %v2475 = vld [vmem:[#allocation2] sm:$0x1]
    %v2477 = vlaneseq
    %v2478 = vshrl.u32 %v2477, 7
    %v2479 = vsub.s32 0, %v2478
    %v2480 = vrot.slane %v2475, %v2479
    %v2482 = vadd.f32 %v2471, %v2480
    %v2483 = vadd.f32 %v2474, %v2480
    %vm2484 = vcmask 7175
    %2485 = vst.msk [vmem:[%s22 - $0x7] sm:$0x80] %vm2484, %v2482
    %vm2486 = vcmask 0
    %2487 = vst.msk [vmem:[%s22 + $0x1] sm:$0x1] %vm2486, %v2483
    // Predicated region
    $region118: #{tpu_custom_call.1} parent=1 // pred_check
      _
    $region119: #{tpu_custom_call.1} parent=1 // pred_check_branch
      %2489 = sbr.rel (0) target = $region121
    $region120: #{tpu_custom_call.1} parent=1 // pred_region
      _
    $region121: #{tpu_custom_call.1} parent=1 // pred_fallthru
      _
    // Predicated region
    $region122: #{tpu_custom_call.1} parent=1 // pred_check
      _
    $region123: #{tpu_custom_call.1} parent=1 // pred_check_branch
      %2491 = sbr.rel (0) target = $region125
    $region124: #{tpu_custom_call.1} parent=1 // pred_region
      _
    $region125: #{tpu_custom_call.1} parent=1 // pred_fallthru
      _
    %2492 = vsyncpa [#allocation4], 1
    %2493 = vsyncpa [#allocation6], 1
    %2494 = vsyncpa [#allocation9], 1
    %2495 = vsyncpa [#allocation12], 1

</llo_original>
